<compile_context>
chip_gen: v7x
topology: tpu7x:2x2x1
jax: 0.10.0
libtpu: 0.0.40
codegen_flags: <defaults>
</compile_context>

<pallas_src>
import functools
import math

import jax
import jax.numpy as jnp
import numpy as np
from jax.experimental import pallas as pl
from jax.experimental.pallas import tpu as pltpu


# ----------------------------- kernel helpers -----------------------------

def _layer_norm(x, gamma, beta, eps=1e-5):
    # PyTorch nn.LayerNorm: biased variance over last dim, eps=1e-5. f32 math.
    mu = jnp.mean(x, axis=-1, keepdims=True)
    var = jnp.mean((x - mu) ** 2, axis=-1, keepdims=True)
    return (x - mu) * jax.lax.rsqrt(var + eps) * gamma + beta


def _split_heads(x2d, bt, s, n_heads, d_k):
    # (bt*s, H*d_k) -> (bt*H, s, d_k): head-major groups for batched attention.
    x4 = x2d.reshape(bt, s, n_heads, d_k)
    x4 = jnp.transpose(x4, (0, 2, 1, 3))
    return x4.reshape(bt * n_heads, s, d_k)


def _merge_heads(x3, bt, s, n_heads, d_k):
    # (bt*H, s, d_k) -> (bt*s, H*d_k)
    x4 = x3.reshape(bt, n_heads, s, d_k)
    x4 = jnp.transpose(x4, (0, 2, 1, 3))
    return x4.reshape(bt * s, n_heads * d_k)


def _mha(xq2d, xkv2d, wq, bq, wk, bk, wv, bv, wo, bo, bias,
         bt, s_q, s_kv, n_heads, d_k, mm_dtype):
    # Projections: batch rows folded into M, full-width (M, D) x (D, D) matmuls.
    xq_c = xq2d.astype(mm_dtype)
    xkv_c = xkv2d.astype(mm_dtype)
    q = jnp.dot(xq_c, wq, preferred_element_type=jnp.float32) + bq
    k = jnp.dot(xkv_c, wk, preferred_element_type=jnp.float32) + bk
    v = jnp.dot(xkv_c, wv, preferred_element_type=jnp.float32) + bv
    q = q * (1.0 / math.sqrt(d_k))          # fold scale into Q once

    qh = _split_heads(q, bt, s_q, n_heads, d_k).astype(mm_dtype)
    kh = _split_heads(k, bt, s_kv, n_heads, d_k).astype(mm_dtype)
    vh = _split_heads(v, bt, s_kv, n_heads, d_k).astype(mm_dtype)

    # Batched over groups g = (batch row, head); f32 accumulation on the MXU.
    s = jnp.einsum("gqd,gkd->gqk", qh, kh, preferred_element_type=jnp.float32)
    s = s + bias[None, :, :]                 # precomputed additive mask bias
    s = s - jnp.max(s, axis=-1, keepdims=True)
    p = jnp.exp(s)
    p = p * pl.reciprocal(jnp.sum(p, axis=-1, keepdims=True), approx=True)
    o = jnp.einsum("gqk,gkd->gqd", p.astype(mm_dtype), vh,
                   preferred_element_type=jnp.float32)
    o2d = _merge_heads(o, bt, s_q, n_heads, d_k).astype(mm_dtype)
    return jnp.dot(o2d, wo, preferred_element_type=jnp.float32) + bo


def _ffn(x2d, w1, b1, w2, b2, mm_dtype):
    h = jnp.dot(x2d.astype(mm_dtype), w1, preferred_element_type=jnp.float32) + b1
    h = jnp.maximum(h, 0.0)
    return jnp.dot(h.astype(mm_dtype), w2, preferred_element_type=jnp.float32) + b2


# ------------------------------ pallas kernel ------------------------------

def _decoder_layer_kernel(
    x_ref, mem_ref, tbias_ref, sbias_ref,
    sa_wq, sa_bq, sa_wk, sa_bk, sa_wv, sa_bv, sa_wo, sa_bo,
    ca_wq, ca_bq, ca_wk, ca_bk, ca_wv, ca_bv, ca_wo, ca_bo,
    f_w1, f_b1, f_w2, f_b2,
    n1_g, n1_b, n2_g, n2_b, n3_g, n3_b,
    out_ref, *, n_heads, d_k, bt, s_tgt, s_src, mm_dtype,
):
    d = n_heads * d_k
    x = x_ref[...].reshape(bt * s_tgt, d)     # fold batch rows into matmul M
    mem = mem_ref[...].reshape(bt * s_src, d)
    tbias = tbias_ref[...]
    sbias = sbias_ref[...]

    # --- self attention + residual + norm1 ---
    sa = _mha(x, x, sa_wq[...], sa_bq[...], sa_wk[...], sa_bk[...],
              sa_wv[...], sa_bv[...], sa_wo[...], sa_bo[...],
              tbias, bt, s_tgt, s_tgt, n_heads, d_k, mm_dtype)
    x2 = _layer_norm(x + sa, n1_g[...], n1_b[...])

    # --- cross attention + residual + norm2 ---
    ca = _mha(x2, mem, ca_wq[...], ca_bq[...], ca_wk[...], ca_bk[...],
              ca_wv[...], ca_bv[...], ca_wo[...], ca_bo[...],
              sbias, bt, s_tgt, s_src, n_heads, d_k, mm_dtype)
    x3 = _layer_norm(x2 + ca, n2_g[...], n2_b[...])

    # --- feed forward + residual + norm3 ---
    ff = _ffn(x3, f_w1[...], f_b1[...], f_w2[...], f_b2[...], mm_dtype)
    y = _layer_norm(x3 + ff, n3_g[...], n3_b[...])
    out_ref[...] = y.reshape(bt, s_tgt, d)


_PARAM_ORDER = [
    "sa_q_w", "sa_q_b", "sa_k_w", "sa_k_b", "sa_v_w", "sa_v_b", "sa_o_w", "sa_o_b",
    "ca_q_w", "ca_q_b", "ca_k_w", "ca_k_b", "ca_v_w", "ca_v_b", "ca_o_w", "ca_o_b",
    "ff_w1", "ff_b1", "ff_w2", "ff_b2",
    "n1_g", "n1_b", "n2_g", "n2_b", "n3_g", "n3_b",
]


def _choose_batch_tile(B, S, target_rows=256):
    # Largest divisor of B whose folded row count bt*S stays near the MXU sweet
    # spot; only split 2-way (v7x megacore) if each tile still has >=128 rows.
    best = 1
    for bt in range(1, B + 1):
        if B % bt == 0 and bt * S <= target_rows:
            best = bt
    if best == B and B % 2 == 0 and (B // 2) * S >= 128:
        best = B // 2
    return best


def decoder_layer(x, memory, params, n_heads, tgt_mask=None, src_mask=None,
                  matmul_dtype=jnp.bfloat16):
    B, S, D = x.shape
    _, S_src, _ = memory.shape
    d_k = D // n_heads

    # Hoist mask handling out of the kernel: additive bias computed once.
    if tgt_mask is None:
        tbias = jnp.zeros((S, S), jnp.float32)
    else:
        tbias = jnp.where(tgt_mask == 0.0, -1e9, 0.0).astype(jnp.float32)
    if src_mask is None:
        sbias = jnp.zeros((S, S_src), jnp.float32)
    else:
        sbias = jnp.where(src_mask == 0.0, -1e9, 0.0).astype(jnp.float32)

    # Matmul weights go in as bf16 (half the weight DMA bytes, 1 MXU pass on
    # v6e/v7x); biases and LayerNorm params stay f32.
    def cast_param(name, w):
        if name.endswith("_w") or name in ("ff_w1", "ff_w2"):
            return w.astype(matmul_dtype)
        return w.astype(jnp.float32)

    weights = [cast_param(k, params[k]) for k in _PARAM_ORDER]

    bt = _choose_batch_tile(B, S)
    grid = (B // bt,)

    def resident(a):
        nd = a.ndim
        return pl.BlockSpec(a.shape, lambda b, _nd=nd: (0,) * _nd)

    # NOTE: at realistic D/d_ff, the resident FFN weights should additionally be
    # K-tiled over an "arbitrary" grid axis (and single-buffered) to stay inside
    # v7x's 64 MiB VMEM; unnecessary at these toy sizes.
    in_specs = [
        pl.BlockSpec((bt, S, D), lambda b: (b, 0, 0)),        # x batch tile
        pl.BlockSpec((bt, S_src, D), lambda b: (b, 0, 0)),    # memory batch tile
        resident(tbias),
        resident(sbias),
    ] + [resident(w) for w in weights]

    kernel = functools.partial(
        _decoder_layer_kernel, n_heads=n_heads, d_k=d_k, bt=bt,
        s_tgt=S, s_src=S_src, mm_dtype=matmul_dtype)

    return pl.pallas_call(
        kernel,
        out_shape=jax.ShapeDtypeStruct((B, S, D), jnp.float32),
        grid=grid,
        in_specs=in_specs,
        out_specs=pl.BlockSpec((bt, S, D), lambda b: (b, 0, 0)),
        compiler_params=pltpu.CompilerParams(dimension_semantics=("parallel",)),
    )(x, memory, tbias, sbias, *weights)


# ------------------------- parameter initialization ------------------------

def init_params(key, d_model, n_heads, d_ff):
    keys = jax.random.split(key, 10)

    def lin(k, din, dout):
        k1, k2 = jax.random.split(k)
        bound = 1.0 / math.sqrt(din)                    # PyTorch Linear default init
        w = jax.random.uniform(k1, (din, dout), jnp.float32, -bound, bound)
        b = jax.random.uniform(k2, (1, dout), jnp.float32, -bound, bound)
        return w, b

    p = {}
    names = ["sa_q", "sa_k", "sa_v", "sa_o", "ca_q", "ca_k", "ca_v", "ca_o"]
    for i, name in enumerate(names):
        p[name + "_w"], p[name + "_b"] = lin(keys[i], d_model, d_model)
    p["ff_w1"], p["ff_b1"] = lin(keys[8], d_model, d_ff)
    p["ff_w2"], p["ff_b2"] = lin(keys[9], d_ff, d_model)
    for j in (1, 2, 3):
        p[f"n{j}_g"] = jnp.ones((1, d_model), jnp.float32)
        p[f"n{j}_b"] = jnp.zeros((1, d_model), jnp.float32)
    return p


# ------------------------------ pure-JAX reference -------------------------
# Full-f32 reference with PyTorch masked_fill semantics (dropout = identity).

def ref_decoder_layer(x, memory, params, n_heads, tgt_mask, src_mask):
    D = x.shape[-1]
    d_k = D // n_heads

    def mha(xq, xkv, prefix, mask):
        wq, bq = params[f"{prefix}_q_w"], params[f"{prefix}_q_b"]
        wk, bk = params[f"{prefix}_k_w"], params[f"{prefix}_k_b"]
        wv, bv = params[f"{prefix}_v_w"], params[f"{prefix}_v_b"]
        wo, bo = params[f"{prefix}_o_w"], params[f"{prefix}_o_b"]
        B, Sq, _ = xq.shape
        Skv = xkv.shape[1]
        q = xq @ wq + bq
        k = xkv @ wk + bk
        v = xkv @ wv + bv
        qh = q.reshape(B, Sq, n_heads, d_k).transpose(0, 2, 1, 3)
        kh = k.reshape(B, Skv, n_heads, d_k).transpose(0, 2, 1, 3)
        vh = v.reshape(B, Skv, n_heads, d_k).transpose(0, 2, 1, 3)
        s = jnp.einsum("bhqd,bhkd->bhqk", qh, kh) / math.sqrt(d_k)
        if mask is not None:
            s = jnp.where(mask[None, None] == 0.0, -1e9, s)
        p = jax.nn.softmax(s, axis=-1)
        o = jnp.einsum("bhqk,bhkd->bhqd", p, vh)
        o = o.transpose(0, 2, 1, 3).reshape(B, Sq, D)
        return o @ wo + bo

    sa = mha(x, x, "sa", tgt_mask)
    x2 = _layer_norm(x + sa, params["n1_g"], params["n1_b"])
    ca = mha(x2, memory, "ca", src_mask)
    x3 = _layer_norm(x2 + ca, params["n2_g"], params["n2_b"])
    h = jnp.maximum(x3 @ params["ff_w1"] + params["ff_b1"], 0.0)
    ff = h @ params["ff_w2"] + params["ff_b2"]
    return _layer_norm(x3 + ff, params["n3_g"], params["n3_b"])


# ----------------------------------- main -----------------------------------

if __name__ == "__main__":
    B, S, S_SRC = 2, 8, 8
    D_MODEL, N_HEADS, D_FF = 32, 4, 64

    key = jax.random.PRNGKey(0)
    kx, km, kp = jax.random.split(key, 3)
    x = jax.random.normal(kx, (B, S, D_MODEL), jnp.float32)
    memory = jax.random.normal(km, (B, S_SRC, D_MODEL), jnp.float32)
    params = init_params(kp, D_MODEL, N_HEADS, D_FF)

    # causal target mask (standard decoder), full source mask
    tgt_mask = jnp.tril(jnp.ones((S, S), jnp.float32))
    src_mask = jnp.ones((S, S_SRC), jnp.float32)

    out = decoder_layer(x, memory, params, N_HEADS, tgt_mask, src_mask)
    out = jax.block_until_ready(out)

    ref = jax.block_until_ready(
        ref_decoder_layer(x, memory, params, N_HEADS, tgt_mask, src_mask))

    # bf16 matmul operands (f32 accumulate) vs. pure-f32 reference: tolerance
    # loosened accordingly; still catches any structural/semantic error.
    np.testing.assert_allclose(np.asarray(out), np.asarray(ref), rtol=3e-2, atol=3e-2)
    print("KERNEL_OK")
</pallas_src>

<mosaic_0001>
module attributes {stable_mosaic.version = 11 : i64} {
  func.func @_decoder_layer_kernel(%arg0: i32, %arg1: memref<2x8x32xf32, #tpu.memory_space<vmem>>, %arg2: memref<2x8x32xf32, #tpu.memory_space<vmem>>, %arg3: memref<8x8xf32, #tpu.memory_space<vmem>>, %arg4: memref<8x8xf32, #tpu.memory_space<vmem>>, %arg5: memref<32x32xbf16, #tpu.memory_space<vmem>>, %arg6: memref<1x32xf32, #tpu.memory_space<vmem>>, %arg7: memref<32x32xbf16, #tpu.memory_space<vmem>>, %arg8: memref<1x32xf32, #tpu.memory_space<vmem>>, %arg9: memref<32x32xbf16, #tpu.memory_space<vmem>>, %arg10: memref<1x32xf32, #tpu.memory_space<vmem>>, %arg11: memref<32x32xbf16, #tpu.memory_space<vmem>>, %arg12: memref<1x32xf32, #tpu.memory_space<vmem>>, %arg13: memref<32x32xbf16, #tpu.memory_space<vmem>>, %arg14: memref<1x32xf32, #tpu.memory_space<vmem>>, %arg15: memref<32x32xbf16, #tpu.memory_space<vmem>>, %arg16: memref<1x32xf32, #tpu.memory_space<vmem>>, %arg17: memref<32x32xbf16, #tpu.memory_space<vmem>>, %arg18: memref<1x32xf32, #tpu.memory_space<vmem>>, %arg19: memref<32x32xbf16, #tpu.memory_space<vmem>>, %arg20: memref<1x32xf32, #tpu.memory_space<vmem>>, %arg21: memref<32x64xbf16, #tpu.memory_space<vmem>>, %arg22: memref<1x64xf32, #tpu.memory_space<vmem>>, %arg23: memref<64x32xbf16, #tpu.memory_space<vmem>>, %arg24: memref<1x32xf32, #tpu.memory_space<vmem>>, %arg25: memref<1x32xf32, #tpu.memory_space<vmem>>, %arg26: memref<1x32xf32, #tpu.memory_space<vmem>>, %arg27: memref<1x32xf32, #tpu.memory_space<vmem>>, %arg28: memref<1x32xf32, #tpu.memory_space<vmem>>, %arg29: memref<1x32xf32, #tpu.memory_space<vmem>>, %arg30: memref<1x32xf32, #tpu.memory_space<vmem>>, %arg31: memref<2x8x32xf32, #tpu.memory_space<vmem>>) attributes {dimension_semantics = [#tpu.dimension_semantics<parallel>], iteration_bounds = array<i64: 1>, scalar_prefetch = 0 : i64, scratch_operands = 0 : i64, tpu.core_type = #tpu.core_type<tc>, window_params = [{transform_indices = @transform_0, window_bounds = array<i64: 2, 8, 32>}, {transform_indices = @transform_1, window_bounds = array<i64: 2, 8, 32>}, {pipeline_mode = #tpu.pipeline_mode<synchronous>, transform_indices = @transform_2, window_bounds = array<i64: 8, 8>}, {pipeline_mode = #tpu.pipeline_mode<synchronous>, transform_indices = @transform_3, window_bounds = array<i64: 8, 8>}, {pipeline_mode = #tpu.pipeline_mode<synchronous>, transform_indices = @transform_4, window_bounds = array<i64: 32, 32>}, {pipeline_mode = #tpu.pipeline_mode<synchronous>, transform_indices = @transform_5, window_bounds = array<i64: 1, 32>}, {pipeline_mode = #tpu.pipeline_mode<synchronous>, transform_indices = @transform_6, window_bounds = array<i64: 32, 32>}, {pipeline_mode = #tpu.pipeline_mode<synchronous>, transform_indices = @transform_7, window_bounds = array<i64: 1, 32>}, {pipeline_mode = #tpu.pipeline_mode<synchronous>, transform_indices = @transform_8, window_bounds = array<i64: 32, 32>}, {pipeline_mode = #tpu.pipeline_mode<synchronous>, transform_indices = @transform_9, window_bounds = array<i64: 1, 32>}, {pipeline_mode = #tpu.pipeline_mode<synchronous>, transform_indices = @transform_10, window_bounds = array<i64: 32, 32>}, {pipeline_mode = #tpu.pipeline_mode<synchronous>, transform_indices = @transform_11, window_bounds = array<i64: 1, 32>}, {pipeline_mode = #tpu.pipeline_mode<synchronous>, transform_indices = @transform_12, window_bounds = array<i64: 32, 32>}, {pipeline_mode = #tpu.pipeline_mode<synchronous>, transform_indices = @transform_13, window_bounds = array<i64: 1, 32>}, {pipeline_mode = #tpu.pipeline_mode<synchronous>, transform_indices = @transform_14, window_bounds = array<i64: 32, 32>}, {pipeline_mode = #tpu.pipeline_mode<synchronous>, transform_indices = @transform_15, window_bounds = array<i64: 1, 32>}, {pipeline_mode = #tpu.pipeline_mode<synchronous>, transform_indices = @transform_16, window_bounds = array<i64: 32, 32>}, {pipeline_mode = #tpu.pipeline_mode<synchronous>, transform_indices = @transform_17, window_bounds = array<i64: 1, 32>}, {pipeline_mode = #tpu.pipeline_mode<synchronous>, transform_indices = @transform_18, window_bounds = array<i64: 32, 32>}, {pipeline_mode = #tpu.pipeline_mode<synchronous>, transform_indices = @transform_19, window_bounds = array<i64: 1, 32>}, {pipeline_mode = #tpu.pipeline_mode<synchronous>, transform_indices = @transform_20, window_bounds = array<i64: 32, 64>}, {pipeline_mode = #tpu.pipeline_mode<synchronous>, transform_indices = @transform_21, window_bounds = array<i64: 1, 64>}, {pipeline_mode = #tpu.pipeline_mode<synchronous>, transform_indices = @transform_22, window_bounds = array<i64: 64, 32>}, {pipeline_mode = #tpu.pipeline_mode<synchronous>, transform_indices = @transform_23, window_bounds = array<i64: 1, 32>}, {pipeline_mode = #tpu.pipeline_mode<synchronous>, transform_indices = @transform_24, window_bounds = array<i64: 1, 32>}, {pipeline_mode = #tpu.pipeline_mode<synchronous>, transform_indices = @transform_25, window_bounds = array<i64: 1, 32>}, {pipeline_mode = #tpu.pipeline_mode<synchronous>, transform_indices = @transform_26, window_bounds = array<i64: 1, 32>}, {pipeline_mode = #tpu.pipeline_mode<synchronous>, transform_indices = @transform_27, window_bounds = array<i64: 1, 32>}, {pipeline_mode = #tpu.pipeline_mode<synchronous>, transform_indices = @transform_28, window_bounds = array<i64: 1, 32>}, {pipeline_mode = #tpu.pipeline_mode<synchronous>, transform_indices = @transform_29, window_bounds = array<i64: 1, 32>}, {transform_indices = @transform_30, window_bounds = array<i64: 2, 8, 32>}]} {
    %c0 = arith.constant 0 : index
    %c0_0 = arith.constant 0 : index
    %c0_1 = arith.constant 0 : index
    %0 = vector.load %arg1[%c0, %c0_0, %c0_1] : memref<2x8x32xf32, #tpu.memory_space<vmem>>, vector<2x8x32xf32>
    %1 = vector.shape_cast %0 : vector<2x8x32xf32> to vector<16x32xf32>
    %c0_2 = arith.constant 0 : index
    %c0_3 = arith.constant 0 : index
    %c0_4 = arith.constant 0 : index
    %2 = vector.load %arg2[%c0_2, %c0_3, %c0_4] : memref<2x8x32xf32, #tpu.memory_space<vmem>>, vector<2x8x32xf32>
    %3 = vector.shape_cast %2 : vector<2x8x32xf32> to vector<16x32xf32>
    %c0_5 = arith.constant 0 : index
    %c0_6 = arith.constant 0 : index
    %4 = vector.load %arg3[%c0_5, %c0_6] : memref<8x8xf32, #tpu.memory_space<vmem>>, vector<8x8xf32>
    %c0_7 = arith.constant 0 : index
    %c0_8 = arith.constant 0 : index
    %5 = vector.load %arg4[%c0_7, %c0_8] : memref<8x8xf32, #tpu.memory_space<vmem>>, vector<8x8xf32>
    %c0_9 = arith.constant 0 : index
    %c0_10 = arith.constant 0 : index
    %6 = vector.load %arg5[%c0_9, %c0_10] : memref<32x32xbf16, #tpu.memory_space<vmem>>, vector<32x32xbf16>
    %c0_11 = arith.constant 0 : index
    %c0_12 = arith.constant 0 : index
    %7 = vector.load %arg6[%c0_11, %c0_12] : memref<1x32xf32, #tpu.memory_space<vmem>>, vector<1x32xf32>
    %c0_13 = arith.constant 0 : index
    %c0_14 = arith.constant 0 : index
    %8 = vector.load %arg7[%c0_13, %c0_14] : memref<32x32xbf16, #tpu.memory_space<vmem>>, vector<32x32xbf16>
    %c0_15 = arith.constant 0 : index
    %c0_16 = arith.constant 0 : index
    %9 = vector.load %arg8[%c0_15, %c0_16] : memref<1x32xf32, #tpu.memory_space<vmem>>, vector<1x32xf32>
    %c0_17 = arith.constant 0 : index
    %c0_18 = arith.constant 0 : index
    %10 = vector.load %arg9[%c0_17, %c0_18] : memref<32x32xbf16, #tpu.memory_space<vmem>>, vector<32x32xbf16>
    %c0_19 = arith.constant 0 : index
    %c0_20 = arith.constant 0 : index
    %11 = vector.load %arg10[%c0_19, %c0_20] : memref<1x32xf32, #tpu.memory_space<vmem>>, vector<1x32xf32>
    %c0_21 = arith.constant 0 : index
    %c0_22 = arith.constant 0 : index
    %12 = vector.load %arg11[%c0_21, %c0_22] : memref<32x32xbf16, #tpu.memory_space<vmem>>, vector<32x32xbf16>
    %c0_23 = arith.constant 0 : index
    %c0_24 = arith.constant 0 : index
    %13 = vector.load %arg12[%c0_23, %c0_24] : memref<1x32xf32, #tpu.memory_space<vmem>>, vector<1x32xf32>
    %14 = arith.truncf %1 : vector<16x32xf32> to vector<16x32xbf16>
    %15 = arith.truncf %1 : vector<16x32xf32> to vector<16x32xbf16>
    %cst = arith.constant dense<0.000000e+00> : vector<16x32xf32>
    %16 = tpu.matmul %14, %6, %cst {dimension_numbers = #tpu.dot_dimension_numbers<[1], [0], [0], [1], [0, 0, 1, 1], [], []>} : vector<16x32xbf16>, vector<32x32xbf16>, vector<16x32xf32> -> vector<16x32xf32>
    %17 = vector.broadcast %7 : vector<1x32xf32> to vector<16x32xf32>
    %18 = arith.addf %16, %17 : vector<16x32xf32>
    %cst_25 = arith.constant dense<0.000000e+00> : vector<16x32xf32>
    %19 = tpu.matmul %15, %8, %cst_25 {dimension_numbers = #tpu.dot_dimension_numbers<[1], [0], [0], [1], [0, 0, 1, 1], [], []>} : vector<16x32xbf16>, vector<32x32xbf16>, vector<16x32xf32> -> vector<16x32xf32>
    %20 = vector.broadcast %9 : vector<1x32xf32> to vector<16x32xf32>
    %21 = arith.addf %19, %20 : vector<16x32xf32>
    %cst_26 = arith.constant dense<0.000000e+00> : vector<16x32xf32>
    %22 = tpu.matmul %15, %10, %cst_26 {dimension_numbers = #tpu.dot_dimension_numbers<[1], [0], [0], [1], [0, 0, 1, 1], [], []>} : vector<16x32xbf16>, vector<32x32xbf16>, vector<16x32xf32> -> vector<16x32xf32>
    %23 = vector.broadcast %11 : vector<1x32xf32> to vector<16x32xf32>
    %24 = arith.addf %22, %23 : vector<16x32xf32>
    %cst_27 = arith.constant 0.353553385 : f32
    %25 = vector.broadcast %cst_27 : f32 to vector<16x32xf32>
    %26 = arith.mulf %18, %25 : vector<16x32xf32>
    %27 = vector.shape_cast %26 : vector<16x32xf32> to vector<2x8x4x8xf32>
    %28 = tpu.transpose %27, [0, 2, 1, 3] : vector<2x8x4x8xf32> -> vector<2x4x8x8xf32>
    %29 = vector.shape_cast %28 : vector<2x4x8x8xf32> to vector<8x8x8xf32>
    %30 = arith.truncf %29 : vector<8x8x8xf32> to vector<8x8x8xbf16>
    %31 = vector.shape_cast %21 : vector<16x32xf32> to vector<2x8x4x8xf32>
    %32 = tpu.transpose %31, [0, 2, 1, 3] : vector<2x8x4x8xf32> -> vector<2x4x8x8xf32>
    %33 = vector.shape_cast %32 : vector<2x4x8x8xf32> to vector<8x8x8xf32>
    %34 = arith.truncf %33 : vector<8x8x8xf32> to vector<8x8x8xbf16>
    %35 = vector.shape_cast %24 : vector<16x32xf32> to vector<2x8x4x8xf32>
    %36 = tpu.transpose %35, [0, 2, 1, 3] : vector<2x8x4x8xf32> -> vector<2x4x8x8xf32>
    %37 = vector.shape_cast %36 : vector<2x4x8x8xf32> to vector<8x8x8xf32>
    %38 = arith.truncf %37 : vector<8x8x8xf32> to vector<8x8x8xbf16>
    "tpu.trace_start"() <{level = 10 : i32, message = "gqd,gkd->gqk"}> : () -> ()
    %cst_28 = arith.constant dense<0.000000e+00> : vector<8x8x8xf32>
    %39 = tpu.matmul %30, %34, %cst_28 {dimension_numbers = #tpu.dot_dimension_numbers<[2], [2], [1], [1], [0, 0, 0, 1, 1, 1], [0], [0]>} : vector<8x8x8xbf16>, vector<8x8x8xbf16>, vector<8x8x8xf32> -> vector<8x8x8xf32>
    "tpu.trace_stop"() : () -> ()
    %40 = vector.shape_cast %4 : vector<8x8xf32> to vector<1x8x8xf32>
    %41 = vector.broadcast %40 : vector<1x8x8xf32> to vector<8x8x8xf32>
    %42 = arith.addf %39, %41 : vector<8x8x8xf32>
    %cst_29 = arith.constant dense<0xFF800000> : vector<8x8xf32>
    %43 = vector.multi_reduction <maximumf>, %42, %cst_29 [2] : vector<8x8x8xf32> to vector<8x8xf32>
    %44 = vector.shape_cast %43 : vector<8x8xf32> to vector<8x8x1xf32>
    %45 = vector.broadcast %44 : vector<8x8x1xf32> to vector<8x8x8xf32>
    %46 = arith.subf %42, %45 : vector<8x8x8xf32>
    %47 = math.exp %46 : vector<8x8x8xf32>
    %cst_30 = arith.constant dense<0.000000e+00> : vector<8x8xf32>
    %48 = vector.multi_reduction <add>, %47, %cst_30 [2] : vector<8x8x8xf32> to vector<8x8xf32>
    %49 = vector.shape_cast %48 : vector<8x8xf32> to vector<8x8x1xf32>
    %50 = tpu.reciprocal %49 {approx = true} : vector<8x8x1xf32> -> vector<8x8x1xf32>
    %51 = vector.broadcast %50 : vector<8x8x1xf32> to vector<8x8x8xf32>
    %52 = arith.mulf %47, %51 : vector<8x8x8xf32>
    %53 = arith.truncf %52 : vector<8x8x8xf32> to vector<8x8x8xbf16>
    "tpu.trace_start"() <{level = 10 : i32, message = "gqk,gkd->gqd"}> : () -> ()
    %cst_31 = arith.constant dense<0.000000e+00> : vector<8x8x8xf32>
    %54 = tpu.matmul %53, %38, %cst_31 {dimension_numbers = #tpu.dot_dimension_numbers<[2], [1], [1], [2], [0, 0, 0, 1, 1, 2], [0], [0]>} : vector<8x8x8xbf16>, vector<8x8x8xbf16>, vector<8x8x8xf32> -> vector<8x8x8xf32>
    "tpu.trace_stop"() : () -> ()
    %55 = vector.shape_cast %54 : vector<8x8x8xf32> to vector<2x4x8x8xf32>
    %56 = tpu.transpose %55, [0, 2, 1, 3] : vector<2x4x8x8xf32> -> vector<2x8x4x8xf32>
    %57 = vector.shape_cast %56 : vector<2x8x4x8xf32> to vector<16x32xf32>
    %58 = arith.truncf %57 : vector<16x32xf32> to vector<16x32xbf16>
    %cst_32 = arith.constant dense<0.000000e+00> : vector<16x32xf32>
    %59 = tpu.matmul %58, %12, %cst_32 {dimension_numbers = #tpu.dot_dimension_numbers<[1], [0], [0], [1], [0, 0, 1, 1], [], []>} : vector<16x32xbf16>, vector<32x32xbf16>, vector<16x32xf32> -> vector<16x32xf32>
    %60 = vector.broadcast %13 : vector<1x32xf32> to vector<16x32xf32>
    %61 = arith.addf %59, %60 : vector<16x32xf32>
    %62 = arith.addf %1, %61 : vector<16x32xf32>
    %c0_33 = arith.constant 0 : index
    %c0_34 = arith.constant 0 : index
    %63 = vector.load %arg25[%c0_33, %c0_34] : memref<1x32xf32, #tpu.memory_space<vmem>>, vector<1x32xf32>
    %c0_35 = arith.constant 0 : index
    %c0_36 = arith.constant 0 : index
    %64 = vector.load %arg26[%c0_35, %c0_36] : memref<1x32xf32, #tpu.memory_space<vmem>>, vector<1x32xf32>
    %cst_37 = arith.constant dense<0.000000e+00> : vector<16xf32>
    %65 = vector.multi_reduction <add>, %62, %cst_37 [1] : vector<16x32xf32> to vector<16xf32>
    %66 = vector.shape_cast %65 : vector<16xf32> to vector<16x1xf32>
    %cst_38 = arith.constant 3.200000e+01 : f32
    %67 = vector.broadcast %cst_38 : f32 to vector<16x1xf32>
    %68 = arith.divf %66, %67 : vector<16x1xf32>
    %69 = vector.broadcast %68 : vector<16x1xf32> to vector<16x32xf32>
    %70 = arith.subf %62, %69 : vector<16x32xf32>
    %71 = arith.mulf %70, %70 : vector<16x32xf32>
    %cst_39 = arith.constant dense<0.000000e+00> : vector<16xf32>
    %72 = vector.multi_reduction <add>, %71, %cst_39 [1] : vector<16x32xf32> to vector<16xf32>
    %73 = vector.shape_cast %72 : vector<16xf32> to vector<16x1xf32>
    %cst_40 = arith.constant 3.200000e+01 : f32
    %74 = vector.broadcast %cst_40 : f32 to vector<16x1xf32>
    %75 = arith.divf %73, %74 : vector<16x1xf32>
    %76 = vector.broadcast %68 : vector<16x1xf32> to vector<16x32xf32>
    %77 = arith.subf %62, %76 : vector<16x32xf32>
    %cst_41 = arith.constant 9.99999974E-6 : f32
    %78 = vector.broadcast %cst_41 : f32 to vector<16x1xf32>
    %79 = arith.addf %75, %78 : vector<16x1xf32>
    %80 = math.rsqrt %79 : vector<16x1xf32>
    %81 = vector.broadcast %80 : vector<16x1xf32> to vector<16x32xf32>
    %82 = arith.mulf %77, %81 : vector<16x32xf32>
    %83 = vector.broadcast %63 : vector<1x32xf32> to vector<16x32xf32>
    %84 = arith.mulf %82, %83 : vector<16x32xf32>
    %85 = vector.broadcast %64 : vector<1x32xf32> to vector<16x32xf32>
    %86 = arith.addf %84, %85 : vector<16x32xf32>
    %c0_42 = arith.constant 0 : index
    %c0_43 = arith.constant 0 : index
    %87 = vector.load %arg13[%c0_42, %c0_43] : memref<32x32xbf16, #tpu.memory_space<vmem>>, vector<32x32xbf16>
    %c0_44 = arith.constant 0 : index
    %c0_45 = arith.constant 0 : index
    %88 = vector.load %arg14[%c0_44, %c0_45] : memref<1x32xf32, #tpu.memory_space<vmem>>, vector<1x32xf32>
    %c0_46 = arith.constant 0 : index
    %c0_47 = arith.constant 0 : index
    %89 = vector.load %arg15[%c0_46, %c0_47] : memref<32x32xbf16, #tpu.memory_space<vmem>>, vector<32x32xbf16>
    %c0_48 = arith.constant 0 : index
    %c0_49 = arith.constant 0 : index
    %90 = vector.load %arg16[%c0_48, %c0_49] : memref<1x32xf32, #tpu.memory_space<vmem>>, vector<1x32xf32>
    %c0_50 = arith.constant 0 : index
    %c0_51 = arith.constant 0 : index
    %91 = vector.load %arg17[%c0_50, %c0_51] : memref<32x32xbf16, #tpu.memory_space<vmem>>, vector<32x32xbf16>
    %c0_52 = arith.constant 0 : index
    %c0_53 = arith.constant 0 : index
    %92 = vector.load %arg18[%c0_52, %c0_53] : memref<1x32xf32, #tpu.memory_space<vmem>>, vector<1x32xf32>
    %c0_54 = arith.constant 0 : index
    %c0_55 = arith.constant 0 : index
    %93 = vector.load %arg19[%c0_54, %c0_55] : memref<32x32xbf16, #tpu.memory_space<vmem>>, vector<32x32xbf16>
    %c0_56 = arith.constant 0 : index
    %c0_57 = arith.constant 0 : index
    %94 = vector.load %arg20[%c0_56, %c0_57] : memref<1x32xf32, #tpu.memory_space<vmem>>, vector<1x32xf32>
    %95 = arith.truncf %86 : vector<16x32xf32> to vector<16x32xbf16>
    %96 = arith.truncf %3 : vector<16x32xf32> to vector<16x32xbf16>
    %cst_58 = arith.constant dense<0.000000e+00> : vector<16x32xf32>
    %97 = tpu.matmul %95, %87, %cst_58 {dimension_numbers = #tpu.dot_dimension_numbers<[1], [0], [0], [1], [0, 0, 1, 1], [], []>} : vector<16x32xbf16>, vector<32x32xbf16>, vector<16x32xf32> -> vector<16x32xf32>
    %98 = vector.broadcast %88 : vector<1x32xf32> to vector<16x32xf32>
    %99 = arith.addf %97, %98 : vector<16x32xf32>
    %cst_59 = arith.constant dense<0.000000e+00> : vector<16x32xf32>
    %100 = tpu.matmul %96, %89, %cst_59 {dimension_numbers = #tpu.dot_dimension_numbers<[1], [0], [0], [1], [0, 0, 1, 1], [], []>} : vector<16x32xbf16>, vector<32x32xbf16>, vector<16x32xf32> -> vector<16x32xf32>
    %101 = vector.broadcast %90 : vector<1x32xf32> to vector<16x32xf32>
    %102 = arith.addf %100, %101 : vector<16x32xf32>
    %cst_60 = arith.constant dense<0.000000e+00> : vector<16x32xf32>
    %103 = tpu.matmul %96, %91, %cst_60 {dimension_numbers = #tpu.dot_dimension_numbers<[1], [0], [0], [1], [0, 0, 1, 1], [], []>} : vector<16x32xbf16>, vector<32x32xbf16>, vector<16x32xf32> -> vector<16x32xf32>
    %104 = vector.broadcast %92 : vector<1x32xf32> to vector<16x32xf32>
    %105 = arith.addf %103, %104 : vector<16x32xf32>
    %cst_61 = arith.constant 0.353553385 : f32
    %106 = vector.broadcast %cst_61 : f32 to vector<16x32xf32>
    %107 = arith.mulf %99, %106 : vector<16x32xf32>
    %108 = vector.shape_cast %107 : vector<16x32xf32> to vector<2x8x4x8xf32>
    %109 = tpu.transpose %108, [0, 2, 1, 3] : vector<2x8x4x8xf32> -> vector<2x4x8x8xf32>
    %110 = vector.shape_cast %109 : vector<2x4x8x8xf32> to vector<8x8x8xf32>
    %111 = arith.truncf %110 : vector<8x8x8xf32> to vector<8x8x8xbf16>
    %112 = vector.shape_cast %102 : vector<16x32xf32> to vector<2x8x4x8xf32>
    %113 = tpu.transpose %112, [0, 2, 1, 3] : vector<2x8x4x8xf32> -> vector<2x4x8x8xf32>
    %114 = vector.shape_cast %113 : vector<2x4x8x8xf32> to vector<8x8x8xf32>
    %115 = arith.truncf %114 : vector<8x8x8xf32> to vector<8x8x8xbf16>
    %116 = vector.shape_cast %105 : vector<16x32xf32> to vector<2x8x4x8xf32>
    %117 = tpu.transpose %116, [0, 2, 1, 3] : vector<2x8x4x8xf32> -> vector<2x4x8x8xf32>
    %118 = vector.shape_cast %117 : vector<2x4x8x8xf32> to vector<8x8x8xf32>
    %119 = arith.truncf %118 : vector<8x8x8xf32> to vector<8x8x8xbf16>
    "tpu.trace_start"() <{level = 10 : i32, message = "gqd,gkd->gqk"}> : () -> ()
    %cst_62 = arith.constant dense<0.000000e+00> : vector<8x8x8xf32>
    %120 = tpu.matmul %111, %115, %cst_62 {dimension_numbers = #tpu.dot_dimension_numbers<[2], [2], [1], [1], [0, 0, 0, 1, 1, 1], [0], [0]>} : vector<8x8x8xbf16>, vector<8x8x8xbf16>, vector<8x8x8xf32> -> vector<8x8x8xf32>
    "tpu.trace_stop"() : () -> ()
    %121 = vector.shape_cast %5 : vector<8x8xf32> to vector<1x8x8xf32>
    %122 = vector.broadcast %121 : vector<1x8x8xf32> to vector<8x8x8xf32>
    %123 = arith.addf %120, %122 : vector<8x8x8xf32>
    %cst_63 = arith.constant dense<0xFF800000> : vector<8x8xf32>
    %124 = vector.multi_reduction <maximumf>, %123, %cst_63 [2] : vector<8x8x8xf32> to vector<8x8xf32>
    %125 = vector.shape_cast %124 : vector<8x8xf32> to vector<8x8x1xf32>
    %126 = vector.broadcast %125 : vector<8x8x1xf32> to vector<8x8x8xf32>
    %127 = arith.subf %123, %126 : vector<8x8x8xf32>
    %128 = math.exp %127 : vector<8x8x8xf32>
    %cst_64 = arith.constant dense<0.000000e+00> : vector<8x8xf32>
    %129 = vector.multi_reduction <add>, %128, %cst_64 [2] : vector<8x8x8xf32> to vector<8x8xf32>
    %130 = vector.shape_cast %129 : vector<8x8xf32> to vector<8x8x1xf32>
    %131 = tpu.reciprocal %130 {approx = true} : vector<8x8x1xf32> -> vector<8x8x1xf32>
    %132 = vector.broadcast %131 : vector<8x8x1xf32> to vector<8x8x8xf32>
    %133 = arith.mulf %128, %132 : vector<8x8x8xf32>
    %134 = arith.truncf %133 : vector<8x8x8xf32> to vector<8x8x8xbf16>
    "tpu.trace_start"() <{level = 10 : i32, message = "gqk,gkd->gqd"}> : () -> ()
    %cst_65 = arith.constant dense<0.000000e+00> : vector<8x8x8xf32>
    %135 = tpu.matmul %134, %119, %cst_65 {dimension_numbers = #tpu.dot_dimension_numbers<[2], [1], [1], [2], [0, 0, 0, 1, 1, 2], [0], [0]>} : vector<8x8x8xbf16>, vector<8x8x8xbf16>, vector<8x8x8xf32> -> vector<8x8x8xf32>
    "tpu.trace_stop"() : () -> ()
    %136 = vector.shape_cast %135 : vector<8x8x8xf32> to vector<2x4x8x8xf32>
    %137 = tpu.transpose %136, [0, 2, 1, 3] : vector<2x4x8x8xf32> -> vector<2x8x4x8xf32>
    %138 = vector.shape_cast %137 : vector<2x8x4x8xf32> to vector<16x32xf32>
    %139 = arith.truncf %138 : vector<16x32xf32> to vector<16x32xbf16>
    %cst_66 = arith.constant dense<0.000000e+00> : vector<16x32xf32>
    %140 = tpu.matmul %139, %93, %cst_66 {dimension_numbers = #tpu.dot_dimension_numbers<[1], [0], [0], [1], [0, 0, 1, 1], [], []>} : vector<16x32xbf16>, vector<32x32xbf16>, vector<16x32xf32> -> vector<16x32xf32>
    %141 = vector.broadcast %94 : vector<1x32xf32> to vector<16x32xf32>
    %142 = arith.addf %140, %141 : vector<16x32xf32>
    %143 = arith.addf %86, %142 : vector<16x32xf32>
    %c0_67 = arith.constant 0 : index
    %c0_68 = arith.constant 0 : index
    %144 = vector.load %arg27[%c0_67, %c0_68] : memref<1x32xf32, #tpu.memory_space<vmem>>, vector<1x32xf32>
    %c0_69 = arith.constant 0 : index
    %c0_70 = arith.constant 0 : index
    %145 = vector.load %arg28[%c0_69, %c0_70] : memref<1x32xf32, #tpu.memory_space<vmem>>, vector<1x32xf32>
    %cst_71 = arith.constant dense<0.000000e+00> : vector<16xf32>
    %146 = vector.multi_reduction <add>, %143, %cst_71 [1] : vector<16x32xf32> to vector<16xf32>
    %147 = vector.shape_cast %146 : vector<16xf32> to vector<16x1xf32>
    %cst_72 = arith.constant 3.200000e+01 : f32
    %148 = vector.broadcast %cst_72 : f32 to vector<16x1xf32>
    %149 = arith.divf %147, %148 : vector<16x1xf32>
    %150 = vector.broadcast %149 : vector<16x1xf32> to vector<16x32xf32>
    %151 = arith.subf %143, %150 : vector<16x32xf32>
    %152 = arith.mulf %151, %151 : vector<16x32xf32>
    %cst_73 = arith.constant dense<0.000000e+00> : vector<16xf32>
    %153 = vector.multi_reduction <add>, %152, %cst_73 [1] : vector<16x32xf32> to vector<16xf32>
    %154 = vector.shape_cast %153 : vector<16xf32> to vector<16x1xf32>
    %cst_74 = arith.constant 3.200000e+01 : f32
    %155 = vector.broadcast %cst_74 : f32 to vector<16x1xf32>
    %156 = arith.divf %154, %155 : vector<16x1xf32>
    %157 = vector.broadcast %149 : vector<16x1xf32> to vector<16x32xf32>
    %158 = arith.subf %143, %157 : vector<16x32xf32>
    %cst_75 = arith.constant 9.99999974E-6 : f32
    %159 = vector.broadcast %cst_75 : f32 to vector<16x1xf32>
    %160 = arith.addf %156, %159 : vector<16x1xf32>
    %161 = math.rsqrt %160 : vector<16x1xf32>
    %162 = vector.broadcast %161 : vector<16x1xf32> to vector<16x32xf32>
    %163 = arith.mulf %158, %162 : vector<16x32xf32>
    %164 = vector.broadcast %144 : vector<1x32xf32> to vector<16x32xf32>
    %165 = arith.mulf %163, %164 : vector<16x32xf32>
    %166 = vector.broadcast %145 : vector<1x32xf32> to vector<16x32xf32>
    %167 = arith.addf %165, %166 : vector<16x32xf32>
    %c0_76 = arith.constant 0 : index
    %c0_77 = arith.constant 0 : index
    %168 = vector.load %arg21[%c0_76, %c0_77] : memref<32x64xbf16, #tpu.memory_space<vmem>>, vector<32x64xbf16>
    %c0_78 = arith.constant 0 : index
    %c0_79 = arith.constant 0 : index
    %169 = vector.load %arg22[%c0_78, %c0_79] : memref<1x64xf32, #tpu.memory_space<vmem>>, vector<1x64xf32>
    %c0_80 = arith.constant 0 : index
    %c0_81 = arith.constant 0 : index
    %170 = vector.load %arg23[%c0_80, %c0_81] : memref<64x32xbf16, #tpu.memory_space<vmem>>, vector<64x32xbf16>
    %c0_82 = arith.constant 0 : index
    %c0_83 = arith.constant 0 : index
    %171 = vector.load %arg24[%c0_82, %c0_83] : memref<1x32xf32, #tpu.memory_space<vmem>>, vector<1x32xf32>
    %172 = arith.truncf %167 : vector<16x32xf32> to vector<16x32xbf16>
    %cst_84 = arith.constant dense<0.000000e+00> : vector<16x64xf32>
    %173 = tpu.matmul %172, %168, %cst_84 {dimension_numbers = #tpu.dot_dimension_numbers<[1], [0], [0], [1], [0, 0, 1, 1], [], []>} : vector<16x32xbf16>, vector<32x64xbf16>, vector<16x64xf32> -> vector<16x64xf32>
    %174 = vector.broadcast %169 : vector<1x64xf32> to vector<16x64xf32>
    %175 = arith.addf %173, %174 : vector<16x64xf32>
    %cst_85 = arith.constant 0.000000e+00 : f32
    %176 = vector.broadcast %cst_85 : f32 to vector<16x64xf32>
    %177 = arith.maximumf %175, %176 : vector<16x64xf32>
    %178 = arith.truncf %177 : vector<16x64xf32> to vector<16x64xbf16>
    %cst_86 = arith.constant dense<0.000000e+00> : vector<16x32xf32>
    %179 = tpu.matmul %178, %170, %cst_86 {dimension_numbers = #tpu.dot_dimension_numbers<[1], [0], [0], [1], [0, 0, 1, 1], [], []>} : vector<16x64xbf16>, vector<64x32xbf16>, vector<16x32xf32> -> vector<16x32xf32>
    %180 = vector.broadcast %171 : vector<1x32xf32> to vector<16x32xf32>
    %181 = arith.addf %179, %180 : vector<16x32xf32>
    %182 = arith.addf %167, %181 : vector<16x32xf32>
    %c0_87 = arith.constant 0 : index
    %c0_88 = arith.constant 0 : index
    %183 = vector.load %arg29[%c0_87, %c0_88] : memref<1x32xf32, #tpu.memory_space<vmem>>, vector<1x32xf32>
    %c0_89 = arith.constant 0 : index
    %c0_90 = arith.constant 0 : index
    %184 = vector.load %arg30[%c0_89, %c0_90] : memref<1x32xf32, #tpu.memory_space<vmem>>, vector<1x32xf32>
    %cst_91 = arith.constant dense<0.000000e+00> : vector<16xf32>
    %185 = vector.multi_reduction <add>, %182, %cst_91 [1] : vector<16x32xf32> to vector<16xf32>
    %186 = vector.shape_cast %185 : vector<16xf32> to vector<16x1xf32>
    %cst_92 = arith.constant 3.200000e+01 : f32
    %187 = vector.broadcast %cst_92 : f32 to vector<16x1xf32>
    %188 = arith.divf %186, %187 : vector<16x1xf32>
    %189 = vector.broadcast %188 : vector<16x1xf32> to vector<16x32xf32>
    %190 = arith.subf %182, %189 : vector<16x32xf32>
    %191 = arith.mulf %190, %190 : vector<16x32xf32>
    %cst_93 = arith.constant dense<0.000000e+00> : vector<16xf32>
    %192 = vector.multi_reduction <add>, %191, %cst_93 [1] : vector<16x32xf32> to vector<16xf32>
    %193 = vector.shape_cast %192 : vector<16xf32> to vector<16x1xf32>
    %cst_94 = arith.constant 3.200000e+01 : f32
    %194 = vector.broadcast %cst_94 : f32 to vector<16x1xf32>
    %195 = arith.divf %193, %194 : vector<16x1xf32>
    %196 = vector.broadcast %188 : vector<16x1xf32> to vector<16x32xf32>
    %197 = arith.subf %182, %196 : vector<16x32xf32>
    %cst_95 = arith.constant 9.99999974E-6 : f32
    %198 = vector.broadcast %cst_95 : f32 to vector<16x1xf32>
    %199 = arith.addf %195, %198 : vector<16x1xf32>
    %200 = math.rsqrt %199 : vector<16x1xf32>
    %201 = vector.broadcast %200 : vector<16x1xf32> to vector<16x32xf32>
    %202 = arith.mulf %197, %201 : vector<16x32xf32>
    %203 = vector.broadcast %183 : vector<1x32xf32> to vector<16x32xf32>
    %204 = arith.mulf %202, %203 : vector<16x32xf32>
    %205 = vector.broadcast %184 : vector<1x32xf32> to vector<16x32xf32>
    %206 = arith.addf %204, %205 : vector<16x32xf32>
    %207 = vector.shape_cast %206 : vector<16x32xf32> to vector<2x8x32xf32>
    %c0_96 = arith.constant 0 : index
    %c0_97 = arith.constant 0 : index
    %c0_98 = arith.constant 0 : index
    %208 = vector.load %arg31[%c0_96, %c0_97, %c0_98] : memref<2x8x32xf32, #tpu.memory_space<vmem>>, vector<2x8x32xf32>
    tpu.vector_store %arg31[%c0_96, %c0_97, %c0_98], %207 {strides = array<i32>} : memref<2x8x32xf32, #tpu.memory_space<vmem>>, vector<2x8x32xf32>,
    return
  }
  func.func @transform_0(%arg0: i32) -> (i32, i32, i32) {
    %c0_i32 = arith.constant 0 : i32
    %c0_i32_0 = arith.constant 0 : i32
    %c0_i32_1 = arith.constant 0 : i32
    return %arg0, %c0_i32, %c0_i32_0 : i32, i32, i32
  }
  func.func @transform_1(%arg0: i32) -> (i32, i32, i32) {
    %c0_i32 = arith.constant 0 : i32
    %c0_i32_0 = arith.constant 0 : i32
    %c0_i32_1 = arith.constant 0 : i32
    return %arg0, %c0_i32, %c0_i32_0 : i32, i32, i32
  }
  func.func @transform_2(%arg0: i32) -> (i32, i32) {
    %c0_i32 = arith.constant 0 : i32
    %c0_i32_0 = arith.constant 0 : i32
    %c0_i32_1 = arith.constant 0 : i32
    return %c0_i32, %c0_i32_0 : i32, i32
  }
  func.func @transform_3(%arg0: i32) -> (i32, i32) {
    %c0_i32 = arith.constant 0 : i32
    %c0_i32_0 = arith.constant 0 : i32
    %c0_i32_1 = arith.constant 0 : i32
    return %c0_i32, %c0_i32_0 : i32, i32
  }
  func.func @transform_4(%arg0: i32) -> (i32, i32) {
    %c0_i32 = arith.constant 0 : i32
    %c0_i32_0 = arith.constant 0 : i32
    %c0_i32_1 = arith.constant 0 : i32
    return %c0_i32, %c0_i32_0 : i32, i32
  }
  func.func @transform_5(%arg0: i32) -> (i32, i32) {
    %c0_i32 = arith.constant 0 : i32
    %c0_i32_0 = arith.constant 0 : i32
    %c0_i32_1 = arith.constant 0 : i32
    return %c0_i32, %c0_i32_0 : i32, i32
  }
  func.func @transform_6(%arg0: i32) -> (i32, i32) {
    %c0_i32 = arith.constant 0 : i32
    %c0_i32_0 = arith.constant 0 : i32
    %c0_i32_1 = arith.constant 0 : i32
    return %c0_i32, %c0_i32_0 : i32, i32
  }
  func.func @transform_7(%arg0: i32) -> (i32, i32) {
    %c0_i32 = arith.constant 0 : i32
    %c0_i32_0 = arith.constant 0 : i32
    %c0_i32_1 = arith.constant 0 : i32
    return %c0_i32, %c0_i32_0 : i32, i32
  }
  func.func @transform_8(%arg0: i32) -> (i32, i32) {
    %c0_i32 = arith.constant 0 : i32
    %c0_i32_0 = arith.constant 0 : i32
    %c0_i32_1 = arith.constant 0 : i32
    return %c0_i32, %c0_i32_0 : i32, i32
  }
  func.func @transform_9(%arg0: i32) -> (i32, i32) {
    %c0_i32 = arith.constant 0 : i32
    %c0_i32_0 = arith.constant 0 : i32
    %c0_i32_1 = arith.constant 0 : i32
    return %c0_i32, %c0_i32_0 : i32, i32
  }
  func.func @transform_10(%arg0: i32) -> (i32, i32) {
    %c0_i32 = arith.constant 0 : i32
    %c0_i32_0 = arith.constant 0 : i32
    %c0_i32_1 = arith.constant 0 : i32
    return %c0_i32, %c0_i32_0 : i32, i32
  }
  func.func @transform_11(%arg0: i32) -> (i32, i32) {
    %c0_i32 = arith.constant 0 : i32
    %c0_i32_0 = arith.constant 0 : i32
    %c0_i32_1 = arith.constant 0 : i32
    return %c0_i32, %c0_i32_0 : i32, i32
  }
  func.func @transform_12(%arg0: i32) -> (i32, i32) {
    %c0_i32 = arith.constant 0 : i32
    %c0_i32_0 = arith.constant 0 : i32
    %c0_i32_1 = arith.constant 0 : i32
    return %c0_i32, %c0_i32_0 : i32, i32
  }
  func.func @transform_13(%arg0: i32) -> (i32, i32) {
    %c0_i32 = arith.constant 0 : i32
    %c0_i32_0 = arith.constant 0 : i32
    %c0_i32_1 = arith.constant 0 : i32
    return %c0_i32, %c0_i32_0 : i32, i32
  }
  func.func @transform_14(%arg0: i32) -> (i32, i32) {
    %c0_i32 = arith.constant 0 : i32
    %c0_i32_0 = arith.constant 0 : i32
    %c0_i32_1 = arith.constant 0 : i32
    return %c0_i32, %c0_i32_0 : i32, i32
  }
  func.func @transform_15(%arg0: i32) -> (i32, i32) {
    %c0_i32 = arith.constant 0 : i32
    %c0_i32_0 = arith.constant 0 : i32
    %c0_i32_1 = arith.constant 0 : i32
    return %c0_i32, %c0_i32_0 : i32, i32
  }
  func.func @transform_16(%arg0: i32) -> (i32, i32) {
    %c0_i32 = arith.constant 0 : i32
    %c0_i32_0 = arith.constant 0 : i32
    %c0_i32_1 = arith.constant 0 : i32
    return %c0_i32, %c0_i32_0 : i32, i32
  }
  func.func @transform_17(%arg0: i32) -> (i32, i32) {
    %c0_i32 = arith.constant 0 : i32
    %c0_i32_0 = arith.constant 0 : i32
    %c0_i32_1 = arith.constant 0 : i32
    return %c0_i32, %c0_i32_0 : i32, i32
  }
  func.func @transform_18(%arg0: i32) -> (i32, i32) {
    %c0_i32 = arith.constant 0 : i32
    %c0_i32_0 = arith.constant 0 : i32
    %c0_i32_1 = arith.constant 0 : i32
    return %c0_i32, %c0_i32_0 : i32, i32
  }
  func.func @transform_19(%arg0: i32) -> (i32, i32) {
    %c0_i32 = arith.constant 0 : i32
    %c0_i32_0 = arith.constant 0 : i32
    %c0_i32_1 = arith.constant 0 : i32
    return %c0_i32, %c0_i32_0 : i32, i32
  }
  func.func @transform_20(%arg0: i32) -> (i32, i32) {
    %c0_i32 = arith.constant 0 : i32
    %c0_i32_0 = arith.constant 0 : i32
    %c0_i32_1 = arith.constant 0 : i32
    return %c0_i32, %c0_i32_0 : i32, i32
  }
  func.func @transform_21(%arg0: i32) -> (i32, i32) {
    %c0_i32 = arith.constant 0 : i32
    %c0_i32_0 = arith.constant 0 : i32
    %c0_i32_1 = arith.constant 0 : i32
    return %c0_i32, %c0_i32_0 : i32, i32
  }
  func.func @transform_22(%arg0: i32) -> (i32, i32) {
    %c0_i32 = arith.constant 0 : i32
    %c0_i32_0 = arith.constant 0 : i32
    %c0_i32_1 = arith.constant 0 : i32
    return %c0_i32, %c0_i32_0 : i32, i32
  }
  func.func @transform_23(%arg0: i32) -> (i32, i32) {
    %c0_i32 = arith.constant 0 : i32
    %c0_i32_0 = arith.constant 0 : i32
    %c0_i32_1 = arith.constant 0 : i32
    return %c0_i32, %c0_i32_0 : i32, i32
  }
  func.func @transform_24(%arg0: i32) -> (i32, i32) {
    %c0_i32 = arith.constant 0 : i32
    %c0_i32_0 = arith.constant 0 : i32
    %c0_i32_1 = arith.constant 0 : i32
    return %c0_i32, %c0_i32_0 : i32, i32
  }
  func.func @transform_25(%arg0: i32) -> (i32, i32) {
    %c0_i32 = arith.constant 0 : i32
    %c0_i32_0 = arith.constant 0 : i32
    %c0_i32_1 = arith.constant 0 : i32
    return %c0_i32, %c0_i32_0 : i32, i32
  }
  func.func @transform_26(%arg0: i32) -> (i32, i32) {
    %c0_i32 = arith.constant 0 : i32
    %c0_i32_0 = arith.constant 0 : i32
    %c0_i32_1 = arith.constant 0 : i32
    return %c0_i32, %c0_i32_0 : i32, i32
  }
  func.func @transform_27(%arg0: i32) -> (i32, i32) {
    %c0_i32 = arith.constant 0 : i32
    %c0_i32_0 = arith.constant 0 : i32
    %c0_i32_1 = arith.constant 0 : i32
    return %c0_i32, %c0_i32_0 : i32, i32
  }
  func.func @transform_28(%arg0: i32) -> (i32, i32) {
    %c0_i32 = arith.constant 0 : i32
    %c0_i32_0 = arith.constant 0 : i32
    %c0_i32_1 = arith.constant 0 : i32
    return %c0_i32, %c0_i32_0 : i32, i32
  }
  func.func @transform_29(%arg0: i32) -> (i32, i32) {
    %c0_i32 = arith.constant 0 : i32
    %c0_i32_0 = arith.constant 0 : i32
    %c0_i32_1 = arith.constant 0 : i32
    return %c0_i32, %c0_i32_0 : i32, i32
  }
  func.func @transform_30(%arg0: i32) -> (i32, i32, i32) {
    %c0_i32 = arith.constant 0 : i32
    %c0_i32_0 = arith.constant 0 : i32
    %c0_i32_1 = arith.constant 0 : i32
    return %arg0, %c0_i32, %c0_i32_0 : i32, i32, i32
  }
}

</mosaic_0001>

<llo_original>
// kernel: tpu_custom_call.1
$region0: #{tpu_custom_call.1}
  #allocation0 [shape = 'u32[]', space=smem, size = 0x4, offset = 0x4, fixed_abs, tag = 'smem constant byte address 0x4 - core index']
  #allocation1 [shape = 'u32[144,128]{1,0:T(1,128)}', space=vmem, size = 0x12000, scoped, tag = 'internal scratch']
  %s0 = inlined_call_operand.smem [shape: u32[31], index: -1, kind: input, shape index: {}]
  %s1 = sld [smem:[%s0]]
  %s2 = scalar_lea.smem %s0, 1
  %s3 = sld [smem:[%s2]]
  %s4 = scalar_lea.smem %s0, 2
  %s5 = sld [smem:[%s4]]
  %s6 = scalar_lea.smem %s0, 3
  %s7 = sld [smem:[%s6]]
  %s8 = scalar_lea.smem %s0, 4
  %s9 = sld [smem:[%s8]]
  %s10 = scalar_lea.smem %s0, 5
  %s11 = sld [smem:[%s10]]
  %s12 = scalar_lea.smem %s0, 6
  %s13 = sld [smem:[%s12]]
  %s14 = scalar_lea.smem %s0, 7
  %s15 = sld [smem:[%s14]]
  %s16 = scalar_lea.smem %s0, 8
  %s17 = sld [smem:[%s16]]
  %s18 = scalar_lea.smem %s0, 9
  %s19 = sld [smem:[%s18]]
  %s20 = scalar_lea.smem %s0, 10
  %s21 = sld [smem:[%s20]]
  %s22 = scalar_lea.smem %s0, 11
  %s23 = sld [smem:[%s22]]
  %s24 = scalar_lea.smem %s0, 12
  %s25 = sld [smem:[%s24]]
  %s26 = scalar_lea.smem %s0, 13
  %s27 = sld [smem:[%s26]]
  %s28 = scalar_lea.smem %s0, 14
  %s29 = sld [smem:[%s28]]
  %s30 = scalar_lea.smem %s0, 15
  %s31 = sld [smem:[%s30]]
  %s32 = scalar_lea.smem %s0, 16
  %s33 = sld [smem:[%s32]]
  %s34 = scalar_lea.smem %s0, 17
  %s35 = sld [smem:[%s34]]
  %s36 = scalar_lea.smem %s0, 18
  %s37 = sld [smem:[%s36]]
  %s38 = scalar_lea.smem %s0, 19
  %s39 = sld [smem:[%s38]]
  %s40 = scalar_lea.smem %s0, 20
  %s41 = sld [smem:[%s40]]
  %s42 = scalar_lea.smem %s0, 21
  %s43 = sld [smem:[%s42]]
  %s44 = scalar_lea.smem %s0, 22
  %s45 = sld [smem:[%s44]]
  %s46 = scalar_lea.smem %s0, 23
  %s47 = sld [smem:[%s46]]
  %s48 = scalar_lea.smem %s0, 24
  %s49 = sld [smem:[%s48]]
  %s50 = scalar_lea.smem %s0, 25
  %s51 = sld [smem:[%s50]]
  %s52 = scalar_lea.smem %s0, 26
  %s53 = sld [smem:[%s52]]
  %s54 = scalar_lea.smem %s0, 27
  %s55 = sld [smem:[%s54]]
  %s56 = scalar_lea.smem %s0, 28
  %s57 = sld [smem:[%s56]]
  %s58 = scalar_lea.smem %s0, 29
  %s59 = sld [smem:[%s58]]
  %s60 = scalar_lea.smem %s0, 30
  %s61 = sld [smem:[%s60]]
  %s62 = sld [smem:[#allocation0]]
  $region186: #{tpu_custom_call.1} parent=0
    _
  %s64 = ssub.s32 1, %s62
  %s65 = scalar_select 0, %s64, %s62
  $region1: #{tpu_custom_call.1} parent=0
    #allocation2 [shape = 'u8[4096]{0}', space=vmem, size = 0x1000, scoped, tag = 'input window, operand 2, single buffered']
    #allocation3 [shape = 's32[1]{0}', space=sflag, size = 0x4, scoped, tag = 'scoped memory for tpu_custom_call.1']
    #allocation4 [shape = 's32[1]{0}', space=sflag, size = 0x4, scoped, tag = 'scoped memory for tpu_custom_call.1']
    #allocation5 [shape = 'u8[4096]{0}', space=vmem, size = 0x1000, scoped, tag = 'input window, operand 3, single buffered']
    #allocation6 [shape = 's32[1]{0}', space=sflag, size = 0x4, scoped, tag = 'scoped memory for tpu_custom_call.1']
    #allocation7 [shape = 'u8[512]{0}', space=vmem, size = 0x400, scoped, tag = 'input window, operand 5, single buffered']
    #allocation8 [shape = 'u8[8192]{0}', space=vmem, size = 0x2000, scoped, tag = 'input window, operand 6, single buffered']
    #allocation9 [shape = 's32[1]{0}', space=sflag, size = 0x4, scoped, tag = 'scoped memory for tpu_custom_call.1']
    #allocation10 [shape = 'u8[512]{0}', space=vmem, size = 0x400, scoped, tag = 'input window, operand 7, single buffered']
    #allocation11 [shape = 'u8[8192]{0}', space=vmem, size = 0x2000, scoped, tag = 'input window, operand 8, single buffered']
    #allocation12 [shape = 's32[1]{0}', space=sflag, size = 0x4, scoped, tag = 'scoped memory for tpu_custom_call.1']
    #allocation13 [shape = 'u8[512]{0}', space=vmem, size = 0x400, scoped, tag = 'input window, operand 9, single buffered']
    #allocation14 [shape = 'u8[512]{0}', space=vmem, size = 0x400, scoped, tag = 'input window, operand 11, single buffered']
    #allocation15 [shape = 's32[1]{0}', space=sflag, size = 0x4, scoped, tag = 'scoped memory for tpu_custom_call.1']
    #allocation16 [shape = 'u8[8192]{0}', space=vmem, size = 0x2000, scoped, tag = 'input window, operand 12, single buffered']
    #allocation17 [shape = 'u8[512]{0}', space=vmem, size = 0x400, scoped, tag = 'input window, operand 13, single buffered']
    #allocation18 [shape = 's32[1]{0}', space=sflag, size = 0x4, scoped, tag = 'scoped memory for tpu_custom_call.1']
    #allocation19 [shape = 'u8[512]{0}', space=vmem, size = 0x400, scoped, tag = 'input window, operand 15, single buffered']
    #allocation20 [shape = 'u8[8192]{0}', space=vmem, size = 0x2000, scoped, tag = 'input window, operand 16, single buffered']
    #allocation21 [shape = 's32[1]{0}', space=sflag, size = 0x4, scoped, tag = 'scoped memory for tpu_custom_call.1']
    #allocation22 [shape = 'u8[512]{0}', space=vmem, size = 0x400, scoped, tag = 'input window, operand 17, single buffered']
    #allocation23 [shape = 'u8[8192]{0}', space=vmem, size = 0x2000, scoped, tag = 'input window, operand 20, single buffered']
    #allocation24 [shape = 's32[1]{0}', space=sflag, size = 0x4, scoped, tag = 'scoped memory for tpu_custom_call.1']
    #allocation25 [shape = 'u8[8192]{0}', space=vmem, size = 0x2000, scoped, tag = 'output window, operand 0, single buffered']
    %66 = vsyncpa [#allocation3], 0
    %67 = vsyncpa [#allocation6], 0
    %68 = vsyncpa [#allocation9], 0
    %69 = vsyncpa [#allocation12], 0
    %70 = vsyncpa [#allocation15], 0
    %71 = vsyncpa [#allocation18], 0
    %72 = vsyncpa [#allocation21], 0
    %73 = vsyncpa [#allocation24], 0
    %74 = vsyncpa [#allocation4], 0
    // Predicated region
    $region2: #{tpu_custom_call.1} parent=1 // pred_check
      _
    $region3: #{tpu_custom_call.1} parent=1 // pred_check_branch
      %76 = sbr.rel (0) target = $region5
    $region4: #{tpu_custom_call.1} parent=1 // pred_region
      _
    $region5: #{tpu_custom_call.1} parent=1 // pred_fallthru
      _
    // Predicated region
    $region6: #{tpu_custom_call.1} parent=1 // pred_check
      _
    $region7: #{tpu_custom_call.1} parent=1 // pred_check_branch
      %78 = sbr.rel (0) target = $region9
    $region8: #{tpu_custom_call.1} parent=1 // pred_region
      _
    $region9: #{tpu_custom_call.1} parent=1 // pred_fallthru
      _
    // Predicated region
    $region10: #{tpu_custom_call.1} parent=1 // pred_check
      _
    $region11: #{tpu_custom_call.1} parent=1 // pred_check_branch
      %80 = sbr.rel (0) target = $region13
    $region12: #{tpu_custom_call.1} parent=1 // pred_region
      %s82 = ssub.s32 128, 128
      %83 = vsyncadd [#allocation3], %s82
      %s85 = sshll.u32 [#allocation2], 4
      %s86 = int_to_ptr.vmem [resolvable:$true] %s85
      %88 = dma.hbm_to_vmem [thread:$0]  %s5, 128, %s86, [#allocation3]
    $region13: #{tpu_custom_call.1} parent=1 // pred_fallthru
      _
    // Predicated region
    $region14: #{tpu_custom_call.1} parent=1 // pred_check
      _
    $region15: #{tpu_custom_call.1} parent=1 // pred_check_branch
      %90 = sbr.rel (0) target = $region17
    $region16: #{tpu_custom_call.1} parent=1 // pred_region
      %s92 = ssub.s32 128, 128
      %93 = vsyncadd [#allocation6], %s92
      %s95 = sshll.u32 [#allocation5], 4
      %s96 = int_to_ptr.vmem [resolvable:$true] %s95
      %98 = dma.hbm_to_vmem [thread:$0]  %s7, 128, %s96, [#allocation6]
    $region17: #{tpu_custom_call.1} parent=1 // pred_fallthru
      _
    // Predicated region
    $region18: #{tpu_custom_call.1} parent=1 // pred_check
      _
    $region19: #{tpu_custom_call.1} parent=1 // pred_check_branch
      %100 = sbr.rel (0) target = $region21
    $region20: #{tpu_custom_call.1} parent=1 // pred_region
      _
    $region21: #{tpu_custom_call.1} parent=1 // pred_fallthru
      _
    // Predicated region
    $region22: #{tpu_custom_call.1} parent=1 // pred_check
      _
    $region23: #{tpu_custom_call.1} parent=1 // pred_check_branch
      %102 = sbr.rel (0) target = $region25
    $region24: #{tpu_custom_call.1} parent=1 // pred_region
      %s104 = ssub.s32 16, 16
      %105 = vsyncadd [#allocation6], %s104
      %s107 = sshll.u32 [#allocation7], 4
      %s108 = int_to_ptr.vmem [resolvable:$true] %s107
      %110 = dma.hbm_to_vmem [thread:$0]  %s11, 16, %s108, [#allocation6]
    $region25: #{tpu_custom_call.1} parent=1 // pred_fallthru
      _
    // Predicated region
    $region26: #{tpu_custom_call.1} parent=1 // pred_check
      _
    $region27: #{tpu_custom_call.1} parent=1 // pred_check_branch
      %112 = sbr.rel (0) target = $region29
    $region28: #{tpu_custom_call.1} parent=1 // pred_region
      %s114 = ssub.s32 256, 256
      %115 = vsyncadd [#allocation9], %s114
      %s116 = sshll.u32 [#allocation8], 4
      %s117 = int_to_ptr.vmem [resolvable:$true] %s116
      %122 = dma.hbm_to_vmem [thread:$0]  %s13, 256, %s117, [#allocation9], 64, 64, 4
    $region29: #{tpu_custom_call.1} parent=1 // pred_fallthru
      _
    // Predicated region
    $region30: #{tpu_custom_call.1} parent=1 // pred_check
      _
    $region31: #{tpu_custom_call.1} parent=1 // pred_check_branch
      %124 = sbr.rel (0) target = $region33
    $region32: #{tpu_custom_call.1} parent=1 // pred_region
      %s126 = ssub.s32 16, 16
      %127 = vsyncadd [#allocation9], %s126
      %s129 = sshll.u32 [#allocation10], 4
      %s130 = int_to_ptr.vmem [resolvable:$true] %s129
      %132 = dma.hbm_to_vmem [thread:$0]  %s15, 16, %s130, [#allocation9]
    $region33: #{tpu_custom_call.1} parent=1 // pred_fallthru
      _
    // Predicated region
    $region34: #{tpu_custom_call.1} parent=1 // pred_check
      _
    $region35: #{tpu_custom_call.1} parent=1 // pred_check_branch
      %134 = sbr.rel (0) target = $region37
    $region36: #{tpu_custom_call.1} parent=1 // pred_region
      %s136 = ssub.s32 256, 256
      %137 = vsyncadd [#allocation12], %s136
      %s138 = sshll.u32 [#allocation11], 4
      %s139 = int_to_ptr.vmem [resolvable:$true] %s138
      %144 = dma.hbm_to_vmem [thread:$0]  %s17, 256, %s139, [#allocation12], 64, 64, 4
    $region37: #{tpu_custom_call.1} parent=1 // pred_fallthru
      _
    // Predicated region
    $region38: #{tpu_custom_call.1} parent=1 // pred_check
      _
    $region39: #{tpu_custom_call.1} parent=1 // pred_check_branch
      %146 = sbr.rel (0) target = $region41
    $region40: #{tpu_custom_call.1} parent=1 // pred_region
      %s148 = ssub.s32 16, 16
      %149 = vsyncadd [#allocation12], %s148
      %s151 = sshll.u32 [#allocation13], 4
      %s152 = int_to_ptr.vmem [resolvable:$true] %s151
      %154 = dma.hbm_to_vmem [thread:$0]  %s19, 16, %s152, [#allocation12]
    $region41: #{tpu_custom_call.1} parent=1 // pred_fallthru
      _
    // Predicated region
    $region42: #{tpu_custom_call.1} parent=1 // pred_check
      _
    $region43: #{tpu_custom_call.1} parent=1 // pred_check_branch
      %156 = sbr.rel (0) target = $region45
    $region44: #{tpu_custom_call.1} parent=1 // pred_region
      _
    $region45: #{tpu_custom_call.1} parent=1 // pred_fallthru
      _
    // Predicated region
    $region46: #{tpu_custom_call.1} parent=1 // pred_check
      _
    $region47: #{tpu_custom_call.1} parent=1 // pred_check_branch
      %158 = sbr.rel (0) target = $region49
    $region48: #{tpu_custom_call.1} parent=1 // pred_region
      %s160 = ssub.s32 16, 16
      %161 = vsyncadd [#allocation15], %s160
      %s163 = sshll.u32 [#allocation14], 4
      %s164 = int_to_ptr.vmem [resolvable:$true] %s163
      %166 = dma.hbm_to_vmem [thread:$0]  %s23, 16, %s164, [#allocation15]
    $region49: #{tpu_custom_call.1} parent=1 // pred_fallthru
      _
    // Predicated region
    $region50: #{tpu_custom_call.1} parent=1 // pred_check
      _
    $region51: #{tpu_custom_call.1} parent=1 // pred_check_branch
      %168 = sbr.rel (0) target = $region53
    $region52: #{tpu_custom_call.1} parent=1 // pred_region
      %s170 = ssub.s32 256, 256
      %171 = vsyncadd [#allocation15], %s170
      %s172 = sshll.u32 [#allocation16], 4
      %s173 = int_to_ptr.vmem [resolvable:$true] %s172
      %178 = dma.hbm_to_vmem [thread:$0]  %s25, 256, %s173, [#allocation15], 64, 64, 4
    $region53: #{tpu_custom_call.1} parent=1 // pred_fallthru
      _
    // Predicated region
    $region54: #{tpu_custom_call.1} parent=1 // pred_check
      _
    $region55: #{tpu_custom_call.1} parent=1 // pred_check_branch
      %180 = sbr.rel (0) target = $region57
    $region56: #{tpu_custom_call.1} parent=1 // pred_region
      %s182 = ssub.s32 16, 16
      %183 = vsyncadd [#allocation18], %s182
      %s185 = sshll.u32 [#allocation17], 4
      %s186 = int_to_ptr.vmem [resolvable:$true] %s185
      %188 = dma.hbm_to_vmem [thread:$0]  %s27, 16, %s186, [#allocation18]
    $region57: #{tpu_custom_call.1} parent=1 // pred_fallthru
      _
    // Predicated region
    $region58: #{tpu_custom_call.1} parent=1 // pred_check
      _
    $region59: #{tpu_custom_call.1} parent=1 // pred_check_branch
      %190 = sbr.rel (0) target = $region61
    $region60: #{tpu_custom_call.1} parent=1 // pred_region
      _
    $region61: #{tpu_custom_call.1} parent=1 // pred_fallthru
      _
    // Predicated region
    $region62: #{tpu_custom_call.1} parent=1 // pred_check
      _
    $region63: #{tpu_custom_call.1} parent=1 // pred_check_branch
      %192 = sbr.rel (0) target = $region65
    $region64: #{tpu_custom_call.1} parent=1 // pred_region
      %s194 = ssub.s32 16, 16
      %195 = vsyncadd [#allocation18], %s194
      %s197 = sshll.u32 [#allocation19], 4
      %s198 = int_to_ptr.vmem [resolvable:$true] %s197
      %200 = dma.hbm_to_vmem [thread:$0]  %s31, 16, %s198, [#allocation18]
    $region65: #{tpu_custom_call.1} parent=1 // pred_fallthru
      _
    // Predicated region
    $region66: #{tpu_custom_call.1} parent=1 // pred_check
      _
    $region67: #{tpu_custom_call.1} parent=1 // pred_check_branch
      %202 = sbr.rel (0) target = $region69
    $region68: #{tpu_custom_call.1} parent=1 // pred_region
      %s204 = ssub.s32 256, 256
      %205 = vsyncadd [#allocation21], %s204
      %s206 = sshll.u32 [#allocation20], 4
      %s207 = int_to_ptr.vmem [resolvable:$true] %s206
      %212 = dma.hbm_to_vmem [thread:$0]  %s33, 256, %s207, [#allocation21], 64, 64, 4
    $region69: #{tpu_custom_call.1} parent=1 // pred_fallthru
      _
    // Predicated region
    $region70: #{tpu_custom_call.1} parent=1 // pred_check
      _
    $region71: #{tpu_custom_call.1} parent=1 // pred_check_branch
      %214 = sbr.rel (0) target = $region73
    $region72: #{tpu_custom_call.1} parent=1 // pred_region
      %s216 = ssub.s32 16, 16
      %217 = vsyncadd [#allocation21], %s216
      %s219 = sshll.u32 [#allocation22], 4
      %s220 = int_to_ptr.vmem [resolvable:$true] %s219
      %222 = dma.hbm_to_vmem [thread:$0]  %s35, 16, %s220, [#allocation21]
    $region73: #{tpu_custom_call.1} parent=1 // pred_fallthru
      _
    // Predicated region
    $region74: #{tpu_custom_call.1} parent=1 // pred_check
      _
    $region75: #{tpu_custom_call.1} parent=1 // pred_check_branch
      %224 = sbr.rel (0) target = $region77
    $region76: #{tpu_custom_call.1} parent=1 // pred_region
      _
    $region77: #{tpu_custom_call.1} parent=1 // pred_fallthru
      _
    // Predicated region
    $region78: #{tpu_custom_call.1} parent=1 // pred_check
      _
    $region79: #{tpu_custom_call.1} parent=1 // pred_check_branch
      %226 = sbr.rel (0) target = $region81
    $region80: #{tpu_custom_call.1} parent=1 // pred_region
      _
    $region81: #{tpu_custom_call.1} parent=1 // pred_fallthru
      _
    // Predicated region
    $region82: #{tpu_custom_call.1} parent=1 // pred_check
      _
    $region83: #{tpu_custom_call.1} parent=1 // pred_check_branch
      %228 = sbr.rel (0) target = $region85
    $region84: #{tpu_custom_call.1} parent=1 // pred_region
      %s230 = ssub.s32 256, 256
      %231 = vsyncadd [#allocation24], %s230
      %s232 = sshll.u32 [#allocation23], 4
      %s233 = int_to_ptr.vmem [resolvable:$true] %s232
      %238 = dma.hbm_to_vmem [thread:$0]  %s41, 256, %s233, [#allocation24], 64, 64, 4
    $region85: #{tpu_custom_call.1} parent=1 // pred_fallthru
      _
    // Predicated region
    $region86: #{tpu_custom_call.1} parent=1 // pred_check
      _
    $region87: #{tpu_custom_call.1} parent=1 // pred_check_branch
      %240 = sbr.rel (0) target = $region89
    $region88: #{tpu_custom_call.1} parent=1 // pred_region
      _
    $region89: #{tpu_custom_call.1} parent=1 // pred_fallthru
      _
    // Predicated region
    $region90: #{tpu_custom_call.1} parent=1 // pred_check
      _
    $region91: #{tpu_custom_call.1} parent=1 // pred_check_branch
      %242 = sbr.rel (0) target = $region93
    $region92: #{tpu_custom_call.1} parent=1 // pred_region
      _
    $region93: #{tpu_custom_call.1} parent=1 // pred_fallthru
      _
    // Predicated region
    $region94: #{tpu_custom_call.1} parent=1 // pred_check
      _
    $region95: #{tpu_custom_call.1} parent=1 // pred_check_branch
      %244 = sbr.rel (0) target = $region97
    $region96: #{tpu_custom_call.1} parent=1 // pred_region
      _
    $region97: #{tpu_custom_call.1} parent=1 // pred_fallthru
      _
    // Predicated region
    $region98: #{tpu_custom_call.1} parent=1 // pred_check
      _
    $region99: #{tpu_custom_call.1} parent=1 // pred_check_branch
      %246 = sbr.rel (0) target = $region101
    $region100: #{tpu_custom_call.1} parent=1 // pred_region
      _
    $region101: #{tpu_custom_call.1} parent=1 // pred_fallthru
      _
    // Predicated region
    $region102: #{tpu_custom_call.1} parent=1 // pred_check
      _
    $region103: #{tpu_custom_call.1} parent=1 // pred_check_branch
      %248 = sbr.rel (0) target = $region105
    $region104: #{tpu_custom_call.1} parent=1 // pred_region
      _
    $region105: #{tpu_custom_call.1} parent=1 // pred_fallthru
      _
    // Predicated region
    $region106: #{tpu_custom_call.1} parent=1 // pred_check
      _
    $region107: #{tpu_custom_call.1} parent=1 // pred_check_branch
      %250 = sbr.rel (0) target = $region109
    $region108: #{tpu_custom_call.1} parent=1 // pred_region
      _
    $region109: #{tpu_custom_call.1} parent=1 // pred_fallthru
      _
    // Predicated region
    $region110: #{tpu_custom_call.1} parent=1 // pred_check
      _
    $region111: #{tpu_custom_call.1} parent=1 // pred_check_branch
      %252 = sbr.rel (0) target = $region113
    $region112: #{tpu_custom_call.1} parent=1 // pred_region
      _
    $region113: #{tpu_custom_call.1} parent=1 // pred_fallthru
      _
    // Predicated region
    $region114: #{tpu_custom_call.1} parent=1 // pred_check
      _
    $region115: #{tpu_custom_call.1} parent=1 // pred_check_branch
      %254 = sbr.rel (0) target = $region117
    $region116: #{tpu_custom_call.1} parent=1 // pred_region
      _
    $region117: #{tpu_custom_call.1} parent=1 // pred_fallthru
      _
    // Predicated region
    $region118: #{tpu_custom_call.1} parent=1 // pred_check
      _
    $region119: #{tpu_custom_call.1} parent=1 // pred_check_branch
      %256 = sbr.rel (0) target = $region121
    $region120: #{tpu_custom_call.1} parent=1 // pred_region
      _
    $region121: #{tpu_custom_call.1} parent=1 // pred_fallthru
      _
    // Predicated region
    $region122: #{tpu_custom_call.1} parent=1 // pred_check
      _
    $region123: #{tpu_custom_call.1} parent=1 // pred_check_branch
      %258 = sbr.rel (0) target = $region125
    $region124: #{tpu_custom_call.1} parent=1 // pred_region
      %259 = dma.done [#allocation3], 128
    $region125: #{tpu_custom_call.1} parent=1 // pred_fallthru
      _
    // Predicated region
    $region126: #{tpu_custom_call.1} parent=1 // pred_check
      _
    $region127: #{tpu_custom_call.1} parent=1 // pred_check_branch
      %261 = sbr.rel (0) target = $region129
    $region128: #{tpu_custom_call.1} parent=1 // pred_region
      %262 = dma.done [#allocation6], 128
    $region129: #{tpu_custom_call.1} parent=1 // pred_fallthru
      _
    // Predicated region
    $region130: #{tpu_custom_call.1} parent=1 // pred_check
      _
    $region131: #{tpu_custom_call.1} parent=1 // pred_check_branch
      %264 = sbr.rel (0) target = $region133
    $region132: #{tpu_custom_call.1} parent=1 // pred_region
      %265 = dma.done [#allocation6], 16
    $region133: #{tpu_custom_call.1} parent=1 // pred_fallthru
      _
    // Predicated region
    $region134: #{tpu_custom_call.1} parent=1 // pred_check
      _
    $region135: #{tpu_custom_call.1} parent=1 // pred_check_branch
      %267 = sbr.rel (0) target = $region137
    $region136: #{tpu_custom_call.1} parent=1 // pred_region
      %268 = dma.done [#allocation9], 256
    $region137: #{tpu_custom_call.1} parent=1 // pred_fallthru
      _
    // Predicated region
    $region138: #{tpu_custom_call.1} parent=1 // pred_check
      _
    $region139: #{tpu_custom_call.1} parent=1 // pred_check_branch
      %270 = sbr.rel (0) target = $region141
    $region140: #{tpu_custom_call.1} parent=1 // pred_region
      %271 = dma.done [#allocation9], 16
    $region141: #{tpu_custom_call.1} parent=1 // pred_fallthru
      _
    // Predicated region
    $region142: #{tpu_custom_call.1} parent=1 // pred_check
      _
    $region143: #{tpu_custom_call.1} parent=1 // pred_check_branch
      %273 = sbr.rel (0) target = $region145
    $region144: #{tpu_custom_call.1} parent=1 // pred_region
      %274 = dma.done [#allocation12], 256
    $region145: #{tpu_custom_call.1} parent=1 // pred_fallthru
      _
    // Predicated region
    $region146: #{tpu_custom_call.1} parent=1 // pred_check
      _
    $region147: #{tpu_custom_call.1} parent=1 // pred_check_branch
      %276 = sbr.rel (0) target = $region149
    $region148: #{tpu_custom_call.1} parent=1 // pred_region
      %277 = dma.done [#allocation12], 16
    $region149: #{tpu_custom_call.1} parent=1 // pred_fallthru
      _
    // Predicated region
    $region150: #{tpu_custom_call.1} parent=1 // pred_check
      _
    $region151: #{tpu_custom_call.1} parent=1 // pred_check_branch
      %279 = sbr.rel (0) target = $region153
    $region152: #{tpu_custom_call.1} parent=1 // pred_region
      %280 = dma.done [#allocation15], 16
    $region153: #{tpu_custom_call.1} parent=1 // pred_fallthru
      _
    // Predicated region
    $region154: #{tpu_custom_call.1} parent=1 // pred_check
      _
    $region155: #{tpu_custom_call.1} parent=1 // pred_check_branch
      %282 = sbr.rel (0) target = $region157
    $region156: #{tpu_custom_call.1} parent=1 // pred_region
      %283 = dma.done [#allocation15], 256
    $region157: #{tpu_custom_call.1} parent=1 // pred_fallthru
      _
    // Predicated region
    $region158: #{tpu_custom_call.1} parent=1 // pred_check
      _
    $region159: #{tpu_custom_call.1} parent=1 // pred_check_branch
      %285 = sbr.rel (0) target = $region161
    $region160: #{tpu_custom_call.1} parent=1 // pred_region
      %286 = dma.done [#allocation18], 16
    $region161: #{tpu_custom_call.1} parent=1 // pred_fallthru
      _
    // Predicated region
    $region162: #{tpu_custom_call.1} parent=1 // pred_check
      _
    $region163: #{tpu_custom_call.1} parent=1 // pred_check_branch
      %288 = sbr.rel (0) target = $region165
    $region164: #{tpu_custom_call.1} parent=1 // pred_region
      %289 = dma.done [#allocation18], 16
    $region165: #{tpu_custom_call.1} parent=1 // pred_fallthru
      _
    // Predicated region
    $region166: #{tpu_custom_call.1} parent=1 // pred_check
      _
    $region167: #{tpu_custom_call.1} parent=1 // pred_check_branch
      %291 = sbr.rel (0) target = $region169
    $region168: #{tpu_custom_call.1} parent=1 // pred_region
      %292 = dma.done [#allocation21], 256
    $region169: #{tpu_custom_call.1} parent=1 // pred_fallthru
      _
    // Predicated region
    $region170: #{tpu_custom_call.1} parent=1 // pred_check
      _
    $region171: #{tpu_custom_call.1} parent=1 // pred_check_branch
      %294 = sbr.rel (0) target = $region173
    $region172: #{tpu_custom_call.1} parent=1 // pred_region
      %295 = dma.done [#allocation21], 16
    $region173: #{tpu_custom_call.1} parent=1 // pred_fallthru
      _
    // Predicated region
    $region174: #{tpu_custom_call.1} parent=1 // pred_check
      _
    $region175: #{tpu_custom_call.1} parent=1 // pred_check_branch
      %297 = sbr.rel (0) target = $region177
    $region176: #{tpu_custom_call.1} parent=1 // pred_region
      %298 = dma.done [#allocation24], 256
    $region177: #{tpu_custom_call.1} parent=1 // pred_fallthru
      _
    %v300 = vld [vmem:[%s1] sm:$0xff]
    %v301 = vld [vmem:[%s1 + $0x8] sm:$0xff]
    %v302 = vld [vmem:[%s3] sm:$0xff]
    %v303 = vld [vmem:[%s3 + $0x8] sm:$0xff]
    %v304 = vld [vmem:[#allocation2] sm:$0xff]
    %v305 = vld [vmem:[#allocation5] sm:$0xff]
    %v306 = vld [vmem:[%s9] sm:$0xf]
    %v307 = vld [vmem:[%s9 + $0x4] sm:$0xf]
    %v308 = vld [vmem:[%s9 + $0x8] sm:$0xf]
    %v309 = vld [vmem:[%s9 + $0xc] sm:$0xf]
    %v310 = vld [vmem:[#allocation7] sm:$0x1]
    %v311 = vld [vmem:[#allocation8] sm:$0xf]
    %v312 = vld [vmem:[#allocation8 + $0x4] sm:$0xf]
    %v313 = vld [vmem:[#allocation8 + $0x8] sm:$0xf]
    %v314 = vld [vmem:[#allocation8 + $0xc] sm:$0xf]
    %v315 = vld [vmem:[#allocation10] sm:$0x1]
    %v316 = vld [vmem:[#allocation11] sm:$0xf]
    %v317 = vld [vmem:[#allocation11 + $0x4] sm:$0xf]
    %v318 = vld [vmem:[#allocation11 + $0x8] sm:$0xf]
    %v319 = vld [vmem:[#allocation11 + $0xc] sm:$0xf]
    %v320 = vld [vmem:[#allocation13] sm:$0x1]
    %v321 = vld [vmem:[%s21] sm:$0xf]
    %v322 = vld [vmem:[%s21 + $0x4] sm:$0xf]
    %v323 = vld [vmem:[%s21 + $0x8] sm:$0xf]
    %v324 = vld [vmem:[%s21 + $0xc] sm:$0xf]
    %v325 = vld [vmem:[#allocation14] sm:$0x1]
    %v326 = vpack.c.bf16 %v301, %v300
    %v328 = vlaneseq
    %v329 = vshrl.u32 %v328, 7
    %v330 = vsub.s32 0, %v329
    %v331 = vrot.slane %v310, %v330
    %v337 = vunpack.c.l.b16 %v306
    %v338 = vunpack.c.l.b16 %v307
    %v339 = vunpack.c.l.b16 %v308
    %v340 = vunpack.c.l.b16 %v309
    %v341 = vpack.c.b16 %v338, %v337
    %v342 = vpack.c.b16 %v340, %v339
    %vm345 = vcmask 261120
    %v347 = vsel %vm345, %v326, 0
    %349 = vmatprep.subr.bf16.mxu0 0
    %350 = vmatpush1.bf16.msra.mxu0 %v341
    %351 = vmatprep.subr.bf16.mxu0 0
    %352 = vmatpush1.bf16.msra.mxu0 %v342
    %353 = vmatprep.subr.bf16.mxu0 0
    %354 = vmatpush1.bf16.msra.mxu0 0
    %355 = vmatprep.subr.bf16.mxu0 0
    %356 = vmatpush1.bf16.msra.mxu0 0
    %357 = vmatprep.subr.bf16.mxu0 0
    %358 = vmatpush1.bf16.msra.mxu0 0
    %359 = vmatprep.subr.bf16.mxu0 0
    %360 = vmatpush1.bf16.msra.mxu0 0
    %361 = vmatprep.subr.bf16.mxu0 0
    %362 = vmatpush1.bf16.msra.mxu0 0
    %363 = vmatprep.subr.bf16.mxu0 0
    %364 = vmatpush1.bf16.msra.mxu0 0
    %365 = vmatprep.subr.bf16.mxu0 0
    %366 = vmatpush1.bf16.msra.mxu0 0
    %367 = vmatprep.subr.bf16.mxu0 0
    %368 = vmatpush1.bf16.msra.mxu0 0
    %369 = vmatprep.subr.bf16.mxu0 0
    %370 = vmatpush1.bf16.msra.mxu0 0
    %371 = vmatprep.subr.bf16.mxu0 0
    %372 = vmatpush1.bf16.msra.mxu0 0
    %373 = vmatprep.subr.bf16.mxu0 0
    %374 = vmatpush1.bf16.msra.mxu0 0
    %375 = vmatprep.subr.bf16.mxu0 0
    %376 = vmatpush1.bf16.msra.mxu0 0
    %377 = vmatprep.subr.bf16.mxu0 0
    %378 = vmatpush1.bf16.msra.mxu0 0
    %379 = vmatprep.subr.bf16.mxu0 0
    %380 = vmatpush1.bf16.msra.mxu0 0
    %381 = vmatprep.mubr.bf16.mxu0 0
    %382 = vmatmul.mubr.bf16.gmra.mrb[0].mxu0 %v347
    %v383 = vpop.f32.mrb[0].mxu0
    %v384 = vadd.f32 %v331, %v383
    %v385 = vpop.f32.mrb[0].mxu0
    %v386 = vpop.f32.mrb[0].mxu0
    %v387 = vadd.f32 %v331, %v386
    %v388 = vpop.f32.mrb[0].mxu0
    %389 = vdwg.mxu0
    %v391 = vlaneseq
    %v392 = vshrl.u32 %v391, 7
    %v393 = vsub.s32 0, %v392
    %v394 = vrot.slane %v315, %v393
    %v400 = vunpack.c.l.b16 %v311
    %v401 = vunpack.c.l.b16 %v312
    %v402 = vunpack.c.l.b16 %v313
    %v403 = vunpack.c.l.b16 %v314
    %v404 = vpack.c.b16 %v401, %v400
    %v405 = vpack.c.b16 %v403, %v402
    %408 = vmatprep.subr.bf16.mxu0 0
    %409 = vmatpush1.bf16.msra.mxu0 %v404
    %410 = vmatprep.subr.bf16.mxu0 0
    %411 = vmatpush1.bf16.msra.mxu0 %v405
    %412 = vmatprep.subr.bf16.mxu0 0
    %413 = vmatpush1.bf16.msra.mxu0 0
    %414 = vmatprep.subr.bf16.mxu0 0
    %415 = vmatpush1.bf16.msra.mxu0 0
    %416 = vmatprep.subr.bf16.mxu0 0
    %417 = vmatpush1.bf16.msra.mxu0 0
    %418 = vmatprep.subr.bf16.mxu0 0
    %419 = vmatpush1.bf16.msra.mxu0 0
    %420 = vmatprep.subr.bf16.mxu0 0
    %421 = vmatpush1.bf16.msra.mxu0 0
    %422 = vmatprep.subr.bf16.mxu0 0
    %423 = vmatpush1.bf16.msra.mxu0 0
    %424 = vmatprep.subr.bf16.mxu0 0
    %425 = vmatpush1.bf16.msra.mxu0 0
    %426 = vmatprep.subr.bf16.mxu0 0
    %427 = vmatpush1.bf16.msra.mxu0 0
    %428 = vmatprep.subr.bf16.mxu0 0
    %429 = vmatpush1.bf16.msra.mxu0 0
    %430 = vmatprep.subr.bf16.mxu0 0
    %431 = vmatpush1.bf16.msra.mxu0 0
    %432 = vmatprep.subr.bf16.mxu0 0
    %433 = vmatpush1.bf16.msra.mxu0 0
    %434 = vmatprep.subr.bf16.mxu0 0
    %435 = vmatpush1.bf16.msra.mxu0 0
    %436 = vmatprep.subr.bf16.mxu0 0
    %437 = vmatpush1.bf16.msra.mxu0 0
    %438 = vmatprep.subr.bf16.mxu0 0
    %439 = vmatpush1.bf16.msra.mxu0 0
    %440 = vmatprep.mubr.bf16.mxu0 0
    %441 = vmatmul.mubr.bf16.gmra.mrb[0].mxu0 %v347
    %v442 = vpop.f32.mrb[0].mxu0
    %v443 = vadd.f32 %v394, %v442
    %v444 = vpop.f32.mrb[0].mxu0
    %v445 = vpop.f32.mrb[0].mxu0
    %v446 = vadd.f32 %v394, %v445
    %v447 = vpop.f32.mrb[0].mxu0
    %448 = vdwg.mxu0
    %v450 = vlaneseq
    %v451 = vshrl.u32 %v450, 7
    %v452 = vsub.s32 0, %v451
    %v453 = vrot.slane %v320, %v452
    %v459 = vunpack.c.l.b16 %v316
    %v460 = vunpack.c.l.b16 %v317
    %v461 = vunpack.c.l.b16 %v318
    %v462 = vunpack.c.l.b16 %v319
    %v463 = vpack.c.b16 %v460, %v459
    %v464 = vpack.c.b16 %v462, %v461
    %467 = vmatprep.subr.bf16.mxu0 0
    %468 = vmatpush1.bf16.msra.mxu0 %v463
    %469 = vmatprep.subr.bf16.mxu0 0
    %470 = vmatpush1.bf16.msra.mxu0 %v464
    %471 = vmatprep.subr.bf16.mxu0 0
    %472 = vmatpush1.bf16.msra.mxu0 0
    %473 = vmatprep.subr.bf16.mxu0 0
    %474 = vmatpush1.bf16.msra.mxu0 0
    %475 = vmatprep.subr.bf16.mxu0 0
    %476 = vmatpush1.bf16.msra.mxu0 0
    %477 = vmatprep.subr.bf16.mxu0 0
    %478 = vmatpush1.bf16.msra.mxu0 0
    %479 = vmatprep.subr.bf16.mxu0 0
    %480 = vmatpush1.bf16.msra.mxu0 0
    %481 = vmatprep.subr.bf16.mxu0 0
    %482 = vmatpush1.bf16.msra.mxu0 0
    %483 = vmatprep.subr.bf16.mxu0 0
    %484 = vmatpush1.bf16.msra.mxu0 0
    %485 = vmatprep.subr.bf16.mxu0 0
    %486 = vmatpush1.bf16.msra.mxu0 0
    %487 = vmatprep.subr.bf16.mxu0 0
    %488 = vmatpush1.bf16.msra.mxu0 0
    %489 = vmatprep.subr.bf16.mxu0 0
    %490 = vmatpush1.bf16.msra.mxu0 0
    %491 = vmatprep.subr.bf16.mxu0 0
    %492 = vmatpush1.bf16.msra.mxu0 0
    %493 = vmatprep.subr.bf16.mxu0 0
    %494 = vmatpush1.bf16.msra.mxu0 0
    %495 = vmatprep.subr.bf16.mxu0 0
    %496 = vmatpush1.bf16.msra.mxu0 0
    %497 = vmatprep.subr.bf16.mxu0 0
    %498 = vmatpush1.bf16.msra.mxu0 0
    %499 = vmatprep.mubr.bf16.mxu0 0
    %500 = vmatmul.mubr.bf16.gmra.mrb[0].mxu0 %v347
    %v501 = vpop.f32.mrb[0].mxu0
    %v502 = vadd.f32 %v453, %v501
    %v503 = vpop.f32.mrb[0].mxu0
    %v504 = vpop.f32.mrb[0].mxu0
    %v505 = vadd.f32 %v453, %v504
    %v506 = vpop.f32.mrb[0].mxu0
    %507 = vdwg.mxu0
    %v508 = vmul.f32 %v384, 0.35355338
    %v509 = vmul.f32 %v387, 0.35355338
    %512 = vrot.lane.b32.xlu0 %v508, 120
    %v513 = vpop.permute.xlu0 %512
    %514 = vrot.lane.b32.xlu0 %v509, 120
    %v515 = vpop.permute.xlu0 %514
    %518 = vrot.lane.b32.xlu0 %v508, 112
    %v519 = vpop.permute.xlu0 %518
    %520 = vrot.lane.b32.xlu0 %v509, 112
    %v521 = vpop.permute.xlu0 %520
    %524 = vrot.lane.b32.xlu0 %v508, 104
    %v525 = vpop.permute.xlu0 %524
    %526 = vrot.lane.b32.xlu0 %v509, 104
    %v527 = vpop.permute.xlu0 %526
    %v530 = vcombine.low %v508, %v519
    %v531 = vcombine.high %v508, %v519
    %v533 = vunpack.c.l.s4 1983009808
    %v534 = vunpack.c.0.s8 %v533
    %v535 = vlaneseq
    %v536 = vshrl.u32 %v535, 7
    %v537 = vsub.s32 %v534, %v536
    %v538 = vrot.slane %v530, %v537
    %v540 = vunpack.c.l.s4 1983009808
    %v541 = vunpack.c.0.s8 %v540
    %v542 = vlaneseq
    %v543 = vshrl.u32 %v542, 7
    %v544 = vsub.s32 %v541, %v543
    %v545 = vrot.slane %v531, %v544
    %v546 = vcombine.low %v513, %v525
    %v547 = vcombine.high %v513, %v525
    %v549 = vunpack.c.l.s4 1983009808
    %v550 = vunpack.c.0.s8 %v549
    %v551 = vlaneseq
    %v552 = vshrl.u32 %v551, 7
    %v553 = vsub.s32 %v550, %v552
    %v554 = vrot.slane %v546, %v553
    %v556 = vunpack.c.l.s4 1983009808
    %v557 = vunpack.c.0.s8 %v556
    %v558 = vlaneseq
    %v559 = vshrl.u32 %v558, 7
    %v560 = vsub.s32 %v557, %v559
    %v561 = vrot.slane %v547, %v560
    %v562 = vcombine.low %v538, %v554
    %v563 = vcombine.high %v538, %v554
    %v565 = vunpack.c.l.s4 1934713408
    %v566 = vunpack.c.0.s8 %v565
    %v567 = vlaneseq
    %v568 = vshrl.u32 %v567, 7
    %v569 = vsub.s32 %v566, %v568
    %v570 = vrot.slane %v562, %v569
    %v572 = vunpack.c.l.s4 1934713408
    %v573 = vunpack.c.0.s8 %v572
    %v574 = vlaneseq
    %v575 = vshrl.u32 %v574, 7
    %v576 = vsub.s32 %v573, %v575
    %v577 = vrot.slane %v563, %v576
    %v578 = vcombine.low %v545, %v561
    %v579 = vcombine.high %v545, %v561
    %v581 = vunpack.c.l.s4 1934713408
    %v582 = vunpack.c.0.s8 %v581
    %v583 = vlaneseq
    %v584 = vshrl.u32 %v583, 7
    %v585 = vsub.s32 %v582, %v584
    %v586 = vrot.slane %v578, %v585
    %v588 = vunpack.c.l.s4 1934713408
    %v589 = vunpack.c.0.s8 %v588
    %v590 = vlaneseq
    %v591 = vshrl.u32 %v590, 7
    %v592 = vsub.s32 %v589, %v591
    %v593 = vrot.slane %v579, %v592
    %v594 = vcombine.high %v570, 0.0
    %v595 = vcombine.high %v577, 0.0
    %v596 = vcombine.high %v586, 0.0
    %v597 = vcombine.high %v593, 0.0
    %v598 = vcombine.low %v509, %v521
    %v599 = vcombine.high %v509, %v521
    %v601 = vunpack.c.l.s4 1983009808
    %v602 = vunpack.c.0.s8 %v601
    %v603 = vlaneseq
    %v604 = vshrl.u32 %v603, 7
    %v605 = vsub.s32 %v602, %v604
    %v606 = vrot.slane %v598, %v605
    %v608 = vunpack.c.l.s4 1983009808
    %v609 = vunpack.c.0.s8 %v608
    %v610 = vlaneseq
    %v611 = vshrl.u32 %v610, 7
    %v612 = vsub.s32 %v609, %v611
    %v613 = vrot.slane %v599, %v612
    %v614 = vcombine.low %v515, %v527
    %v615 = vcombine.high %v515, %v527
    %v617 = vunpack.c.l.s4 1983009808
    %v618 = vunpack.c.0.s8 %v617
    %v619 = vlaneseq
    %v620 = vshrl.u32 %v619, 7
    %v621 = vsub.s32 %v618, %v620
    %v622 = vrot.slane %v614, %v621
    %v624 = vunpack.c.l.s4 1983009808
    %v625 = vunpack.c.0.s8 %v624
    %v626 = vlaneseq
    %v627 = vshrl.u32 %v626, 7
    %v628 = vsub.s32 %v625, %v627
    %v629 = vrot.slane %v615, %v628
    %v630 = vcombine.low %v606, %v622
    %v631 = vcombine.high %v606, %v622
    %v633 = vunpack.c.l.s4 1934713408
    %v634 = vunpack.c.0.s8 %v633
    %v635 = vlaneseq
    %v636 = vshrl.u32 %v635, 7
    %v637 = vsub.s32 %v634, %v636
    %v638 = vrot.slane %v630, %v637
    %v640 = vunpack.c.l.s4 1934713408
    %v641 = vunpack.c.0.s8 %v640
    %v642 = vlaneseq
    %v643 = vshrl.u32 %v642, 7
    %v644 = vsub.s32 %v641, %v643
    %v645 = vrot.slane %v631, %v644
    %v646 = vcombine.low %v613, %v629
    %v647 = vcombine.high %v613, %v629
    %v649 = vunpack.c.l.s4 1934713408
    %v650 = vunpack.c.0.s8 %v649
    %v651 = vlaneseq
    %v652 = vshrl.u32 %v651, 7
    %v653 = vsub.s32 %v650, %v652
    %v654 = vrot.slane %v646, %v653
    %v656 = vunpack.c.l.s4 1934713408
    %v657 = vunpack.c.0.s8 %v656
    %v658 = vlaneseq
    %v659 = vshrl.u32 %v658, 7
    %v660 = vsub.s32 %v657, %v659
    %v661 = vrot.slane %v647, %v660
    %v662 = vcombine.high %v638, 0.0
    %v663 = vcombine.high %v645, 0.0
    %v664 = vcombine.high %v654, 0.0
    %v665 = vcombine.high %v661, 0.0
    %v666 = vcombine.low %v570, %v577
    %v668 = vunpack.c.l.s4 1983009808
    %v669 = vunpack.c.0.s8 %v668
    %v670 = vlaneseq
    %v671 = vshrl.u32 %v670, 7
    %v672 = vsub.s32 %v669, %v671
    %v673 = vrot.slane %v666, %v672
    %v674 = vcombine.low %v594, %v595
    %v676 = vunpack.c.l.s4 1983009808
    %v677 = vunpack.c.0.s8 %v676
    %v678 = vlaneseq
    %v679 = vshrl.u32 %v678, 7
    %v680 = vsub.s32 %v677, %v679
    %v681 = vrot.slane %v674, %v680
    %v682 = vcombine.low %v586, %v593
    %v684 = vunpack.c.l.s4 1983009808
    %v685 = vunpack.c.0.s8 %v684
    %v686 = vlaneseq
    %v687 = vshrl.u32 %v686, 7
    %v688 = vsub.s32 %v685, %v687
    %v689 = vrot.slane %v682, %v688
    %v690 = vcombine.low %v596, %v597
    %v692 = vunpack.c.l.s4 1983009808
    %v693 = vunpack.c.0.s8 %v692
    %v694 = vlaneseq
    %v695 = vshrl.u32 %v694, 7
    %v696 = vsub.s32 %v693, %v695
    %v697 = vrot.slane %v690, %v696
    %v698 = vcombine.low %v673, %v681
    %v699 = vcombine.high %v673, %v681
    %v701 = vunpack.c.l.s4 1934713408
    %v702 = vunpack.c.0.s8 %v701
    %v703 = vlaneseq
    %v704 = vshrl.u32 %v703, 7
    %v705 = vsub.s32 %v702, %v704
    %v706 = vrot.slane %v698, %v705
    %v708 = vunpack.c.l.s4 1934713408
    %v709 = vunpack.c.0.s8 %v708
    %v710 = vlaneseq
    %v711 = vshrl.u32 %v710, 7
    %v712 = vsub.s32 %v709, %v711
    %v713 = vrot.slane %v699, %v712
    %v714 = vcombine.low %v689, %v697
    %v715 = vcombine.high %v689, %v697
    %v717 = vunpack.c.l.s4 1934713408
    %v718 = vunpack.c.0.s8 %v717
    %v719 = vlaneseq
    %v720 = vshrl.u32 %v719, 7
    %v721 = vsub.s32 %v718, %v720
    %v722 = vrot.slane %v714, %v721
    %v724 = vunpack.c.l.s4 1934713408
    %v725 = vunpack.c.0.s8 %v724
    %v726 = vlaneseq
    %v727 = vshrl.u32 %v726, 7
    %v728 = vsub.s32 %v725, %v727
    %v729 = vrot.slane %v715, %v728
    %v730 = vcombine.low %v706, %v722
    %v731 = vcombine.high %v706, %v722
    %v732 = vcombine.low %v713, %v729
    %v733 = vcombine.high %v713, %v729
    %v734 = vcombine.low %v638, %v645
    %v736 = vunpack.c.l.s4 1983009808
    %v737 = vunpack.c.0.s8 %v736
    %v738 = vlaneseq
    %v739 = vshrl.u32 %v738, 7
    %v740 = vsub.s32 %v737, %v739
    %v741 = vrot.slane %v734, %v740
    %v742 = vcombine.low %v662, %v663
    %v744 = vunpack.c.l.s4 1983009808
    %v745 = vunpack.c.0.s8 %v744
    %v746 = vlaneseq
    %v747 = vshrl.u32 %v746, 7
    %v748 = vsub.s32 %v745, %v747
    %v749 = vrot.slane %v742, %v748
    %v750 = vcombine.low %v654, %v661
    %v752 = vunpack.c.l.s4 1983009808
    %v753 = vunpack.c.0.s8 %v752
    %v754 = vlaneseq
    %v755 = vshrl.u32 %v754, 7
    %v756 = vsub.s32 %v753, %v755
    %v757 = vrot.slane %v750, %v756
    %v758 = vcombine.low %v664, %v665
    %v760 = vunpack.c.l.s4 1983009808
    %v761 = vunpack.c.0.s8 %v760
    %v762 = vlaneseq
    %v763 = vshrl.u32 %v762, 7
    %v764 = vsub.s32 %v761, %v763
    %v765 = vrot.slane %v758, %v764
    %v766 = vcombine.low %v741, %v749
    %v767 = vcombine.high %v741, %v749
    %v769 = vunpack.c.l.s4 1934713408
    %v770 = vunpack.c.0.s8 %v769
    %v771 = vlaneseq
    %v772 = vshrl.u32 %v771, 7
    %v773 = vsub.s32 %v770, %v772
    %v774 = vrot.slane %v766, %v773
    %v776 = vunpack.c.l.s4 1934713408
    %v777 = vunpack.c.0.s8 %v776
    %v778 = vlaneseq
    %v779 = vshrl.u32 %v778, 7
    %v780 = vsub.s32 %v777, %v779
    %v781 = vrot.slane %v767, %v780
    %v782 = vcombine.low %v757, %v765
    %v783 = vcombine.high %v757, %v765
    %v785 = vunpack.c.l.s4 1934713408
    %v786 = vunpack.c.0.s8 %v785
    %v787 = vlaneseq
    %v788 = vshrl.u32 %v787, 7
    %v789 = vsub.s32 %v786, %v788
    %v790 = vrot.slane %v782, %v789
    %v792 = vunpack.c.l.s4 1934713408
    %v793 = vunpack.c.0.s8 %v792
    %v794 = vlaneseq
    %v795 = vshrl.u32 %v794, 7
    %v796 = vsub.s32 %v793, %v795
    %v797 = vrot.slane %v783, %v796
    %v798 = vcombine.low %v774, %v790
    %v799 = vcombine.high %v774, %v790
    %v800 = vcombine.low %v781, %v797
    %v801 = vcombine.high %v781, %v797
    %v802 = vpack.c.bf16 %v730, %v730
    %v803 = vpack.c.bf16 %v731, %v731
    %v804 = vpack.c.bf16 %v732, %v732
    %v805 = vpack.c.bf16 %v733, %v733
    %v806 = vpack.c.bf16 %v798, %v798
    %v807 = vpack.c.bf16 %v799, %v799
    %v808 = vpack.c.bf16 %v800, %v800
    %v809 = vpack.c.bf16 %v801, %v801
    %812 = vrot.lane.b32.xlu0 %v443, 120
    %v813 = vpop.permute.xlu0 %812
    %814 = vrot.lane.b32.xlu0 %v446, 120
    %v815 = vpop.permute.xlu0 %814
    %818 = vrot.lane.b32.xlu0 %v443, 112
    %v819 = vpop.permute.xlu0 %818
    %820 = vrot.lane.b32.xlu0 %v446, 112
    %v821 = vpop.permute.xlu0 %820
    %824 = vrot.lane.b32.xlu0 %v443, 104
    %v825 = vpop.permute.xlu0 %824
    %826 = vrot.lane.b32.xlu0 %v446, 104
    %v827 = vpop.permute.xlu0 %826
    %v830 = vcombine.low %v443, %v819
    %v831 = vcombine.high %v443, %v819
    %v833 = vunpack.c.l.s4 1983009808
    %v834 = vunpack.c.0.s8 %v833
    %v835 = vlaneseq
    %v836 = vshrl.u32 %v835, 7
    %v837 = vsub.s32 %v834, %v836
    %v838 = vrot.slane %v830, %v837
    %v840 = vunpack.c.l.s4 1983009808
    %v841 = vunpack.c.0.s8 %v840
    %v842 = vlaneseq
    %v843 = vshrl.u32 %v842, 7
    %v844 = vsub.s32 %v841, %v843
    %v845 = vrot.slane %v831, %v844
    %v846 = vcombine.low %v813, %v825
    %v847 = vcombine.high %v813, %v825
    %v849 = vunpack.c.l.s4 1983009808
    %v850 = vunpack.c.0.s8 %v849
    %v851 = vlaneseq
    %v852 = vshrl.u32 %v851, 7
    %v853 = vsub.s32 %v850, %v852
    %v854 = vrot.slane %v846, %v853
    %v856 = vunpack.c.l.s4 1983009808
    %v857 = vunpack.c.0.s8 %v856
    %v858 = vlaneseq
    %v859 = vshrl.u32 %v858, 7
    %v860 = vsub.s32 %v857, %v859
    %v861 = vrot.slane %v847, %v860
    %v862 = vcombine.low %v838, %v854
    %v863 = vcombine.high %v838, %v854
    %v865 = vunpack.c.l.s4 1934713408
    %v866 = vunpack.c.0.s8 %v865
    %v867 = vlaneseq
    %v868 = vshrl.u32 %v867, 7
    %v869 = vsub.s32 %v866, %v868
    %v870 = vrot.slane %v862, %v869
    %v872 = vunpack.c.l.s4 1934713408
    %v873 = vunpack.c.0.s8 %v872
    %v874 = vlaneseq
    %v875 = vshrl.u32 %v874, 7
    %v876 = vsub.s32 %v873, %v875
    %v877 = vrot.slane %v863, %v876
    %v878 = vcombine.low %v845, %v861
    %v879 = vcombine.high %v845, %v861
    %v881 = vunpack.c.l.s4 1934713408
    %v882 = vunpack.c.0.s8 %v881
    %v883 = vlaneseq
    %v884 = vshrl.u32 %v883, 7
    %v885 = vsub.s32 %v882, %v884
    %v886 = vrot.slane %v878, %v885
    %v888 = vunpack.c.l.s4 1934713408
    %v889 = vunpack.c.0.s8 %v888
    %v890 = vlaneseq
    %v891 = vshrl.u32 %v890, 7
    %v892 = vsub.s32 %v889, %v891
    %v893 = vrot.slane %v879, %v892
    %v894 = vcombine.high %v870, 0.0
    %v895 = vcombine.high %v877, 0.0
    %v896 = vcombine.high %v886, 0.0
    %v897 = vcombine.high %v893, 0.0
    %v898 = vcombine.low %v446, %v821
    %v899 = vcombine.high %v446, %v821
    %v901 = vunpack.c.l.s4 1983009808
    %v902 = vunpack.c.0.s8 %v901
    %v903 = vlaneseq
    %v904 = vshrl.u32 %v903, 7
    %v905 = vsub.s32 %v902, %v904
    %v906 = vrot.slane %v898, %v905
    %v908 = vunpack.c.l.s4 1983009808
    %v909 = vunpack.c.0.s8 %v908
    %v910 = vlaneseq
    %v911 = vshrl.u32 %v910, 7
    %v912 = vsub.s32 %v909, %v911
    %v913 = vrot.slane %v899, %v912
    %v914 = vcombine.low %v815, %v827
    %v915 = vcombine.high %v815, %v827
    %v917 = vunpack.c.l.s4 1983009808
    %v918 = vunpack.c.0.s8 %v917
    %v919 = vlaneseq
    %v920 = vshrl.u32 %v919, 7
    %v921 = vsub.s32 %v918, %v920
    %v922 = vrot.slane %v914, %v921
    %v924 = vunpack.c.l.s4 1983009808
    %v925 = vunpack.c.0.s8 %v924
    %v926 = vlaneseq
    %v927 = vshrl.u32 %v926, 7
    %v928 = vsub.s32 %v925, %v927
    %v929 = vrot.slane %v915, %v928
    %v930 = vcombine.low %v906, %v922
    %v931 = vcombine.high %v906, %v922
    %v933 = vunpack.c.l.s4 1934713408
    %v934 = vunpack.c.0.s8 %v933
    %v935 = vlaneseq
    %v936 = vshrl.u32 %v935, 7
    %v937 = vsub.s32 %v934, %v936
    %v938 = vrot.slane %v930, %v937
    %v940 = vunpack.c.l.s4 1934713408
    %v941 = vunpack.c.0.s8 %v940
    %v942 = vlaneseq
    %v943 = vshrl.u32 %v942, 7
    %v944 = vsub.s32 %v941, %v943
    %v945 = vrot.slane %v931, %v944
    %v946 = vcombine.low %v913, %v929
    %v947 = vcombine.high %v913, %v929
    %v949 = vunpack.c.l.s4 1934713408
    %v950 = vunpack.c.0.s8 %v949
    %v951 = vlaneseq
    %v952 = vshrl.u32 %v951, 7
    %v953 = vsub.s32 %v950, %v952
    %v954 = vrot.slane %v946, %v953
    %v956 = vunpack.c.l.s4 1934713408
    %v957 = vunpack.c.0.s8 %v956
    %v958 = vlaneseq
    %v959 = vshrl.u32 %v958, 7
    %v960 = vsub.s32 %v957, %v959
    %v961 = vrot.slane %v947, %v960
    %v962 = vcombine.high %v938, 0.0
    %v963 = vcombine.high %v945, 0.0
    %v964 = vcombine.high %v954, 0.0
    %v965 = vcombine.high %v961, 0.0
    %v966 = vcombine.low %v870, %v877
    %v968 = vunpack.c.l.s4 1983009808
    %v969 = vunpack.c.0.s8 %v968
    %v970 = vlaneseq
    %v971 = vshrl.u32 %v970, 7
    %v972 = vsub.s32 %v969, %v971
    %v973 = vrot.slane %v966, %v972
    %v974 = vcombine.low %v894, %v895
    %v976 = vunpack.c.l.s4 1983009808
    %v977 = vunpack.c.0.s8 %v976
    %v978 = vlaneseq
    %v979 = vshrl.u32 %v978, 7
    %v980 = vsub.s32 %v977, %v979
    %v981 = vrot.slane %v974, %v980
    %v982 = vcombine.low %v886, %v893
    %v984 = vunpack.c.l.s4 1983009808
    %v985 = vunpack.c.0.s8 %v984
    %v986 = vlaneseq
    %v987 = vshrl.u32 %v986, 7
    %v988 = vsub.s32 %v985, %v987
    %v989 = vrot.slane %v982, %v988
    %v990 = vcombine.low %v896, %v897
    %v992 = vunpack.c.l.s4 1983009808
    %v993 = vunpack.c.0.s8 %v992
    %v994 = vlaneseq
    %v995 = vshrl.u32 %v994, 7
    %v996 = vsub.s32 %v993, %v995
    %v997 = vrot.slane %v990, %v996
    %v998 = vcombine.low %v973, %v981
    %v999 = vcombine.high %v973, %v981
    %v1001 = vunpack.c.l.s4 1934713408
    %v1002 = vunpack.c.0.s8 %v1001
    %v1003 = vlaneseq
    %v1004 = vshrl.u32 %v1003, 7
    %v1005 = vsub.s32 %v1002, %v1004
    %v1006 = vrot.slane %v998, %v1005
    %v1008 = vunpack.c.l.s4 1934713408
    %v1009 = vunpack.c.0.s8 %v1008
    %v1010 = vlaneseq
    %v1011 = vshrl.u32 %v1010, 7
    %v1012 = vsub.s32 %v1009, %v1011
    %v1013 = vrot.slane %v999, %v1012
    %v1014 = vcombine.low %v989, %v997
    %v1015 = vcombine.high %v989, %v997
    %v1017 = vunpack.c.l.s4 1934713408
    %v1018 = vunpack.c.0.s8 %v1017
    %v1019 = vlaneseq
    %v1020 = vshrl.u32 %v1019, 7
    %v1021 = vsub.s32 %v1018, %v1020
    %v1022 = vrot.slane %v1014, %v1021
    %v1024 = vunpack.c.l.s4 1934713408
    %v1025 = vunpack.c.0.s8 %v1024
    %v1026 = vlaneseq
    %v1027 = vshrl.u32 %v1026, 7
    %v1028 = vsub.s32 %v1025, %v1027
    %v1029 = vrot.slane %v1015, %v1028
    %v1030 = vcombine.low %v1006, %v1022
    %v1031 = vcombine.high %v1006, %v1022
    %v1032 = vcombine.low %v1013, %v1029
    %v1033 = vcombine.high %v1013, %v1029
    %v1034 = vcombine.low %v938, %v945
    %v1036 = vunpack.c.l.s4 1983009808
    %v1037 = vunpack.c.0.s8 %v1036
    %v1038 = vlaneseq
    %v1039 = vshrl.u32 %v1038, 7
    %v1040 = vsub.s32 %v1037, %v1039
    %v1041 = vrot.slane %v1034, %v1040
    %v1042 = vcombine.low %v962, %v963
    %v1044 = vunpack.c.l.s4 1983009808
    %v1045 = vunpack.c.0.s8 %v1044
    %v1046 = vlaneseq
    %v1047 = vshrl.u32 %v1046, 7
    %v1048 = vsub.s32 %v1045, %v1047
    %v1049 = vrot.slane %v1042, %v1048
    %v1050 = vcombine.low %v954, %v961
    %v1052 = vunpack.c.l.s4 1983009808
    %v1053 = vunpack.c.0.s8 %v1052
    %v1054 = vlaneseq
    %v1055 = vshrl.u32 %v1054, 7
    %v1056 = vsub.s32 %v1053, %v1055
    %v1057 = vrot.slane %v1050, %v1056
    %v1058 = vcombine.low %v964, %v965
    %v1060 = vunpack.c.l.s4 1983009808
    %v1061 = vunpack.c.0.s8 %v1060
    %v1062 = vlaneseq
    %v1063 = vshrl.u32 %v1062, 7
    %v1064 = vsub.s32 %v1061, %v1063
    %v1065 = vrot.slane %v1058, %v1064
    %v1066 = vcombine.low %v1041, %v1049
    %v1067 = vcombine.high %v1041, %v1049
    %v1069 = vunpack.c.l.s4 1934713408
    %v1070 = vunpack.c.0.s8 %v1069
    %v1071 = vlaneseq
    %v1072 = vshrl.u32 %v1071, 7
    %v1073 = vsub.s32 %v1070, %v1072
    %v1074 = vrot.slane %v1066, %v1073
    %v1076 = vunpack.c.l.s4 1934713408
    %v1077 = vunpack.c.0.s8 %v1076
    %v1078 = vlaneseq
    %v1079 = vshrl.u32 %v1078, 7
    %v1080 = vsub.s32 %v1077, %v1079
    %v1081 = vrot.slane %v1067, %v1080
    %v1082 = vcombine.low %v1057, %v1065
    %v1083 = vcombine.high %v1057, %v1065
    %v1085 = vunpack.c.l.s4 1934713408
    %v1086 = vunpack.c.0.s8 %v1085
    %v1087 = vlaneseq
    %v1088 = vshrl.u32 %v1087, 7
    %v1089 = vsub.s32 %v1086, %v1088
    %v1090 = vrot.slane %v1082, %v1089
    %v1092 = vunpack.c.l.s4 1934713408
    %v1093 = vunpack.c.0.s8 %v1092
    %v1094 = vlaneseq
    %v1095 = vshrl.u32 %v1094, 7
    %v1096 = vsub.s32 %v1093, %v1095
    %v1097 = vrot.slane %v1083, %v1096
    %v1098 = vcombine.low %v1074, %v1090
    %v1099 = vcombine.high %v1074, %v1090
    %v1100 = vcombine.low %v1081, %v1097
    %v1101 = vcombine.high %v1081, %v1097
    %v1102 = vpack.c.bf16 %v1030, %v1030
    %v1103 = vpack.c.bf16 %v1031, %v1031
    %v1104 = vpack.c.bf16 %v1032, %v1032
    %v1105 = vpack.c.bf16 %v1033, %v1033
    %v1106 = vpack.c.bf16 %v1098, %v1098
    %v1107 = vpack.c.bf16 %v1099, %v1099
    %v1108 = vpack.c.bf16 %v1100, %v1100
    %v1109 = vpack.c.bf16 %v1101, %v1101
    %1112 = vrot.lane.b32.xlu0 %v502, 120
    %v1113 = vpop.permute.xlu0 %1112
    %1114 = vrot.lane.b32.xlu0 %v505, 120
    %v1115 = vpop.permute.xlu0 %1114
    %1118 = vrot.lane.b32.xlu0 %v502, 112
    %v1119 = vpop.permute.xlu0 %1118
    %1120 = vrot.lane.b32.xlu0 %v505, 112
    %v1121 = vpop.permute.xlu0 %1120
    %1124 = vrot.lane.b32.xlu0 %v502, 104
    %v1125 = vpop.permute.xlu0 %1124
    %1126 = vrot.lane.b32.xlu0 %v505, 104
    %v1127 = vpop.permute.xlu0 %1126
    %v1130 = vcombine.low %v502, %v1119
    %v1131 = vcombine.high %v502, %v1119
    %v1133 = vunpack.c.l.s4 1983009808
    %v1134 = vunpack.c.0.s8 %v1133
    %v1135 = vlaneseq
    %v1136 = vshrl.u32 %v1135, 7
    %v1137 = vsub.s32 %v1134, %v1136
    %v1138 = vrot.slane %v1130, %v1137
    %v1140 = vunpack.c.l.s4 1983009808
    %v1141 = vunpack.c.0.s8 %v1140
    %v1142 = vlaneseq
    %v1143 = vshrl.u32 %v1142, 7
    %v1144 = vsub.s32 %v1141, %v1143
    %v1145 = vrot.slane %v1131, %v1144
    %v1146 = vcombine.low %v1113, %v1125
    %v1147 = vcombine.high %v1113, %v1125
    %v1149 = vunpack.c.l.s4 1983009808
    %v1150 = vunpack.c.0.s8 %v1149
    %v1151 = vlaneseq
    %v1152 = vshrl.u32 %v1151, 7
    %v1153 = vsub.s32 %v1150, %v1152
    %v1154 = vrot.slane %v1146, %v1153
    %v1156 = vunpack.c.l.s4 1983009808
    %v1157 = vunpack.c.0.s8 %v1156
    %v1158 = vlaneseq
    %v1159 = vshrl.u32 %v1158, 7
    %v1160 = vsub.s32 %v1157, %v1159
    %v1161 = vrot.slane %v1147, %v1160
    %v1162 = vcombine.low %v1138, %v1154
    %v1163 = vcombine.high %v1138, %v1154
    %v1165 = vunpack.c.l.s4 1934713408
    %v1166 = vunpack.c.0.s8 %v1165
    %v1167 = vlaneseq
    %v1168 = vshrl.u32 %v1167, 7
    %v1169 = vsub.s32 %v1166, %v1168
    %v1170 = vrot.slane %v1162, %v1169
    %v1172 = vunpack.c.l.s4 1934713408
    %v1173 = vunpack.c.0.s8 %v1172
    %v1174 = vlaneseq
    %v1175 = vshrl.u32 %v1174, 7
    %v1176 = vsub.s32 %v1173, %v1175
    %v1177 = vrot.slane %v1163, %v1176
    %v1178 = vcombine.low %v1145, %v1161
    %v1179 = vcombine.high %v1145, %v1161
    %v1181 = vunpack.c.l.s4 1934713408
    %v1182 = vunpack.c.0.s8 %v1181
    %v1183 = vlaneseq
    %v1184 = vshrl.u32 %v1183, 7
    %v1185 = vsub.s32 %v1182, %v1184
    %v1186 = vrot.slane %v1178, %v1185
    %v1188 = vunpack.c.l.s4 1934713408
    %v1189 = vunpack.c.0.s8 %v1188
    %v1190 = vlaneseq
    %v1191 = vshrl.u32 %v1190, 7
    %v1192 = vsub.s32 %v1189, %v1191
    %v1193 = vrot.slane %v1179, %v1192
    %v1194 = vcombine.high %v1170, 0.0
    %v1195 = vcombine.high %v1177, 0.0
    %v1196 = vcombine.high %v1186, 0.0
    %v1197 = vcombine.high %v1193, 0.0
    %v1198 = vcombine.low %v505, %v1121
    %v1199 = vcombine.high %v505, %v1121
    %v1201 = vunpack.c.l.s4 1983009808
    %v1202 = vunpack.c.0.s8 %v1201
    %v1203 = vlaneseq
    %v1204 = vshrl.u32 %v1203, 7
    %v1205 = vsub.s32 %v1202, %v1204
    %v1206 = vrot.slane %v1198, %v1205
    %v1208 = vunpack.c.l.s4 1983009808
    %v1209 = vunpack.c.0.s8 %v1208
    %v1210 = vlaneseq
    %v1211 = vshrl.u32 %v1210, 7
    %v1212 = vsub.s32 %v1209, %v1211
    %v1213 = vrot.slane %v1199, %v1212
    %v1214 = vcombine.low %v1115, %v1127
    %v1215 = vcombine.high %v1115, %v1127
    %v1217 = vunpack.c.l.s4 1983009808
    %v1218 = vunpack.c.0.s8 %v1217
    %v1219 = vlaneseq
    %v1220 = vshrl.u32 %v1219, 7
    %v1221 = vsub.s32 %v1218, %v1220
    %v1222 = vrot.slane %v1214, %v1221
    %v1224 = vunpack.c.l.s4 1983009808
    %v1225 = vunpack.c.0.s8 %v1224
    %v1226 = vlaneseq
    %v1227 = vshrl.u32 %v1226, 7
    %v1228 = vsub.s32 %v1225, %v1227
    %v1229 = vrot.slane %v1215, %v1228
    %v1230 = vcombine.low %v1206, %v1222
    %v1231 = vcombine.high %v1206, %v1222
    %v1233 = vunpack.c.l.s4 1934713408
    %v1234 = vunpack.c.0.s8 %v1233
    %v1235 = vlaneseq
    %v1236 = vshrl.u32 %v1235, 7
    %v1237 = vsub.s32 %v1234, %v1236
    %v1238 = vrot.slane %v1230, %v1237
    %v1240 = vunpack.c.l.s4 1934713408
    %v1241 = vunpack.c.0.s8 %v1240
    %v1242 = vlaneseq
    %v1243 = vshrl.u32 %v1242, 7
    %v1244 = vsub.s32 %v1241, %v1243
    %v1245 = vrot.slane %v1231, %v1244
    %v1246 = vcombine.low %v1213, %v1229
    %v1247 = vcombine.high %v1213, %v1229
    %v1249 = vunpack.c.l.s4 1934713408
    %v1250 = vunpack.c.0.s8 %v1249
    %v1251 = vlaneseq
    %v1252 = vshrl.u32 %v1251, 7
    %v1253 = vsub.s32 %v1250, %v1252
    %v1254 = vrot.slane %v1246, %v1253
    %v1256 = vunpack.c.l.s4 1934713408
    %v1257 = vunpack.c.0.s8 %v1256
    %v1258 = vlaneseq
    %v1259 = vshrl.u32 %v1258, 7
    %v1260 = vsub.s32 %v1257, %v1259
    %v1261 = vrot.slane %v1247, %v1260
    %v1262 = vcombine.high %v1238, 0.0
    %v1263 = vcombine.high %v1245, 0.0
    %v1264 = vcombine.high %v1254, 0.0
    %v1265 = vcombine.high %v1261, 0.0
    %v1266 = vcombine.low %v1170, %v1177
    %v1268 = vunpack.c.l.s4 1983009808
    %v1269 = vunpack.c.0.s8 %v1268
    %v1270 = vlaneseq
    %v1271 = vshrl.u32 %v1270, 7
    %v1272 = vsub.s32 %v1269, %v1271
    %v1273 = vrot.slane %v1266, %v1272
    %v1274 = vcombine.low %v1194, %v1195
    %v1276 = vunpack.c.l.s4 1983009808
    %v1277 = vunpack.c.0.s8 %v1276
    %v1278 = vlaneseq
    %v1279 = vshrl.u32 %v1278, 7
    %v1280 = vsub.s32 %v1277, %v1279
    %v1281 = vrot.slane %v1274, %v1280
    %v1282 = vcombine.low %v1186, %v1193
    %v1284 = vunpack.c.l.s4 1983009808
    %v1285 = vunpack.c.0.s8 %v1284
    %v1286 = vlaneseq
    %v1287 = vshrl.u32 %v1286, 7
    %v1288 = vsub.s32 %v1285, %v1287
    %v1289 = vrot.slane %v1282, %v1288
    %v1290 = vcombine.low %v1196, %v1197
    %v1292 = vunpack.c.l.s4 1983009808
    %v1293 = vunpack.c.0.s8 %v1292
    %v1294 = vlaneseq
    %v1295 = vshrl.u32 %v1294, 7
    %v1296 = vsub.s32 %v1293, %v1295
    %v1297 = vrot.slane %v1290, %v1296
    %v1298 = vcombine.low %v1273, %v1281
    %v1299 = vcombine.high %v1273, %v1281
    %v1301 = vunpack.c.l.s4 1934713408
    %v1302 = vunpack.c.0.s8 %v1301
    %v1303 = vlaneseq
    %v1304 = vshrl.u32 %v1303, 7
    %v1305 = vsub.s32 %v1302, %v1304
    %v1306 = vrot.slane %v1298, %v1305
    %v1308 = vunpack.c.l.s4 1934713408
    %v1309 = vunpack.c.0.s8 %v1308
    %v1310 = vlaneseq
    %v1311 = vshrl.u32 %v1310, 7
    %v1312 = vsub.s32 %v1309, %v1311
    %v1313 = vrot.slane %v1299, %v1312
    %v1314 = vcombine.low %v1289, %v1297
    %v1315 = vcombine.high %v1289, %v1297
    %v1317 = vunpack.c.l.s4 1934713408
    %v1318 = vunpack.c.0.s8 %v1317
    %v1319 = vlaneseq
    %v1320 = vshrl.u32 %v1319, 7
    %v1321 = vsub.s32 %v1318, %v1320
    %v1322 = vrot.slane %v1314, %v1321
    %v1324 = vunpack.c.l.s4 1934713408
    %v1325 = vunpack.c.0.s8 %v1324
    %v1326 = vlaneseq
    %v1327 = vshrl.u32 %v1326, 7
    %v1328 = vsub.s32 %v1325, %v1327
    %v1329 = vrot.slane %v1315, %v1328
    %v1330 = vcombine.low %v1306, %v1322
    %v1331 = vcombine.high %v1306, %v1322
    %v1332 = vcombine.low %v1313, %v1329
    %v1333 = vcombine.high %v1313, %v1329
    %v1334 = vcombine.low %v1238, %v1245
    %v1336 = vunpack.c.l.s4 1983009808
    %v1337 = vunpack.c.0.s8 %v1336
    %v1338 = vlaneseq
    %v1339 = vshrl.u32 %v1338, 7
    %v1340 = vsub.s32 %v1337, %v1339
    %v1341 = vrot.slane %v1334, %v1340
    %v1342 = vcombine.low %v1262, %v1263
    %v1344 = vunpack.c.l.s4 1983009808
    %v1345 = vunpack.c.0.s8 %v1344
    %v1346 = vlaneseq
    %v1347 = vshrl.u32 %v1346, 7
    %v1348 = vsub.s32 %v1345, %v1347
    %v1349 = vrot.slane %v1342, %v1348
    %v1350 = vcombine.low %v1254, %v1261
    %v1352 = vunpack.c.l.s4 1983009808
    %v1353 = vunpack.c.0.s8 %v1352
    %v1354 = vlaneseq
    %v1355 = vshrl.u32 %v1354, 7
    %v1356 = vsub.s32 %v1353, %v1355
    %v1357 = vrot.slane %v1350, %v1356
    %v1358 = vcombine.low %v1264, %v1265
    %v1360 = vunpack.c.l.s4 1983009808
    %v1361 = vunpack.c.0.s8 %v1360
    %v1362 = vlaneseq
    %v1363 = vshrl.u32 %v1362, 7
    %v1364 = vsub.s32 %v1361, %v1363
    %v1365 = vrot.slane %v1358, %v1364
    %v1366 = vcombine.low %v1341, %v1349
    %v1367 = vcombine.high %v1341, %v1349
    %v1369 = vunpack.c.l.s4 1934713408
    %v1370 = vunpack.c.0.s8 %v1369
    %v1371 = vlaneseq
    %v1372 = vshrl.u32 %v1371, 7
    %v1373 = vsub.s32 %v1370, %v1372
    %v1374 = vrot.slane %v1366, %v1373
    %v1376 = vunpack.c.l.s4 1934713408
    %v1377 = vunpack.c.0.s8 %v1376
    %v1378 = vlaneseq
    %v1379 = vshrl.u32 %v1378, 7
    %v1380 = vsub.s32 %v1377, %v1379
    %v1381 = vrot.slane %v1367, %v1380
    %v1382 = vcombine.low %v1357, %v1365
    %v1383 = vcombine.high %v1357, %v1365
    %v1385 = vunpack.c.l.s4 1934713408
    %v1386 = vunpack.c.0.s8 %v1385
    %v1387 = vlaneseq
    %v1388 = vshrl.u32 %v1387, 7
    %v1389 = vsub.s32 %v1386, %v1388
    %v1390 = vrot.slane %v1382, %v1389
    %v1392 = vunpack.c.l.s4 1934713408
    %v1393 = vunpack.c.0.s8 %v1392
    %v1394 = vlaneseq
    %v1395 = vshrl.u32 %v1394, 7
    %v1396 = vsub.s32 %v1393, %v1395
    %v1397 = vrot.slane %v1383, %v1396
    %v1398 = vcombine.low %v1374, %v1390
    %v1399 = vcombine.high %v1374, %v1390
    %v1400 = vcombine.low %v1381, %v1397
    %v1401 = vcombine.high %v1381, %v1397
    %v1402 = vpack.c.bf16 %v1330, %v1330
    %v1403 = vpack.c.bf16 %v1331, %v1331
    %v1404 = vpack.c.bf16 %v1332, %v1332
    %v1405 = vpack.c.bf16 %v1333, %v1333
    %v1406 = vpack.c.bf16 %v1398, %v1398
    %v1407 = vpack.c.bf16 %v1399, %v1399
    %v1408 = vpack.c.bf16 %v1400, %v1400
    %v1409 = vpack.c.bf16 %v1401, %v1401
    %vm1410 = vcmask 64512
    %v1412 = vsel %vm1410, %v802, 0
    %v1415 = vsel %vm1410, %v1102, 0
    %1417 = vmatprep.subr.bf16.mxu0 0
    %1418 = vmatpush1.bf16.xpose.msra.mxu0 %v1415
    %1419 = vmatprep.subr.bf16.mxu0 0
    %1420 = vmatpush1.bf16.xpose.msra.mxu0 0
    %1421 = vmatprep.subr.bf16.mxu0 0
    %1422 = vmatpush1.bf16.xpose.msra.mxu0 0
    %1423 = vmatprep.subr.bf16.mxu0 0
    %1424 = vmatpush1.bf16.xpose.msra.mxu0 0
    %1425 = vmatprep.subr.bf16.mxu0 0
    %1426 = vmatpush1.bf16.xpose.msra.mxu0 0
    %1427 = vmatprep.subr.bf16.mxu0 0
    %1428 = vmatpush1.bf16.xpose.msra.mxu0 0
    %1429 = vmatprep.subr.bf16.mxu0 0
    %1430 = vmatpush1.bf16.xpose.msra.mxu0 0
    %1431 = vmatprep.subr.bf16.mxu0 0
    %1432 = vmatpush1.bf16.xpose.msra.mxu0 0
    %1433 = vmatprep.subr.bf16.mxu0 0
    %1434 = vmatpush1.bf16.xpose.msra.mxu0 0
    %1435 = vmatprep.subr.bf16.mxu0 0
    %1436 = vmatpush1.bf16.xpose.msra.mxu0 0
    %1437 = vmatprep.subr.bf16.mxu0 0
    %1438 = vmatpush1.bf16.xpose.msra.mxu0 0
    %1439 = vmatprep.subr.bf16.mxu0 0
    %1440 = vmatpush1.bf16.xpose.msra.mxu0 0
    %1441 = vmatprep.subr.bf16.mxu0 0
    %1442 = vmatpush1.bf16.xpose.msra.mxu0 0
    %1443 = vmatprep.subr.bf16.mxu0 0
    %1444 = vmatpush1.bf16.xpose.msra.mxu0 0
    %1445 = vmatprep.subr.bf16.mxu0 0
    %1446 = vmatpush1.bf16.xpose.msra.mxu0 0
    %1447 = vmatprep.subr.bf16.mxu0 0
    %1448 = vmatpush1.bf16.xpose.msra.mxu0 0
    %1449 = vmatprep.mubr.bf16.mxu0 0
    %1450 = vmatmul.mubr.bf16.gmra.mrb[0].mxu0 %v1412
    %v1451 = vpop.f32.mrb[0].mxu0
    %v1452 = vadd.f32 %v304, %v1451
    %v1453 = vpop.f32.mrb[0].mxu0
    %v1454 = vpop.f32.mrb[0].mxu0
    %v1455 = vpop.f32.mrb[0].mxu0
    %1456 = vdwg.mxu0
    %v1458 = vsel %vm1410, %v803, 0
    %v1461 = vsel %vm1410, %v1103, 0
    %1463 = vmatprep.subr.bf16.mxu0 0
    %1464 = vmatpush1.bf16.xpose.msra.mxu0 %v1461
    %1465 = vmatprep.subr.bf16.mxu0 0
    %1466 = vmatpush1.bf16.xpose.msra.mxu0 0
    %1467 = vmatprep.subr.bf16.mxu0 0
    %1468 = vmatpush1.bf16.xpose.msra.mxu0 0
    %1469 = vmatprep.subr.bf16.mxu0 0
    %1470 = vmatpush1.bf16.xpose.msra.mxu0 0
    %1471 = vmatprep.subr.bf16.mxu0 0
    %1472 = vmatpush1.bf16.xpose.msra.mxu0 0
    %1473 = vmatprep.subr.bf16.mxu0 0
    %1474 = vmatpush1.bf16.xpose.msra.mxu0 0
    %1475 = vmatprep.subr.bf16.mxu0 0
    %1476 = vmatpush1.bf16.xpose.msra.mxu0 0
    %1477 = vmatprep.subr.bf16.mxu0 0
    %1478 = vmatpush1.bf16.xpose.msra.mxu0 0
    %1479 = vmatprep.subr.bf16.mxu0 0
    %1480 = vmatpush1.bf16.xpose.msra.mxu0 0
    %1481 = vmatprep.subr.bf16.mxu0 0
    %1482 = vmatpush1.bf16.xpose.msra.mxu0 0
    %1483 = vmatprep.subr.bf16.mxu0 0
    %1484 = vmatpush1.bf16.xpose.msra.mxu0 0
    %1485 = vmatprep.subr.bf16.mxu0 0
    %1486 = vmatpush1.bf16.xpose.msra.mxu0 0
    %1487 = vmatprep.subr.bf16.mxu0 0
    %1488 = vmatpush1.bf16.xpose.msra.mxu0 0
    %1489 = vmatprep.subr.bf16.mxu0 0
    %1490 = vmatpush1.bf16.xpose.msra.mxu0 0
    %1491 = vmatprep.subr.bf16.mxu0 0
    %1492 = vmatpush1.bf16.xpose.msra.mxu0 0
    %1493 = vmatprep.subr.bf16.mxu0 0
    %1494 = vmatpush1.bf16.xpose.msra.mxu0 0
    %1495 = vmatprep.mubr.bf16.mxu0 0
    %1496 = vmatmul.mubr.bf16.gmra.mrb[0].mxu0 %v1458
    %v1497 = vpop.f32.mrb[0].mxu0
    %v1498 = vadd.f32 %v304, %v1497
    %v1499 = vpop.f32.mrb[0].mxu0
    %v1500 = vpop.f32.mrb[0].mxu0
    %v1501 = vpop.f32.mrb[0].mxu0
    %1502 = vdwg.mxu0
    %v1504 = vsel %vm1410, %v804, 0
    %v1507 = vsel %vm1410, %v1104, 0
    %1509 = vmatprep.subr.bf16.mxu0 0
    %1510 = vmatpush1.bf16.xpose.msra.mxu0 %v1507
    %1511 = vmatprep.subr.bf16.mxu0 0
    %1512 = vmatpush1.bf16.xpose.msra.mxu0 0
    %1513 = vmatprep.subr.bf16.mxu0 0
    %1514 = vmatpush1.bf16.xpose.msra.mxu0 0
    %1515 = vmatprep.subr.bf16.mxu0 0
    %1516 = vmatpush1.bf16.xpose.msra.mxu0 0
    %1517 = vmatprep.subr.bf16.mxu0 0
    %1518 = vmatpush1.bf16.xpose.msra.mxu0 0
    %1519 = vmatprep.subr.bf16.mxu0 0
    %1520 = vmatpush1.bf16.xpose.msra.mxu0 0
    %1521 = vmatprep.subr.bf16.mxu0 0
    %1522 = vmatpush1.bf16.xpose.msra.mxu0 0
    %1523 = vmatprep.subr.bf16.mxu0 0
    %1524 = vmatpush1.bf16.xpose.msra.mxu0 0
    %1525 = vmatprep.subr.bf16.mxu0 0
    %1526 = vmatpush1.bf16.xpose.msra.mxu0 0
    %1527 = vmatprep.subr.bf16.mxu0 0
    %1528 = vmatpush1.bf16.xpose.msra.mxu0 0
    %1529 = vmatprep.subr.bf16.mxu0 0
    %1530 = vmatpush1.bf16.xpose.msra.mxu0 0
    %1531 = vmatprep.subr.bf16.mxu0 0
    %1532 = vmatpush1.bf16.xpose.msra.mxu0 0
    %1533 = vmatprep.subr.bf16.mxu0 0
    %1534 = vmatpush1.bf16.xpose.msra.mxu0 0
    %1535 = vmatprep.subr.bf16.mxu0 0
    %1536 = vmatpush1.bf16.xpose.msra.mxu0 0
    %1537 = vmatprep.subr.bf16.mxu0 0
    %1538 = vmatpush1.bf16.xpose.msra.mxu0 0
    %1539 = vmatprep.subr.bf16.mxu0 0
    %1540 = vmatpush1.bf16.xpose.msra.mxu0 0
    %1541 = vmatprep.mubr.bf16.mxu0 0
    %1542 = vmatmul.mubr.bf16.gmra.mrb[0].mxu0 %v1504
    %v1543 = vpop.f32.mrb[0].mxu0
    %v1544 = vadd.f32 %v304, %v1543
    %v1545 = vpop.f32.mrb[0].mxu0
    %v1546 = vpop.f32.mrb[0].mxu0
    %v1547 = vpop.f32.mrb[0].mxu0
    %1548 = vdwg.mxu0
    %v1550 = vsel %vm1410, %v805, 0
    %v1553 = vsel %vm1410, %v1105, 0
    %1555 = vmatprep.subr.bf16.mxu0 0
    %1556 = vmatpush1.bf16.xpose.msra.mxu0 %v1553
    %1557 = vmatprep.subr.bf16.mxu0 0
    %1558 = vmatpush1.bf16.xpose.msra.mxu0 0
    %1559 = vmatprep.subr.bf16.mxu0 0
    %1560 = vmatpush1.bf16.xpose.msra.mxu0 0
    %1561 = vmatprep.subr.bf16.mxu0 0
    %1562 = vmatpush1.bf16.xpose.msra.mxu0 0
    %1563 = vmatprep.subr.bf16.mxu0 0
    %1564 = vmatpush1.bf16.xpose.msra.mxu0 0
    %1565 = vmatprep.subr.bf16.mxu0 0
    %1566 = vmatpush1.bf16.xpose.msra.mxu0 0
    %1567 = vmatprep.subr.bf16.mxu0 0
    %1568 = vmatpush1.bf16.xpose.msra.mxu0 0
    %1569 = vmatprep.subr.bf16.mxu0 0
    %1570 = vmatpush1.bf16.xpose.msra.mxu0 0
    %1571 = vmatprep.subr.bf16.mxu0 0
    %1572 = vmatpush1.bf16.xpose.msra.mxu0 0
    %1573 = vmatprep.subr.bf16.mxu0 0
    %1574 = vmatpush1.bf16.xpose.msra.mxu0 0
    %1575 = vmatprep.subr.bf16.mxu0 0
    %1576 = vmatpush1.bf16.xpose.msra.mxu0 0
    %1577 = vmatprep.subr.bf16.mxu0 0
    %1578 = vmatpush1.bf16.xpose.msra.mxu0 0
    %1579 = vmatprep.subr.bf16.mxu0 0
    %1580 = vmatpush1.bf16.xpose.msra.mxu0 0
    %1581 = vmatprep.subr.bf16.mxu0 0
    %1582 = vmatpush1.bf16.xpose.msra.mxu0 0
    %1583 = vmatprep.subr.bf16.mxu0 0
    %1584 = vmatpush1.bf16.xpose.msra.mxu0 0
    %1585 = vmatprep.subr.bf16.mxu0 0
    %1586 = vmatpush1.bf16.xpose.msra.mxu0 0
    %1587 = vmatprep.mubr.bf16.mxu0 0
    %1588 = vmatmul.mubr.bf16.gmra.mrb[0].mxu0 %v1550
    %v1589 = vpop.f32.mrb[0].mxu0
    %v1590 = vadd.f32 %v304, %v1589
    %v1591 = vpop.f32.mrb[0].mxu0
    %v1592 = vpop.f32.mrb[0].mxu0
    %v1593 = vpop.f32.mrb[0].mxu0
    %1594 = vdwg.mxu0
    %v1596 = vsel %vm1410, %v806, 0
    %v1599 = vsel %vm1410, %v1106, 0
    %1601 = vmatprep.subr.bf16.mxu0 0
    %1602 = vmatpush1.bf16.xpose.msra.mxu0 %v1599
    %1603 = vmatprep.subr.bf16.mxu0 0
    %1604 = vmatpush1.bf16.xpose.msra.mxu0 0
    %1605 = vmatprep.subr.bf16.mxu0 0
    %1606 = vmatpush1.bf16.xpose.msra.mxu0 0
    %1607 = vmatprep.subr.bf16.mxu0 0
    %1608 = vmatpush1.bf16.xpose.msra.mxu0 0
    %1609 = vmatprep.subr.bf16.mxu0 0
    %1610 = vmatpush1.bf16.xpose.msra.mxu0 0
    %1611 = vmatprep.subr.bf16.mxu0 0
    %1612 = vmatpush1.bf16.xpose.msra.mxu0 0
    %1613 = vmatprep.subr.bf16.mxu0 0
    %1614 = vmatpush1.bf16.xpose.msra.mxu0 0
    %1615 = vmatprep.subr.bf16.mxu0 0
    %1616 = vmatpush1.bf16.xpose.msra.mxu0 0
    %1617 = vmatprep.subr.bf16.mxu0 0
    %1618 = vmatpush1.bf16.xpose.msra.mxu0 0
    %1619 = vmatprep.subr.bf16.mxu0 0
    %1620 = vmatpush1.bf16.xpose.msra.mxu0 0
    %1621 = vmatprep.subr.bf16.mxu0 0
    %1622 = vmatpush1.bf16.xpose.msra.mxu0 0
    %1623 = vmatprep.subr.bf16.mxu0 0
    %1624 = vmatpush1.bf16.xpose.msra.mxu0 0
    %1625 = vmatprep.subr.bf16.mxu0 0
    %1626 = vmatpush1.bf16.xpose.msra.mxu0 0
    %1627 = vmatprep.subr.bf16.mxu0 0
    %1628 = vmatpush1.bf16.xpose.msra.mxu0 0
    %1629 = vmatprep.subr.bf16.mxu0 0
    %1630 = vmatpush1.bf16.xpose.msra.mxu0 0
    %1631 = vmatprep.subr.bf16.mxu0 0
    %1632 = vmatpush1.bf16.xpose.msra.mxu0 0
    %1633 = vmatprep.mubr.bf16.mxu0 0
    %1634 = vmatmul.mubr.bf16.gmra.mrb[0].mxu0 %v1596
    %v1635 = vpop.f32.mrb[0].mxu0
    %v1636 = vadd.f32 %v304, %v1635
    %v1637 = vpop.f32.mrb[0].mxu0
    %v1638 = vpop.f32.mrb[0].mxu0
    %v1639 = vpop.f32.mrb[0].mxu0
    %1640 = vdwg.mxu0
    %v1642 = vsel %vm1410, %v807, 0
    %v1645 = vsel %vm1410, %v1107, 0
    %1647 = vmatprep.subr.bf16.mxu0 0
    %1648 = vmatpush1.bf16.xpose.msra.mxu0 %v1645
    %1649 = vmatprep.subr.bf16.mxu0 0
    %1650 = vmatpush1.bf16.xpose.msra.mxu0 0
    %1651 = vmatprep.subr.bf16.mxu0 0
    %1652 = vmatpush1.bf16.xpose.msra.mxu0 0
    %1653 = vmatprep.subr.bf16.mxu0 0
    %1654 = vmatpush1.bf16.xpose.msra.mxu0 0
    %1655 = vmatprep.subr.bf16.mxu0 0
    %1656 = vmatpush1.bf16.xpose.msra.mxu0 0
    %1657 = vmatprep.subr.bf16.mxu0 0
    %1658 = vmatpush1.bf16.xpose.msra.mxu0 0
    %1659 = vmatprep.subr.bf16.mxu0 0
    %1660 = vmatpush1.bf16.xpose.msra.mxu0 0
    %1661 = vmatprep.subr.bf16.mxu0 0
    %1662 = vmatpush1.bf16.xpose.msra.mxu0 0
    %1663 = vmatprep.subr.bf16.mxu0 0
    %1664 = vmatpush1.bf16.xpose.msra.mxu0 0
    %1665 = vmatprep.subr.bf16.mxu0 0
    %1666 = vmatpush1.bf16.xpose.msra.mxu0 0
    %1667 = vmatprep.subr.bf16.mxu0 0
    %1668 = vmatpush1.bf16.xpose.msra.mxu0 0
    %1669 = vmatprep.subr.bf16.mxu0 0
    %1670 = vmatpush1.bf16.xpose.msra.mxu0 0
    %1671 = vmatprep.subr.bf16.mxu0 0
    %1672 = vmatpush1.bf16.xpose.msra.mxu0 0
    %1673 = vmatprep.subr.bf16.mxu0 0
    %1674 = vmatpush1.bf16.xpose.msra.mxu0 0
    %1675 = vmatprep.subr.bf16.mxu0 0
    %1676 = vmatpush1.bf16.xpose.msra.mxu0 0
    %1677 = vmatprep.subr.bf16.mxu0 0
    %1678 = vmatpush1.bf16.xpose.msra.mxu0 0
    %1679 = vmatprep.mubr.bf16.mxu0 0
    %1680 = vmatmul.mubr.bf16.gmra.mrb[0].mxu0 %v1642
    %v1681 = vpop.f32.mrb[0].mxu0
    %v1682 = vadd.f32 %v304, %v1681
    %v1683 = vpop.f32.mrb[0].mxu0
    %v1684 = vpop.f32.mrb[0].mxu0
    %v1685 = vpop.f32.mrb[0].mxu0
    %1686 = vdwg.mxu0
    %v1688 = vsel %vm1410, %v808, 0
    %v1691 = vsel %vm1410, %v1108, 0
    %1693 = vmatprep.subr.bf16.mxu0 0
    %1694 = vmatpush1.bf16.xpose.msra.mxu0 %v1691
    %1695 = vmatprep.subr.bf16.mxu0 0
    %1696 = vmatpush1.bf16.xpose.msra.mxu0 0
    %1697 = vmatprep.subr.bf16.mxu0 0
    %1698 = vmatpush1.bf16.xpose.msra.mxu0 0
    %1699 = vmatprep.subr.bf16.mxu0 0
    %1700 = vmatpush1.bf16.xpose.msra.mxu0 0
    %1701 = vmatprep.subr.bf16.mxu0 0
    %1702 = vmatpush1.bf16.xpose.msra.mxu0 0
    %1703 = vmatprep.subr.bf16.mxu0 0
    %1704 = vmatpush1.bf16.xpose.msra.mxu0 0
    %1705 = vmatprep.subr.bf16.mxu0 0
    %1706 = vmatpush1.bf16.xpose.msra.mxu0 0
    %1707 = vmatprep.subr.bf16.mxu0 0
    %1708 = vmatpush1.bf16.xpose.msra.mxu0 0
    %1709 = vmatprep.subr.bf16.mxu0 0
    %1710 = vmatpush1.bf16.xpose.msra.mxu0 0
    %1711 = vmatprep.subr.bf16.mxu0 0
    %1712 = vmatpush1.bf16.xpose.msra.mxu0 0
    %1713 = vmatprep.subr.bf16.mxu0 0
    %1714 = vmatpush1.bf16.xpose.msra.mxu0 0
    %1715 = vmatprep.subr.bf16.mxu0 0
    %1716 = vmatpush1.bf16.xpose.msra.mxu0 0
    %1717 = vmatprep.subr.bf16.mxu0 0
    %1718 = vmatpush1.bf16.xpose.msra.mxu0 0
    %1719 = vmatprep.subr.bf16.mxu0 0
    %1720 = vmatpush1.bf16.xpose.msra.mxu0 0
    %1721 = vmatprep.subr.bf16.mxu0 0
    %1722 = vmatpush1.bf16.xpose.msra.mxu0 0
    %1723 = vmatprep.subr.bf16.mxu0 0
    %1724 = vmatpush1.bf16.xpose.msra.mxu0 0
    %1725 = vmatprep.mubr.bf16.mxu0 0
    %1726 = vmatmul.mubr.bf16.gmra.mrb[0].mxu0 %v1688
    %v1727 = vpop.f32.mrb[0].mxu0
    %v1728 = vadd.f32 %v304, %v1727
    %v1729 = vpop.f32.mrb[0].mxu0
    %v1730 = vpop.f32.mrb[0].mxu0
    %v1731 = vpop.f32.mrb[0].mxu0
    %1732 = vdwg.mxu0
    %v1734 = vsel %vm1410, %v809, 0
    %v1737 = vsel %vm1410, %v1109, 0
    %1739 = vmatprep.subr.bf16.mxu0 0
    %1740 = vmatpush1.bf16.xpose.msra.mxu0 %v1737
    %1741 = vmatprep.subr.bf16.mxu0 0
    %1742 = vmatpush1.bf16.xpose.msra.mxu0 0
    %1743 = vmatprep.subr.bf16.mxu0 0
    %1744 = vmatpush1.bf16.xpose.msra.mxu0 0
    %1745 = vmatprep.subr.bf16.mxu0 0
    %1746 = vmatpush1.bf16.xpose.msra.mxu0 0
    %1747 = vmatprep.subr.bf16.mxu0 0
    %1748 = vmatpush1.bf16.xpose.msra.mxu0 0
    %1749 = vmatprep.subr.bf16.mxu0 0
    %1750 = vmatpush1.bf16.xpose.msra.mxu0 0
    %1751 = vmatprep.subr.bf16.mxu0 0
    %1752 = vmatpush1.bf16.xpose.msra.mxu0 0
    %1753 = vmatprep.subr.bf16.mxu0 0
    %1754 = vmatpush1.bf16.xpose.msra.mxu0 0
    %1755 = vmatprep.subr.bf16.mxu0 0
    %1756 = vmatpush1.bf16.xpose.msra.mxu0 0
    %1757 = vmatprep.subr.bf16.mxu0 0
    %1758 = vmatpush1.bf16.xpose.msra.mxu0 0
    %1759 = vmatprep.subr.bf16.mxu0 0
    %1760 = vmatpush1.bf16.xpose.msra.mxu0 0
    %1761 = vmatprep.subr.bf16.mxu0 0
    %1762 = vmatpush1.bf16.xpose.msra.mxu0 0
    %1763 = vmatprep.subr.bf16.mxu0 0
    %1764 = vmatpush1.bf16.xpose.msra.mxu0 0
    %1765 = vmatprep.subr.bf16.mxu0 0
    %1766 = vmatpush1.bf16.xpose.msra.mxu0 0
    %1767 = vmatprep.subr.bf16.mxu0 0
    %1768 = vmatpush1.bf16.xpose.msra.mxu0 0
    %1769 = vmatprep.subr.bf16.mxu0 0
    %1770 = vmatpush1.bf16.xpose.msra.mxu0 0
    %1771 = vmatprep.mubr.bf16.mxu0 0
    %1772 = vmatmul.mubr.bf16.gmra.mrb[0].mxu0 %v1734
    %v1773 = vpop.f32.mrb[0].mxu0
    %v1774 = vadd.f32 %v304, %v1773
    %v1775 = vpop.f32.mrb[0].mxu0
    %v1776 = vpop.f32.mrb[0].mxu0
    %v1777 = vpop.f32.mrb[0].mxu0
    %1778 = vdwg.mxu0
    %v1779 = vsel %vm1410, %v1452, -inf
    %1780 = vmax.xlane.f32.xlu0 %v1779
    %v1781 = vpop.xlane.xlu0 %1780
    %v1782 = vsel %vm1410, %v1498, -inf
    %1783 = vmax.xlane.f32.xlu0 %v1782
    %v1784 = vpop.xlane.xlu0 %1783
    %v1785 = vsel %vm1410, %v1544, -inf
    %1786 = vmax.xlane.f32.xlu0 %v1785
    %v1787 = vpop.xlane.xlu0 %1786
    %v1788 = vsel %vm1410, %v1590, -inf
    %1789 = vmax.xlane.f32.xlu0 %v1788
    %v1790 = vpop.xlane.xlu0 %1789
    %v1791 = vsel %vm1410, %v1636, -inf
    %1792 = vmax.xlane.f32.xlu0 %v1791
    %v1793 = vpop.xlane.xlu0 %1792
    %v1794 = vsel %vm1410, %v1682, -inf
    %1795 = vmax.xlane.f32.xlu0 %v1794
    %v1796 = vpop.xlane.xlu0 %1795
    %v1797 = vsel %vm1410, %v1728, -inf
    %1798 = vmax.xlane.f32.xlu0 %v1797
    %v1799 = vpop.xlane.xlu0 %1798
    %v1800 = vsel %vm1410, %v1774, -inf
    %1801 = vmax.xlane.f32.xlu0 %v1800
    %v1802 = vpop.xlane.xlu0 %1801
    %v1803 = vsub.f32 %v1452, %v1781
    %v1804 = vsub.f32 %v1498, %v1784
    %v1805 = vsub.f32 %v1544, %v1787
    %v1806 = vsub.f32 %v1590, %v1790
    %v1807 = vsub.f32 %v1636, %v1793
    %v1808 = vsub.f32 %v1682, %v1796
    %v1809 = vsub.f32 %v1728, %v1799
    %v1810 = vsub.f32 %v1774, %v1802
    %v1811 = vmul.f32 %v1803, 1.442695
    %v1812 = vpow.pop %v1811
    %v1813 = vmul.f32 %v1804, 1.442695
    %v1814 = vpow.pop %v1813
    %v1815 = vmul.f32 %v1805, 1.442695
    %v1816 = vpow.pop %v1815
    %v1817 = vmul.f32 %v1806, 1.442695
    %v1818 = vpow.pop %v1817
    %v1819 = vmul.f32 %v1807, 1.442695
    %v1820 = vpow.pop %v1819
    %v1821 = vmul.f32 %v1808, 1.442695
    %v1822 = vpow.pop %v1821
    %v1823 = vmul.f32 %v1809, 1.442695
    %v1824 = vpow.pop %v1823
    %v1825 = vmul.f32 %v1810, 1.442695
    %v1826 = vpow.pop %v1825
    %v1827 = vsel %vm1410, %v1812, 0.0
    %1828 = vadd.xlane.f32.xlu0 %v1827
    %v1829 = vpop.xlane.xlu0 %1828
    %v1830 = vsel %vm1410, %v1814, 0.0
    %1831 = vadd.xlane.f32.xlu0 %v1830
    %v1832 = vpop.xlane.xlu0 %1831
    %v1833 = vsel %vm1410, %v1816, 0.0
    %1834 = vadd.xlane.f32.xlu0 %v1833
    %v1835 = vpop.xlane.xlu0 %1834
    %v1836 = vsel %vm1410, %v1818, 0.0
    %1837 = vadd.xlane.f32.xlu0 %v1836
    %v1838 = vpop.xlane.xlu0 %1837
    %v1839 = vsel %vm1410, %v1820, 0.0
    %1840 = vadd.xlane.f32.xlu0 %v1839
    %v1841 = vpop.xlane.xlu0 %1840
    %v1842 = vsel %vm1410, %v1822, 0.0
    %1843 = vadd.xlane.f32.xlu0 %v1842
    %v1844 = vpop.xlane.xlu0 %1843
    %v1845 = vsel %vm1410, %v1824, 0.0
    %1846 = vadd.xlane.f32.xlu0 %v1845
    %v1847 = vpop.xlane.xlu0 %1846
    %v1848 = vsel %vm1410, %v1826, 0.0
    %1849 = vadd.xlane.f32.xlu0 %v1848
    %v1850 = vpop.xlane.xlu0 %1849
    %v1851 = vrcp.pop %v1829
    %v1852 = vrcp.pop %v1832
    %v1853 = vrcp.pop %v1835
    %v1854 = vrcp.pop %v1838
    %v1855 = vrcp.pop %v1841
    %v1856 = vrcp.pop %v1844
    %v1857 = vrcp.pop %v1847
    %v1858 = vrcp.pop %v1850
    %v1859 = vmul.f32 %v1812, %v1851
    %v1860 = vmul.f32 %v1814, %v1852
    %v1861 = vmul.f32 %v1816, %v1853
    %v1862 = vmul.f32 %v1818, %v1854
    %v1863 = vmul.f32 %v1820, %v1855
    %v1864 = vmul.f32 %v1822, %v1856
    %v1865 = vmul.f32 %v1824, %v1857
    %v1866 = vmul.f32 %v1826, %v1858
    %v1867 = vpack.c.bf16 %v1859, %v1859
    %v1868 = vpack.c.bf16 %v1860, %v1860
    %v1869 = vpack.c.bf16 %v1861, %v1861
    %v1870 = vpack.c.bf16 %v1862, %v1862
    %v1871 = vpack.c.bf16 %v1863, %v1863
    %v1872 = vpack.c.bf16 %v1864, %v1864
    %v1873 = vpack.c.bf16 %v1865, %v1865
    %v1874 = vpack.c.bf16 %v1866, %v1866
    %v1876 = vsel %vm1410, %v1867, 0
    %vm1878 = vcmask 1043456
    %v1880 = vsel %vm1878, %v1402, 0
    %1882 = vmatprep.subr.bf16.mxu0 0
    %1883 = vmatpush1.bf16.msra.mxu0 %v1880
    %1884 = vmatprep.subr.bf16.mxu0 0
    %1885 = vmatpush1.bf16.msra.mxu0 0
    %1886 = vmatprep.subr.bf16.mxu0 0
    %1887 = vmatpush1.bf16.msra.mxu0 0
    %1888 = vmatprep.subr.bf16.mxu0 0
    %1889 = vmatpush1.bf16.msra.mxu0 0
    %1890 = vmatprep.subr.bf16.mxu0 0
    %1891 = vmatpush1.bf16.msra.mxu0 0
    %1892 = vmatprep.subr.bf16.mxu0 0
    %1893 = vmatpush1.bf16.msra.mxu0 0
    %1894 = vmatprep.subr.bf16.mxu0 0
    %1895 = vmatpush1.bf16.msra.mxu0 0
    %1896 = vmatprep.subr.bf16.mxu0 0
    %1897 = vmatpush1.bf16.msra.mxu0 0
    %1898 = vmatprep.subr.bf16.mxu0 0
    %1899 = vmatpush1.bf16.msra.mxu0 0
    %1900 = vmatprep.subr.bf16.mxu0 0
    %1901 = vmatpush1.bf16.msra.mxu0 0
    %1902 = vmatprep.subr.bf16.mxu0 0
    %1903 = vmatpush1.bf16.msra.mxu0 0
    %1904 = vmatprep.subr.bf16.mxu0 0
    %1905 = vmatpush1.bf16.msra.mxu0 0
    %1906 = vmatprep.subr.bf16.mxu0 0
    %1907 = vmatpush1.bf16.msra.mxu0 0
    %1908 = vmatprep.subr.bf16.mxu0 0
    %1909 = vmatpush1.bf16.msra.mxu0 0
    %1910 = vmatprep.subr.bf16.mxu0 0
    %1911 = vmatpush1.bf16.msra.mxu0 0
    %1912 = vmatprep.subr.bf16.mxu0 0
    %1913 = vmatpush1.bf16.msra.mxu0 0
    %1914 = vmatprep.mubr.bf16.mxu0 0
    %1915 = vmatmul.mubr.bf16.gmra.mrb[0].mxu0 %v1876
    %v1916 = vpop.f32.mrb[0].mxu0
    %v1917 = vadd.f32 0.0, %v1916
    %v1918 = vpop.f32.mrb[0].mxu0
    %v1919 = vpop.f32.mrb[0].mxu0
    %v1920 = vpop.f32.mrb[0].mxu0
    %1921 = vdwg.mxu0
    %v1923 = vsel %vm1410, %v1868, 0
    %v1926 = vsel %vm1878, %v1403, 0
    %1928 = vmatprep.subr.bf16.mxu0 0
    %1929 = vmatpush1.bf16.msra.mxu0 %v1926
    %1930 = vmatprep.subr.bf16.mxu0 0
    %1931 = vmatpush1.bf16.msra.mxu0 0
    %1932 = vmatprep.subr.bf16.mxu0 0
    %1933 = vmatpush1.bf16.msra.mxu0 0
    %1934 = vmatprep.subr.bf16.mxu0 0
    %1935 = vmatpush1.bf16.msra.mxu0 0
    %1936 = vmatprep.subr.bf16.mxu0 0
    %1937 = vmatpush1.bf16.msra.mxu0 0
    %1938 = vmatprep.subr.bf16.mxu0 0
    %1939 = vmatpush1.bf16.msra.mxu0 0
    %1940 = vmatprep.subr.bf16.mxu0 0
    %1941 = vmatpush1.bf16.msra.mxu0 0
    %1942 = vmatprep.subr.bf16.mxu0 0
    %1943 = vmatpush1.bf16.msra.mxu0 0
    %1944 = vmatprep.subr.bf16.mxu0 0
    %1945 = vmatpush1.bf16.msra.mxu0 0
    %1946 = vmatprep.subr.bf16.mxu0 0
    %1947 = vmatpush1.bf16.msra.mxu0 0
    %1948 = vmatprep.subr.bf16.mxu0 0
    %1949 = vmatpush1.bf16.msra.mxu0 0
    %1950 = vmatprep.subr.bf16.mxu0 0
    %1951 = vmatpush1.bf16.msra.mxu0 0
    %1952 = vmatprep.subr.bf16.mxu0 0
    %1953 = vmatpush1.bf16.msra.mxu0 0
    %1954 = vmatprep.subr.bf16.mxu0 0
    %1955 = vmatpush1.bf16.msra.mxu0 0
    %1956 = vmatprep.subr.bf16.mxu0 0
    %1957 = vmatpush1.bf16.msra.mxu0 0
    %1958 = vmatprep.subr.bf16.mxu0 0
    %1959 = vmatpush1.bf16.msra.mxu0 0
    %1960 = vmatprep.mubr.bf16.mxu0 0
    %1961 = vmatmul.mubr.bf16.gmra.mrb[0].mxu0 %v1923
    %v1962 = vpop.f32.mrb[0].mxu0
    %v1963 = vadd.f32 0.0, %v1962
    %v1964 = vpop.f32.mrb[0].mxu0
    %v1965 = vpop.f32.mrb[0].mxu0
    %v1966 = vpop.f32.mrb[0].mxu0
    %1967 = vdwg.mxu0
    %v1969 = vsel %vm1410, %v1869, 0
    %v1972 = vsel %vm1878, %v1404, 0
    %1974 = vmatprep.subr.bf16.mxu0 0
    %1975 = vmatpush1.bf16.msra.mxu0 %v1972
    %1976 = vmatprep.subr.bf16.mxu0 0
    %1977 = vmatpush1.bf16.msra.mxu0 0
    %1978 = vmatprep.subr.bf16.mxu0 0
    %1979 = vmatpush1.bf16.msra.mxu0 0
    %1980 = vmatprep.subr.bf16.mxu0 0
    %1981 = vmatpush1.bf16.msra.mxu0 0
    %1982 = vmatprep.subr.bf16.mxu0 0
    %1983 = vmatpush1.bf16.msra.mxu0 0
    %1984 = vmatprep.subr.bf16.mxu0 0
    %1985 = vmatpush1.bf16.msra.mxu0 0
    %1986 = vmatprep.subr.bf16.mxu0 0
    %1987 = vmatpush1.bf16.msra.mxu0 0
    %1988 = vmatprep.subr.bf16.mxu0 0
    %1989 = vmatpush1.bf16.msra.mxu0 0
    %1990 = vmatprep.subr.bf16.mxu0 0
    %1991 = vmatpush1.bf16.msra.mxu0 0
    %1992 = vmatprep.subr.bf16.mxu0 0
    %1993 = vmatpush1.bf16.msra.mxu0 0
    %1994 = vmatprep.subr.bf16.mxu0 0
    %1995 = vmatpush1.bf16.msra.mxu0 0
    %1996 = vmatprep.subr.bf16.mxu0 0
    %1997 = vmatpush1.bf16.msra.mxu0 0
    %1998 = vmatprep.subr.bf16.mxu0 0
    %1999 = vmatpush1.bf16.msra.mxu0 0
    %2000 = vmatprep.subr.bf16.mxu0 0
    %2001 = vmatpush1.bf16.msra.mxu0 0
    %2002 = vmatprep.subr.bf16.mxu0 0
    %2003 = vmatpush1.bf16.msra.mxu0 0
    %2004 = vmatprep.subr.bf16.mxu0 0
    %2005 = vmatpush1.bf16.msra.mxu0 0
    %2006 = vmatprep.mubr.bf16.mxu0 0
    %2007 = vmatmul.mubr.bf16.gmra.mrb[0].mxu0 %v1969
    %v2008 = vpop.f32.mrb[0].mxu0
    %v2009 = vadd.f32 0.0, %v2008
    %v2010 = vpop.f32.mrb[0].mxu0
    %v2011 = vpop.f32.mrb[0].mxu0
    %v2012 = vpop.f32.mrb[0].mxu0
    %2013 = vdwg.mxu0
    %v2015 = vsel %vm1410, %v1870, 0
    %v2018 = vsel %vm1878, %v1405, 0
    %2020 = vmatprep.subr.bf16.mxu0 0
    %2021 = vmatpush1.bf16.msra.mxu0 %v2018
    %2022 = vmatprep.subr.bf16.mxu0 0
    %2023 = vmatpush1.bf16.msra.mxu0 0
    %2024 = vmatprep.subr.bf16.mxu0 0
    %2025 = vmatpush1.bf16.msra.mxu0 0
    %2026 = vmatprep.subr.bf16.mxu0 0
    %2027 = vmatpush1.bf16.msra.mxu0 0
    %2028 = vmatprep.subr.bf16.mxu0 0
    %2029 = vmatpush1.bf16.msra.mxu0 0
    %2030 = vmatprep.subr.bf16.mxu0 0
    %2031 = vmatpush1.bf16.msra.mxu0 0
    %2032 = vmatprep.subr.bf16.mxu0 0
    %2033 = vmatpush1.bf16.msra.mxu0 0
    %2034 = vmatprep.subr.bf16.mxu0 0
    %2035 = vmatpush1.bf16.msra.mxu0 0
    %2036 = vmatprep.subr.bf16.mxu0 0
    %2037 = vmatpush1.bf16.msra.mxu0 0
    %2038 = vmatprep.subr.bf16.mxu0 0
    %2039 = vmatpush1.bf16.msra.mxu0 0
    %2040 = vmatprep.subr.bf16.mxu0 0
    %2041 = vmatpush1.bf16.msra.mxu0 0
    %2042 = vmatprep.subr.bf16.mxu0 0
    %2043 = vmatpush1.bf16.msra.mxu0 0
    %2044 = vmatprep.subr.bf16.mxu0 0
    %2045 = vmatpush1.bf16.msra.mxu0 0
    %2046 = vmatprep.subr.bf16.mxu0 0
    %2047 = vmatpush1.bf16.msra.mxu0 0
    %2048 = vmatprep.subr.bf16.mxu0 0
    %2049 = vmatpush1.bf16.msra.mxu0 0
    %2050 = vmatprep.subr.bf16.mxu0 0
    %2051 = vmatpush1.bf16.msra.mxu0 0
    %2052 = vmatprep.mubr.bf16.mxu0 0
    %2053 = vmatmul.mubr.bf16.gmra.mrb[0].mxu0 %v2015
    %v2054 = vpop.f32.mrb[0].mxu0
    %v2055 = vadd.f32 0.0, %v2054
    %v2056 = vpop.f32.mrb[0].mxu0
    %v2057 = vpop.f32.mrb[0].mxu0
    %v2058 = vpop.f32.mrb[0].mxu0
    %2059 = vdwg.mxu0
    %v2061 = vsel %vm1410, %v1871, 0
    %v2064 = vsel %vm1878, %v1406, 0
    %2066 = vmatprep.subr.bf16.mxu0 0
    %2067 = vmatpush1.bf16.msra.mxu0 %v2064
    %2068 = vmatprep.subr.bf16.mxu0 0
    %2069 = vmatpush1.bf16.msra.mxu0 0
    %2070 = vmatprep.subr.bf16.mxu0 0
    %2071 = vmatpush1.bf16.msra.mxu0 0
    %2072 = vmatprep.subr.bf16.mxu0 0
    %2073 = vmatpush1.bf16.msra.mxu0 0
    %2074 = vmatprep.subr.bf16.mxu0 0
    %2075 = vmatpush1.bf16.msra.mxu0 0
    %2076 = vmatprep.subr.bf16.mxu0 0
    %2077 = vmatpush1.bf16.msra.mxu0 0
    %2078 = vmatprep.subr.bf16.mxu0 0
    %2079 = vmatpush1.bf16.msra.mxu0 0
    %2080 = vmatprep.subr.bf16.mxu0 0
    %2081 = vmatpush1.bf16.msra.mxu0 0
    %2082 = vmatprep.subr.bf16.mxu0 0
    %2083 = vmatpush1.bf16.msra.mxu0 0
    %2084 = vmatprep.subr.bf16.mxu0 0
    %2085 = vmatpush1.bf16.msra.mxu0 0
    %2086 = vmatprep.subr.bf16.mxu0 0
    %2087 = vmatpush1.bf16.msra.mxu0 0
    %2088 = vmatprep.subr.bf16.mxu0 0
    %2089 = vmatpush1.bf16.msra.mxu0 0
    %2090 = vmatprep.subr.bf16.mxu0 0
    %2091 = vmatpush1.bf16.msra.mxu0 0
    %2092 = vmatprep.subr.bf16.mxu0 0
    %2093 = vmatpush1.bf16.msra.mxu0 0
    %2094 = vmatprep.subr.bf16.mxu0 0
    %2095 = vmatpush1.bf16.msra.mxu0 0
    %2096 = vmatprep.subr.bf16.mxu0 0
    %2097 = vmatpush1.bf16.msra.mxu0 0
    %2098 = vmatprep.mubr.bf16.mxu0 0
    %2099 = vmatmul.mubr.bf16.gmra.mrb[0].mxu0 %v2061
    %v2100 = vpop.f32.mrb[0].mxu0
    %v2101 = vadd.f32 0.0, %v2100
    %v2102 = vpop.f32.mrb[0].mxu0
    %v2103 = vpop.f32.mrb[0].mxu0
    %v2104 = vpop.f32.mrb[0].mxu0
    %2105 = vdwg.mxu0
    %v2107 = vsel %vm1410, %v1872, 0
    %v2110 = vsel %vm1878, %v1407, 0
    %2112 = vmatprep.subr.bf16.mxu0 0
    %2113 = vmatpush1.bf16.msra.mxu0 %v2110
    %2114 = vmatprep.subr.bf16.mxu0 0
    %2115 = vmatpush1.bf16.msra.mxu0 0
    %2116 = vmatprep.subr.bf16.mxu0 0
    %2117 = vmatpush1.bf16.msra.mxu0 0
    %2118 = vmatprep.subr.bf16.mxu0 0
    %2119 = vmatpush1.bf16.msra.mxu0 0
    %2120 = vmatprep.subr.bf16.mxu0 0
    %2121 = vmatpush1.bf16.msra.mxu0 0
    %2122 = vmatprep.subr.bf16.mxu0 0
    %2123 = vmatpush1.bf16.msra.mxu0 0
    %2124 = vmatprep.subr.bf16.mxu0 0
    %2125 = vmatpush1.bf16.msra.mxu0 0
    %2126 = vmatprep.subr.bf16.mxu0 0
    %2127 = vmatpush1.bf16.msra.mxu0 0
    %2128 = vmatprep.subr.bf16.mxu0 0
    %2129 = vmatpush1.bf16.msra.mxu0 0
    %2130 = vmatprep.subr.bf16.mxu0 0
    %2131 = vmatpush1.bf16.msra.mxu0 0
    %2132 = vmatprep.subr.bf16.mxu0 0
    %2133 = vmatpush1.bf16.msra.mxu0 0
    %2134 = vmatprep.subr.bf16.mxu0 0
    %2135 = vmatpush1.bf16.msra.mxu0 0
    %2136 = vmatprep.subr.bf16.mxu0 0
    %2137 = vmatpush1.bf16.msra.mxu0 0
    %2138 = vmatprep.subr.bf16.mxu0 0
    %2139 = vmatpush1.bf16.msra.mxu0 0
    %2140 = vmatprep.subr.bf16.mxu0 0
    %2141 = vmatpush1.bf16.msra.mxu0 0
    %2142 = vmatprep.subr.bf16.mxu0 0
    %2143 = vmatpush1.bf16.msra.mxu0 0
    %2144 = vmatprep.mubr.bf16.mxu0 0
    %2145 = vmatmul.mubr.bf16.gmra.mrb[0].mxu0 %v2107
    %v2146 = vpop.f32.mrb[0].mxu0
    %v2147 = vadd.f32 0.0, %v2146
    %v2148 = vpop.f32.mrb[0].mxu0
    %v2149 = vpop.f32.mrb[0].mxu0
    %v2150 = vpop.f32.mrb[0].mxu0
    %2151 = vdwg.mxu0
    %v2153 = vsel %vm1410, %v1873, 0
    %v2156 = vsel %vm1878, %v1408, 0
    %2158 = vmatprep.subr.bf16.mxu0 0
    %2159 = vmatpush1.bf16.msra.mxu0 %v2156
    %2160 = vmatprep.subr.bf16.mxu0 0
    %2161 = vmatpush1.bf16.msra.mxu0 0
    %2162 = vmatprep.subr.bf16.mxu0 0
    %2163 = vmatpush1.bf16.msra.mxu0 0
    %2164 = vmatprep.subr.bf16.mxu0 0
    %2165 = vmatpush1.bf16.msra.mxu0 0
    %2166 = vmatprep.subr.bf16.mxu0 0
    %2167 = vmatpush1.bf16.msra.mxu0 0
    %2168 = vmatprep.subr.bf16.mxu0 0
    %2169 = vmatpush1.bf16.msra.mxu0 0
    %2170 = vmatprep.subr.bf16.mxu0 0
    %2171 = vmatpush1.bf16.msra.mxu0 0
    %2172 = vmatprep.subr.bf16.mxu0 0
    %2173 = vmatpush1.bf16.msra.mxu0 0
    %2174 = vmatprep.subr.bf16.mxu0 0
    %2175 = vmatpush1.bf16.msra.mxu0 0
    %2176 = vmatprep.subr.bf16.mxu0 0
    %2177 = vmatpush1.bf16.msra.mxu0 0
    %2178 = vmatprep.subr.bf16.mxu0 0
    %2179 = vmatpush1.bf16.msra.mxu0 0
    %2180 = vmatprep.subr.bf16.mxu0 0
    %2181 = vmatpush1.bf16.msra.mxu0 0
    %2182 = vmatprep.subr.bf16.mxu0 0
    %2183 = vmatpush1.bf16.msra.mxu0 0
    %2184 = vmatprep.subr.bf16.mxu0 0
    %2185 = vmatpush1.bf16.msra.mxu0 0
    %2186 = vmatprep.subr.bf16.mxu0 0
    %2187 = vmatpush1.bf16.msra.mxu0 0
    %2188 = vmatprep.subr.bf16.mxu0 0
    %2189 = vmatpush1.bf16.msra.mxu0 0
    %2190 = vmatprep.mubr.bf16.mxu0 0
    %2191 = vmatmul.mubr.bf16.gmra.mrb[0].mxu0 %v2153
    %v2192 = vpop.f32.mrb[0].mxu0
    %v2193 = vadd.f32 0.0, %v2192
    %v2194 = vpop.f32.mrb[0].mxu0
    %v2195 = vpop.f32.mrb[0].mxu0
    %v2196 = vpop.f32.mrb[0].mxu0
    %2197 = vdwg.mxu0
    %v2199 = vsel %vm1410, %v1874, 0
    %v2202 = vsel %vm1878, %v1409, 0
    %2204 = vmatprep.subr.bf16.mxu0 0
    %2205 = vmatpush1.bf16.msra.mxu0 %v2202
    %2206 = vmatprep.subr.bf16.mxu0 0
    %2207 = vmatpush1.bf16.msra.mxu0 0
    %2208 = vmatprep.subr.bf16.mxu0 0
    %2209 = vmatpush1.bf16.msra.mxu0 0
    %2210 = vmatprep.subr.bf16.mxu0 0
    %2211 = vmatpush1.bf16.msra.mxu0 0
    %2212 = vmatprep.subr.bf16.mxu0 0
    %2213 = vmatpush1.bf16.msra.mxu0 0
    %2214 = vmatprep.subr.bf16.mxu0 0
    %2215 = vmatpush1.bf16.msra.mxu0 0
    %2216 = vmatprep.subr.bf16.mxu0 0
    %2217 = vmatpush1.bf16.msra.mxu0 0
    %2218 = vmatprep.subr.bf16.mxu0 0
    %2219 = vmatpush1.bf16.msra.mxu0 0
    %2220 = vmatprep.subr.bf16.mxu0 0
    %2221 = vmatpush1.bf16.msra.mxu0 0
    %2222 = vmatprep.subr.bf16.mxu0 0
    %2223 = vmatpush1.bf16.msra.mxu0 0
    %2224 = vmatprep.subr.bf16.mxu0 0
    %2225 = vmatpush1.bf16.msra.mxu0 0
    %2226 = vmatprep.subr.bf16.mxu0 0
    %2227 = vmatpush1.bf16.msra.mxu0 0
    %2228 = vmatprep.subr.bf16.mxu0 0
    %2229 = vmatpush1.bf16.msra.mxu0 0
    %2230 = vmatprep.subr.bf16.mxu0 0
    %2231 = vmatpush1.bf16.msra.mxu0 0
    %2232 = vmatprep.subr.bf16.mxu0 0
    %2233 = vmatpush1.bf16.msra.mxu0 0
    %2234 = vmatprep.subr.bf16.mxu0 0
    %2235 = vmatpush1.bf16.msra.mxu0 0
    %2236 = vmatprep.mubr.bf16.mxu0 0
    %2237 = vmatmul.mubr.bf16.gmra.mrb[0].mxu0 %v2199
    %v2238 = vpop.f32.mrb[0].mxu0
    %v2239 = vadd.f32 0.0, %v2238
    %v2240 = vpop.f32.mrb[0].mxu0
    %v2241 = vpop.f32.mrb[0].mxu0
    %v2242 = vpop.f32.mrb[0].mxu0
    %2243 = vdwg.mxu0
    %v2244 = vcombine.low %v1917, %v2009
    %v2245 = vcombine.high %v1917, %v2009
    %v2247 = vunpack.c.l.s4 1983009808
    %v2248 = vunpack.c.0.s8 %v2247
    %v2249 = vlaneseq
    %v2250 = vshrl.u32 %v2249, 7
    %v2251 = vsub.s32 %v2248, %v2250
    %v2252 = vrot.slane %v2244, %v2251
    %v2254 = vunpack.c.l.s4 1983009808
    %v2255 = vunpack.c.0.s8 %v2254
    %v2256 = vlaneseq
    %v2257 = vshrl.u32 %v2256, 7
    %v2258 = vsub.s32 %v2255, %v2257
    %v2259 = vrot.slane %v2245, %v2258
    %v2260 = vcombine.low %v1963, %v2055
    %v2261 = vcombine.high %v1963, %v2055
    %v2263 = vunpack.c.l.s4 1983009808
    %v2264 = vunpack.c.0.s8 %v2263
    %v2265 = vlaneseq
    %v2266 = vshrl.u32 %v2265, 7
    %v2267 = vsub.s32 %v2264, %v2266
    %v2268 = vrot.slane %v2260, %v2267
    %v2270 = vunpack.c.l.s4 1983009808
    %v2271 = vunpack.c.0.s8 %v2270
    %v2272 = vlaneseq
    %v2273 = vshrl.u32 %v2272, 7
    %v2274 = vsub.s32 %v2271, %v2273
    %v2275 = vrot.slane %v2261, %v2274
    %v2276 = vcombine.low %v2252, %v2268
    %v2277 = vcombine.high %v2252, %v2268
    %v2279 = vunpack.c.l.s4 1934713408
    %v2280 = vunpack.c.0.s8 %v2279
    %v2281 = vlaneseq
    %v2282 = vshrl.u32 %v2281, 7
    %v2283 = vsub.s32 %v2280, %v2282
    %v2284 = vrot.slane %v2276, %v2283
    %v2286 = vunpack.c.l.s4 1934713408
    %v2287 = vunpack.c.0.s8 %v2286
    %v2288 = vlaneseq
    %v2289 = vshrl.u32 %v2288, 7
    %v2290 = vsub.s32 %v2287, %v2289
    %v2291 = vrot.slane %v2277, %v2290
    %v2292 = vcombine.low %v2259, %v2275
    %v2293 = vcombine.high %v2259, %v2275
    %v2295 = vunpack.c.l.s4 1934713408
    %v2296 = vunpack.c.0.s8 %v2295
    %v2297 = vlaneseq
    %v2298 = vshrl.u32 %v2297, 7
    %v2299 = vsub.s32 %v2296, %v2298
    %v2300 = vrot.slane %v2292, %v2299
    %v2302 = vunpack.c.l.s4 1934713408
    %v2303 = vunpack.c.0.s8 %v2302
    %v2304 = vlaneseq
    %v2305 = vshrl.u32 %v2304, 7
    %v2306 = vsub.s32 %v2303, %v2305
    %v2307 = vrot.slane %v2293, %v2306
    %v2308 = vcombine.high %v2284, 0.0
    %v2309 = vcombine.high %v2291, 0.0
    %v2310 = vcombine.high %v2300, 0.0
    %v2311 = vcombine.high %v2307, 0.0
    %v2312 = vcombine.low %v2101, %v2193
    %v2313 = vcombine.high %v2101, %v2193
    %v2315 = vunpack.c.l.s4 1983009808
    %v2316 = vunpack.c.0.s8 %v2315
    %v2317 = vlaneseq
    %v2318 = vshrl.u32 %v2317, 7
    %v2319 = vsub.s32 %v2316, %v2318
    %v2320 = vrot.slane %v2312, %v2319
    %v2322 = vunpack.c.l.s4 1983009808
    %v2323 = vunpack.c.0.s8 %v2322
    %v2324 = vlaneseq
    %v2325 = vshrl.u32 %v2324, 7
    %v2326 = vsub.s32 %v2323, %v2325
    %v2327 = vrot.slane %v2313, %v2326
    %v2328 = vcombine.low %v2147, %v2239
    %v2329 = vcombine.high %v2147, %v2239
    %v2331 = vunpack.c.l.s4 1983009808
    %v2332 = vunpack.c.0.s8 %v2331
    %v2333 = vlaneseq
    %v2334 = vshrl.u32 %v2333, 7
    %v2335 = vsub.s32 %v2332, %v2334
    %v2336 = vrot.slane %v2328, %v2335
    %v2338 = vunpack.c.l.s4 1983009808
    %v2339 = vunpack.c.0.s8 %v2338
    %v2340 = vlaneseq
    %v2341 = vshrl.u32 %v2340, 7
    %v2342 = vsub.s32 %v2339, %v2341
    %v2343 = vrot.slane %v2329, %v2342
    %v2344 = vcombine.low %v2320, %v2336
    %v2345 = vcombine.high %v2320, %v2336
    %v2347 = vunpack.c.l.s4 1934713408
    %v2348 = vunpack.c.0.s8 %v2347
    %v2349 = vlaneseq
    %v2350 = vshrl.u32 %v2349, 7
    %v2351 = vsub.s32 %v2348, %v2350
    %v2352 = vrot.slane %v2344, %v2351
    %v2354 = vunpack.c.l.s4 1934713408
    %v2355 = vunpack.c.0.s8 %v2354
    %v2356 = vlaneseq
    %v2357 = vshrl.u32 %v2356, 7
    %v2358 = vsub.s32 %v2355, %v2357
    %v2359 = vrot.slane %v2345, %v2358
    %v2360 = vcombine.low %v2327, %v2343
    %v2361 = vcombine.high %v2327, %v2343
    %v2363 = vunpack.c.l.s4 1934713408
    %v2364 = vunpack.c.0.s8 %v2363
    %v2365 = vlaneseq
    %v2366 = vshrl.u32 %v2365, 7
    %v2367 = vsub.s32 %v2364, %v2366
    %v2368 = vrot.slane %v2360, %v2367
    %v2370 = vunpack.c.l.s4 1934713408
    %v2371 = vunpack.c.0.s8 %v2370
    %v2372 = vlaneseq
    %v2373 = vshrl.u32 %v2372, 7
    %v2374 = vsub.s32 %v2371, %v2373
    %v2375 = vrot.slane %v2361, %v2374
    %v2376 = vcombine.high %v2352, 0.0
    %v2377 = vcombine.high %v2359, 0.0
    %v2378 = vcombine.high %v2368, 0.0
    %v2379 = vcombine.high %v2375, 0.0
    %v2380 = vcombine.low %v2284, %v2291
    %v2382 = vunpack.c.l.s4 1983009808
    %v2383 = vunpack.c.0.s8 %v2382
    %v2384 = vlaneseq
    %v2385 = vshrl.u32 %v2384, 7
    %v2386 = vsub.s32 %v2383, %v2385
    %v2387 = vrot.slane %v2380, %v2386
    %v2388 = vcombine.low %v2308, %v2309
    %v2390 = vunpack.c.l.s4 1983009808
    %v2391 = vunpack.c.0.s8 %v2390
    %v2392 = vlaneseq
    %v2393 = vshrl.u32 %v2392, 7
    %v2394 = vsub.s32 %v2391, %v2393
    %v2395 = vrot.slane %v2388, %v2394
    %v2396 = vcombine.low %v2300, %v2307
    %v2398 = vunpack.c.l.s4 1983009808
    %v2399 = vunpack.c.0.s8 %v2398
    %v2400 = vlaneseq
    %v2401 = vshrl.u32 %v2400, 7
    %v2402 = vsub.s32 %v2399, %v2401
    %v2403 = vrot.slane %v2396, %v2402
    %v2404 = vcombine.low %v2310, %v2311
    %v2406 = vunpack.c.l.s4 1983009808
    %v2407 = vunpack.c.0.s8 %v2406
    %v2408 = vlaneseq
    %v2409 = vshrl.u32 %v2408, 7
    %v2410 = vsub.s32 %v2407, %v2409
    %v2411 = vrot.slane %v2404, %v2410
    %v2412 = vcombine.low %v2387, %v2395
    %v2413 = vcombine.high %v2387, %v2395
    %v2415 = vunpack.c.l.s4 1934713408
    %v2416 = vunpack.c.0.s8 %v2415
    %v2417 = vlaneseq
    %v2418 = vshrl.u32 %v2417, 7
    %v2419 = vsub.s32 %v2416, %v2418
    %v2420 = vrot.slane %v2412, %v2419
    %v2422 = vunpack.c.l.s4 1934713408
    %v2423 = vunpack.c.0.s8 %v2422
    %v2424 = vlaneseq
    %v2425 = vshrl.u32 %v2424, 7
    %v2426 = vsub.s32 %v2423, %v2425
    %v2427 = vrot.slane %v2413, %v2426
    %v2428 = vcombine.low %v2403, %v2411
    %v2429 = vcombine.high %v2403, %v2411
    %v2431 = vunpack.c.l.s4 1934713408
    %v2432 = vunpack.c.0.s8 %v2431
    %v2433 = vlaneseq
    %v2434 = vshrl.u32 %v2433, 7
    %v2435 = vsub.s32 %v2432, %v2434
    %v2436 = vrot.slane %v2428, %v2435
    %v2438 = vunpack.c.l.s4 1934713408
    %v2439 = vunpack.c.0.s8 %v2438
    %v2440 = vlaneseq
    %v2441 = vshrl.u32 %v2440, 7
    %v2442 = vsub.s32 %v2439, %v2441
    %v2443 = vrot.slane %v2429, %v2442
    %v2444 = vcombine.low %v2420, %v2436
    %v2445 = vcombine.high %v2420, %v2436
    %v2446 = vcombine.low %v2427, %v2443
    %v2447 = vcombine.high %v2427, %v2443
    %v2448 = vcombine.low %v2352, %v2359
    %v2450 = vunpack.c.l.s4 1983009808
    %v2451 = vunpack.c.0.s8 %v2450
    %v2452 = vlaneseq
    %v2453 = vshrl.u32 %v2452, 7
    %v2454 = vsub.s32 %v2451, %v2453
    %v2455 = vrot.slane %v2448, %v2454
    %v2456 = vcombine.low %v2376, %v2377
    %v2458 = vunpack.c.l.s4 1983009808
    %v2459 = vunpack.c.0.s8 %v2458
    %v2460 = vlaneseq
    %v2461 = vshrl.u32 %v2460, 7
    %v2462 = vsub.s32 %v2459, %v2461
    %v2463 = vrot.slane %v2456, %v2462
    %v2464 = vcombine.low %v2368, %v2375
    %v2466 = vunpack.c.l.s4 1983009808
    %v2467 = vunpack.c.0.s8 %v2466
    %v2468 = vlaneseq
    %v2469 = vshrl.u32 %v2468, 7
    %v2470 = vsub.s32 %v2467, %v2469
    %v2471 = vrot.slane %v2464, %v2470
    %v2472 = vcombine.low %v2378, %v2379
    %v2474 = vunpack.c.l.s4 1983009808
    %v2475 = vunpack.c.0.s8 %v2474
    %v2476 = vlaneseq
    %v2477 = vshrl.u32 %v2476, 7
    %v2478 = vsub.s32 %v2475, %v2477
    %v2479 = vrot.slane %v2472, %v2478
    %v2480 = vcombine.low %v2455, %v2463
    %v2481 = vcombine.high %v2455, %v2463
    %v2483 = vunpack.c.l.s4 1934713408
    %v2484 = vunpack.c.0.s8 %v2483
    %v2485 = vlaneseq
    %v2486 = vshrl.u32 %v2485, 7
    %v2487 = vsub.s32 %v2484, %v2486
    %v2488 = vrot.slane %v2480, %v2487
    %v2490 = vunpack.c.l.s4 1934713408
    %v2491 = vunpack.c.0.s8 %v2490
    %v2492 = vlaneseq
    %v2493 = vshrl.u32 %v2492, 7
    %v2494 = vsub.s32 %v2491, %v2493
    %v2495 = vrot.slane %v2481, %v2494
    %v2496 = vcombine.low %v2471, %v2479
    %v2497 = vcombine.high %v2471, %v2479
    %v2499 = vunpack.c.l.s4 1934713408
    %v2500 = vunpack.c.0.s8 %v2499
    %v2501 = vlaneseq
    %v2502 = vshrl.u32 %v2501, 7
    %v2503 = vsub.s32 %v2500, %v2502
    %v2504 = vrot.slane %v2496, %v2503
    %v2506 = vunpack.c.l.s4 1934713408
    %v2507 = vunpack.c.0.s8 %v2506
    %v2508 = vlaneseq
    %v2509 = vshrl.u32 %v2508, 7
    %v2510 = vsub.s32 %v2507, %v2509
    %v2511 = vrot.slane %v2497, %v2510
    %v2512 = vcombine.low %v2488, %v2504
    %v2513 = vcombine.high %v2488, %v2504
    %v2514 = vcombine.low %v2495, %v2511
    %v2515 = vcombine.high %v2495, %v2511
    %2518 = vrot.lane.b32.xlu0 %v2445, 8
    %v2519 = vpop.permute.xlu0 %2518
    %2520 = vrot.lane.b32.xlu0 %v2513, 8
    %v2521 = vpop.permute.xlu0 %2520
    %2526 = vrot.lane.b32.xlu0 %v2446, 16
    %v2527 = vpop.permute.xlu0 %2526
    %2528 = vrot.lane.b32.xlu0 %v2514, 16
    %v2529 = vpop.permute.xlu0 %2528
    %2534 = vrot.lane.b32.xlu0 %v2447, 24
    %v2535 = vpop.permute.xlu0 %2534
    %2536 = vrot.lane.b32.xlu0 %v2515, 24
    %v2537 = vpop.permute.xlu0 %2536
    %v2540 = vsel %vm1410, %v2444, %v2519
    %v2541 = vsel %vm1410, %v2512, %v2521
    %vm2542 = vcmask 130048
    %v2543 = vsel %vm2542, %v2540, %v2527
    %v2544 = vsel %vm2542, %v2541, %v2529
    %vm2545 = vcmask 195584
    %v2546 = vsel %vm2545, %v2543, %v2535
    %v2547 = vsel %vm2545, %v2544, %v2537
    %v2548 = vpack.c.bf16 %v2547, %v2546
    %v2550 = vlaneseq
    %v2551 = vshrl.u32 %v2550, 7
    %v2552 = vsub.s32 0, %v2551
    %v2553 = vrot.slane %v325, %v2552
    %v2559 = vunpack.c.l.b16 %v321
    %v2560 = vunpack.c.l.b16 %v322
    %v2561 = vunpack.c.l.b16 %v323
    %v2562 = vunpack.c.l.b16 %v324
    %v2563 = vpack.c.b16 %v2560, %v2559
    %v2564 = vpack.c.b16 %v2562, %v2561
    %v2568 = vsel %vm345, %v2548, 0
    %2570 = vmatprep.subr.bf16.mxu0 0
    %2571 = vmatpush1.bf16.msra.mxu0 %v2563
    %2572 = vmatprep.subr.bf16.mxu0 0
    %2573 = vmatpush1.bf16.msra.mxu0 %v2564
    %2574 = vmatprep.subr.bf16.mxu0 0
    %2575 = vmatpush1.bf16.msra.mxu0 0
    %2576 = vmatprep.subr.bf16.mxu0 0
    %2577 = vmatpush1.bf16.msra.mxu0 0
    %2578 = vmatprep.subr.bf16.mxu0 0
    %2579 = vmatpush1.bf16.msra.mxu0 0
    %2580 = vmatprep.subr.bf16.mxu0 0
    %2581 = vmatpush1.bf16.msra.mxu0 0
    %2582 = vmatprep.subr.bf16.mxu0 0
    %2583 = vmatpush1.bf16.msra.mxu0 0
    %2584 = vmatprep.subr.bf16.mxu0 0
    %2585 = vmatpush1.bf16.msra.mxu0 0
    %2586 = vmatprep.subr.bf16.mxu0 0
    %2587 = vmatpush1.bf16.msra.mxu0 0
    %2588 = vmatprep.subr.bf16.mxu0 0
    %2589 = vmatpush1.bf16.msra.mxu0 0
    %2590 = vmatprep.subr.bf16.mxu0 0
    %2591 = vmatpush1.bf16.msra.mxu0 0
    %2592 = vmatprep.subr.bf16.mxu0 0
    %2593 = vmatpush1.bf16.msra.mxu0 0
    %2594 = vmatprep.subr.bf16.mxu0 0
    %2595 = vmatpush1.bf16.msra.mxu0 0
    %2596 = vmatprep.subr.bf16.mxu0 0
    %2597 = vmatpush1.bf16.msra.mxu0 0
    %2598 = vmatprep.subr.bf16.mxu0 0
    %2599 = vmatpush1.bf16.msra.mxu0 0
    %2600 = vmatprep.subr.bf16.mxu0 0
    %2601 = vmatpush1.bf16.msra.mxu0 0
    %2602 = vmatprep.mubr.bf16.mxu0 0
    %2603 = vmatmul.mubr.bf16.gmra.mrb[0].mxu0 %v2568
    %v2604 = vpop.f32.mrb[0].mxu0
    %v2605 = vadd.f32 %v2553, %v2604
    %v2606 = vpop.f32.mrb[0].mxu0
    %v2607 = vpop.f32.mrb[0].mxu0
    %v2608 = vadd.f32 %v2553, %v2607
    %v2609 = vpop.f32.mrb[0].mxu0
    %2610 = vdwg.mxu0
    %v2611 = vadd.f32 %v300, %v2605
    %v2612 = vadd.f32 %v301, %v2608
    %v2613 = vld [vmem:[%s49] sm:$0x1]
    %v2614 = vld [vmem:[%s51] sm:$0x1]
    %v2615 = vsel %vm345, %v2611, 0.0
    %2616 = vadd.xlane.f32.xlu0 %v2615
    %v2617 = vpop.xlane.xlu0 %2616
    %v2618 = vsel %vm345, %v2612, 0.0
    %2619 = vadd.xlane.f32.xlu0 %v2618
    %v2620 = vpop.xlane.xlu0 %2619
    %v2621 = vrcp.pop 32.0
    %v2622 = vmul.f32 %v2617, %v2621
    %v2623 = vmul.f32 %v2620, %v2621
    %v2624 = vsub.f32 %v2611, %v2622
    %v2625 = vsub.f32 %v2612, %v2623
    %v2626 = vmul.f32 %v2624, %v2624
    %v2627 = vmul.f32 %v2625, %v2625
    %v2628 = vsel %vm345, %v2626, 0.0
    %2629 = vadd.xlane.f32.xlu0 %v2628
    %v2630 = vpop.xlane.xlu0 %2629
    %v2631 = vsel %vm345, %v2627, 0.0
    %2632 = vadd.xlane.f32.xlu0 %v2631
    %v2633 = vpop.xlane.xlu0 %2632
    %v2634 = vmul.f32 %v2630, %v2621
    %v2635 = vmul.f32 %v2633, %v2621
    %v2636 = vadd.f32 %v2634, 1e-05
    %v2637 = vadd.f32 %v2635, 1e-05
    %v2638 = vrsqrt.pop %v2636
    %v2639 = vrsqrt.pop %v2637
    %v2640 = vmul.f32 %v2624, %v2638
    %v2641 = vmul.f32 %v2625, %v2639
    %v2643 = vlaneseq
    %v2644 = vshrl.u32 %v2643, 7
    %v2645 = vsub.s32 0, %v2644
    %v2646 = vrot.slane %v2613, %v2645
    %v2648 = vmul.f32 %v2640, %v2646
    %v2649 = vmul.f32 %v2641, %v2646
    %v2651 = vlaneseq
    %v2652 = vshrl.u32 %v2651, 7
    %v2653 = vsub.s32 0, %v2652
    %v2654 = vrot.slane %v2614, %v2653
    %v2656 = vadd.f32 %v2648, %v2654
    %v2657 = vadd.f32 %v2649, %v2654
    %v2658 = vld [vmem:[#allocation16] sm:$0xf]
    %v2659 = vld [vmem:[#allocation16 + $0x4] sm:$0xf]
    %v2660 = vld [vmem:[#allocation16 + $0x8] sm:$0xf]
    %v2661 = vld [vmem:[#allocation16 + $0xc] sm:$0xf]
    %v2662 = vld [vmem:[#allocation17] sm:$0x1]
    %v2663 = vld [vmem:[%s29] sm:$0xf]
    %v2664 = vld [vmem:[%s29 + $0x4] sm:$0xf]
    %v2665 = vld [vmem:[%s29 + $0x8] sm:$0xf]
    %v2666 = vld [vmem:[%s29 + $0xc] sm:$0xf]
    %v2667 = vld [vmem:[#allocation19] sm:$0x1]
    %v2668 = vld [vmem:[#allocation20] sm:$0xf]
    %v2669 = vld [vmem:[#allocation20 + $0x4] sm:$0xf]
    %v2670 = vld [vmem:[#allocation20 + $0x8] sm:$0xf]
    %v2671 = vld [vmem:[#allocation20 + $0xc] sm:$0xf]
    %v2672 = vld [vmem:[#allocation22] sm:$0x1]
    %v2673 = vld [vmem:[%s37] sm:$0xf]
    %v2674 = vld [vmem:[%s37 + $0x4] sm:$0xf]
    %v2675 = vld [vmem:[%s37 + $0x8] sm:$0xf]
    %v2676 = vld [vmem:[%s37 + $0xc] sm:$0xf]
    %v2677 = vld [vmem:[%s39] sm:$0x1]
    %v2678 = vpack.c.bf16 %v2657, %v2656
    %v2679 = vpack.c.bf16 %v303, %v302
    %v2681 = vlaneseq
    %v2682 = vshrl.u32 %v2681, 7
    %v2683 = vsub.s32 0, %v2682
    %v2684 = vrot.slane %v2662, %v2683
    %v2690 = vunpack.c.l.b16 %v2658
    %v2691 = vunpack.c.l.b16 %v2659
    %v2692 = vunpack.c.l.b16 %v2660
    %v2693 = vunpack.c.l.b16 %v2661
    %v2694 = vpack.c.b16 %v2691, %v2690
    %v2695 = vpack.c.b16 %v2693, %v2692
    %v2699 = vsel %vm345, %v2678, 0
    %2701 = vmatprep.subr.bf16.mxu0 0
    %2702 = vmatpush1.bf16.msra.mxu0 %v2694
    %2703 = vmatprep.subr.bf16.mxu0 0
    %2704 = vmatpush1.bf16.msra.mxu0 %v2695
    %2705 = vmatprep.subr.bf16.mxu0 0
    %2706 = vmatpush1.bf16.msra.mxu0 0
    %2707 = vmatprep.subr.bf16.mxu0 0
    %2708 = vmatpush1.bf16.msra.mxu0 0
    %2709 = vmatprep.subr.bf16.mxu0 0
    %2710 = vmatpush1.bf16.msra.mxu0 0
    %2711 = vmatprep.subr.bf16.mxu0 0
    %2712 = vmatpush1.bf16.msra.mxu0 0
    %2713 = vmatprep.subr.bf16.mxu0 0
    %2714 = vmatpush1.bf16.msra.mxu0 0
    %2715 = vmatprep.subr.bf16.mxu0 0
    %2716 = vmatpush1.bf16.msra.mxu0 0
    %2717 = vmatprep.subr.bf16.mxu0 0
    %2718 = vmatpush1.bf16.msra.mxu0 0
    %2719 = vmatprep.subr.bf16.mxu0 0
    %2720 = vmatpush1.bf16.msra.mxu0 0
    %2721 = vmatprep.subr.bf16.mxu0 0
    %2722 = vmatpush1.bf16.msra.mxu0 0
    %2723 = vmatprep.subr.bf16.mxu0 0
    %2724 = vmatpush1.bf16.msra.mxu0 0
    %2725 = vmatprep.subr.bf16.mxu0 0
    %2726 = vmatpush1.bf16.msra.mxu0 0
    %2727 = vmatprep.subr.bf16.mxu0 0
    %2728 = vmatpush1.bf16.msra.mxu0 0
    %2729 = vmatprep.subr.bf16.mxu0 0
    %2730 = vmatpush1.bf16.msra.mxu0 0
    %2731 = vmatprep.subr.bf16.mxu0 0
    %2732 = vmatpush1.bf16.msra.mxu0 0
    %2733 = vmatprep.mubr.bf16.mxu0 0
    %2734 = vmatmul.mubr.bf16.gmra.mrb[0].mxu0 %v2699
    %v2735 = vpop.f32.mrb[0].mxu0
    %v2736 = vadd.f32 %v2684, %v2735
    %v2737 = vpop.f32.mrb[0].mxu0
    %v2738 = vpop.f32.mrb[0].mxu0
    %v2739 = vadd.f32 %v2684, %v2738
    %v2740 = vpop.f32.mrb[0].mxu0
    %2741 = vdwg.mxu0
    %v2743 = vlaneseq
    %v2744 = vshrl.u32 %v2743, 7
    %v2745 = vsub.s32 0, %v2744
    %v2746 = vrot.slane %v2667, %v2745
    %v2752 = vunpack.c.l.b16 %v2663
    %v2753 = vunpack.c.l.b16 %v2664
    %v2754 = vunpack.c.l.b16 %v2665
    %v2755 = vunpack.c.l.b16 %v2666
    %v2756 = vpack.c.b16 %v2753, %v2752
    %v2757 = vpack.c.b16 %v2755, %v2754
    %v2761 = vsel %vm345, %v2679, 0
    %2763 = vmatprep.subr.bf16.mxu0 0
    %2764 = vmatpush1.bf16.msra.mxu0 %v2756
    %2765 = vmatprep.subr.bf16.mxu0 0
    %2766 = vmatpush1.bf16.msra.mxu0 %v2757
    %2767 = vmatprep.subr.bf16.mxu0 0
    %2768 = vmatpush1.bf16.msra.mxu0 0
    %2769 = vmatprep.subr.bf16.mxu0 0
    %2770 = vmatpush1.bf16.msra.mxu0 0
    %2771 = vmatprep.subr.bf16.mxu0 0
    %2772 = vmatpush1.bf16.msra.mxu0 0
    %2773 = vmatprep.subr.bf16.mxu0 0
    %2774 = vmatpush1.bf16.msra.mxu0 0
    %2775 = vmatprep.subr.bf16.mxu0 0
    %2776 = vmatpush1.bf16.msra.mxu0 0
    %2777 = vmatprep.subr.bf16.mxu0 0
    %2778 = vmatpush1.bf16.msra.mxu0 0
    %2779 = vmatprep.subr.bf16.mxu0 0
    %2780 = vmatpush1.bf16.msra.mxu0 0
    %2781 = vmatprep.subr.bf16.mxu0 0
    %2782 = vmatpush1.bf16.msra.mxu0 0
    %2783 = vmatprep.subr.bf16.mxu0 0
    %2784 = vmatpush1.bf16.msra.mxu0 0
    %2785 = vmatprep.subr.bf16.mxu0 0
    %2786 = vmatpush1.bf16.msra.mxu0 0
    %2787 = vmatprep.subr.bf16.mxu0 0
    %2788 = vmatpush1.bf16.msra.mxu0 0
    %2789 = vmatprep.subr.bf16.mxu0 0
    %2790 = vmatpush1.bf16.msra.mxu0 0
    %2791 = vmatprep.subr.bf16.mxu0 0
    %2792 = vmatpush1.bf16.msra.mxu0 0
    %2793 = vmatprep.subr.bf16.mxu0 0
    %2794 = vmatpush1.bf16.msra.mxu0 0
    %2795 = vmatprep.mubr.bf16.mxu0 0
    %2796 = vmatmul.mubr.bf16.gmra.mrb[0].mxu0 %v2761
    %v2797 = vpop.f32.mrb[0].mxu0
    %v2798 = vadd.f32 %v2746, %v2797
    %v2799 = vpop.f32.mrb[0].mxu0
    %v2800 = vpop.f32.mrb[0].mxu0
    %v2801 = vadd.f32 %v2746, %v2800
    %v2802 = vpop.f32.mrb[0].mxu0
    %2803 = vdwg.mxu0
    %v2805 = vlaneseq
    %v2806 = vshrl.u32 %v2805, 7
    %v2807 = vsub.s32 0, %v2806
    %v2808 = vrot.slane %v2672, %v2807
    %v2814 = vunpack.c.l.b16 %v2668
    %v2815 = vunpack.c.l.b16 %v2669
    %v2816 = vunpack.c.l.b16 %v2670
    %v2817 = vunpack.c.l.b16 %v2671
    %v2818 = vpack.c.b16 %v2815, %v2814
    %v2819 = vpack.c.b16 %v2817, %v2816
    %2822 = vmatprep.subr.bf16.mxu0 0
    %2823 = vmatpush1.bf16.msra.mxu0 %v2818
    %2824 = vmatprep.subr.bf16.mxu0 0
    %2825 = vmatpush1.bf16.msra.mxu0 %v2819
    %2826 = vmatprep.subr.bf16.mxu0 0
    %2827 = vmatpush1.bf16.msra.mxu0 0
    %2828 = vmatprep.subr.bf16.mxu0 0
    %2829 = vmatpush1.bf16.msra.mxu0 0
    %2830 = vmatprep.subr.bf16.mxu0 0
    %2831 = vmatpush1.bf16.msra.mxu0 0
    %2832 = vmatprep.subr.bf16.mxu0 0
    %2833 = vmatpush1.bf16.msra.mxu0 0
    %2834 = vmatprep.subr.bf16.mxu0 0
    %2835 = vmatpush1.bf16.msra.mxu0 0
    %2836 = vmatprep.subr.bf16.mxu0 0
    %2837 = vmatpush1.bf16.msra.mxu0 0
    %2838 = vmatprep.subr.bf16.mxu0 0
    %2839 = vmatpush1.bf16.msra.mxu0 0
    %2840 = vmatprep.subr.bf16.mxu0 0
    %2841 = vmatpush1.bf16.msra.mxu0 0
    %2842 = vmatprep.subr.bf16.mxu0 0
    %2843 = vmatpush1.bf16.msra.mxu0 0
    %2844 = vmatprep.subr.bf16.mxu0 0
    %2845 = vmatpush1.bf16.msra.mxu0 0
    %2846 = vmatprep.subr.bf16.mxu0 0
    %2847 = vmatpush1.bf16.msra.mxu0 0
    %2848 = vmatprep.subr.bf16.mxu0 0
    %2849 = vmatpush1.bf16.msra.mxu0 0
    %2850 = vmatprep.subr.bf16.mxu0 0
    %2851 = vmatpush1.bf16.msra.mxu0 0
    %2852 = vmatprep.subr.bf16.mxu0 0
    %2853 = vmatpush1.bf16.msra.mxu0 0
    %2854 = vmatprep.mubr.bf16.mxu0 0
    %2855 = vmatmul.mubr.bf16.gmra.mrb[0].mxu0 %v2761
    %v2856 = vpop.f32.mrb[0].mxu0
    %v2857 = vadd.f32 %v2808, %v2856
    %v2858 = vpop.f32.mrb[0].mxu0
    %v2859 = vpop.f32.mrb[0].mxu0
    %v2860 = vadd.f32 %v2808, %v2859
    %v2861 = vpop.f32.mrb[0].mxu0
    %2862 = vdwg.mxu0
    %v2863 = vmul.f32 %v2736, 0.35355338
    %v2864 = vmul.f32 %v2739, 0.35355338
    %2867 = vrot.lane.b32.xlu0 %v2863, 120
    %v2868 = vpop.permute.xlu0 %2867
    %2869 = vrot.lane.b32.xlu0 %v2864, 120
    %v2870 = vpop.permute.xlu0 %2869
    %2873 = vrot.lane.b32.xlu0 %v2863, 112
    %v2874 = vpop.permute.xlu0 %2873
    %2875 = vrot.lane.b32.xlu0 %v2864, 112
    %v2876 = vpop.permute.xlu0 %2875
    %2879 = vrot.lane.b32.xlu0 %v2863, 104
    %v2880 = vpop.permute.xlu0 %2879
    %2881 = vrot.lane.b32.xlu0 %v2864, 104
    %v2882 = vpop.permute.xlu0 %2881
    %v2885 = vcombine.low %v2863, %v2874
    %v2886 = vcombine.high %v2863, %v2874
    %v2888 = vunpack.c.l.s4 1983009808
    %v2889 = vunpack.c.0.s8 %v2888
    %v2890 = vlaneseq
    %v2891 = vshrl.u32 %v2890, 7
    %v2892 = vsub.s32 %v2889, %v2891
    %v2893 = vrot.slane %v2885, %v2892
    %v2895 = vunpack.c.l.s4 1983009808
    %v2896 = vunpack.c.0.s8 %v2895
    %v2897 = vlaneseq
    %v2898 = vshrl.u32 %v2897, 7
    %v2899 = vsub.s32 %v2896, %v2898
    %v2900 = vrot.slane %v2886, %v2899
    %v2901 = vcombine.low %v2868, %v2880
    %v2902 = vcombine.high %v2868, %v2880
    %v2904 = vunpack.c.l.s4 1983009808
    %v2905 = vunpack.c.0.s8 %v2904
    %v2906 = vlaneseq
    %v2907 = vshrl.u32 %v2906, 7
    %v2908 = vsub.s32 %v2905, %v2907
    %v2909 = vrot.slane %v2901, %v2908
    %v2911 = vunpack.c.l.s4 1983009808
    %v2912 = vunpack.c.0.s8 %v2911
    %v2913 = vlaneseq
    %v2914 = vshrl.u32 %v2913, 7
    %v2915 = vsub.s32 %v2912, %v2914
    %v2916 = vrot.slane %v2902, %v2915
    %v2917 = vcombine.low %v2893, %v2909
    %v2918 = vcombine.high %v2893, %v2909
    %v2920 = vunpack.c.l.s4 1934713408
    %v2921 = vunpack.c.0.s8 %v2920
    %v2922 = vlaneseq
    %v2923 = vshrl.u32 %v2922, 7
    %v2924 = vsub.s32 %v2921, %v2923
    %v2925 = vrot.slane %v2917, %v2924
    %v2927 = vunpack.c.l.s4 1934713408
    %v2928 = vunpack.c.0.s8 %v2927
    %v2929 = vlaneseq
    %v2930 = vshrl.u32 %v2929, 7
    %v2931 = vsub.s32 %v2928, %v2930
    %v2932 = vrot.slane %v2918, %v2931
    %v2933 = vcombine.low %v2900, %v2916
    %v2934 = vcombine.high %v2900, %v2916
    %v2936 = vunpack.c.l.s4 1934713408
    %v2937 = vunpack.c.0.s8 %v2936
    %v2938 = vlaneseq
    %v2939 = vshrl.u32 %v2938, 7
    %v2940 = vsub.s32 %v2937, %v2939
    %v2941 = vrot.slane %v2933, %v2940
    %v2943 = vunpack.c.l.s4 1934713408
    %v2944 = vunpack.c.0.s8 %v2943
    %v2945 = vlaneseq
    %v2946 = vshrl.u32 %v2945, 7
    %v2947 = vsub.s32 %v2944, %v2946
    %v2948 = vrot.slane %v2934, %v2947
    %v2949 = vcombine.high %v2925, 0.0
    %v2950 = vcombine.high %v2932, 0.0
    %v2951 = vcombine.high %v2941, 0.0
    %v2952 = vcombine.high %v2948, 0.0
    %v2953 = vcombine.low %v2864, %v2876
    %v2954 = vcombine.high %v2864, %v2876
    %v2956 = vunpack.c.l.s4 1983009808
    %v2957 = vunpack.c.0.s8 %v2956
    %v2958 = vlaneseq
    %v2959 = vshrl.u32 %v2958, 7
    %v2960 = vsub.s32 %v2957, %v2959
    %v2961 = vrot.slane %v2953, %v2960
    %v2963 = vunpack.c.l.s4 1983009808
    %v2964 = vunpack.c.0.s8 %v2963
    %v2965 = vlaneseq
    %v2966 = vshrl.u32 %v2965, 7
    %v2967 = vsub.s32 %v2964, %v2966
    %v2968 = vrot.slane %v2954, %v2967
    %v2969 = vcombine.low %v2870, %v2882
    %v2970 = vcombine.high %v2870, %v2882
    %v2972 = vunpack.c.l.s4 1983009808
    %v2973 = vunpack.c.0.s8 %v2972
    %v2974 = vlaneseq
    %v2975 = vshrl.u32 %v2974, 7
    %v2976 = vsub.s32 %v2973, %v2975
    %v2977 = vrot.slane %v2969, %v2976
    %v2979 = vunpack.c.l.s4 1983009808
    %v2980 = vunpack.c.0.s8 %v2979
    %v2981 = vlaneseq
    %v2982 = vshrl.u32 %v2981, 7
    %v2983 = vsub.s32 %v2980, %v2982
    %v2984 = vrot.slane %v2970, %v2983
    %v2985 = vcombine.low %v2961, %v2977
    %v2986 = vcombine.high %v2961, %v2977
    %v2988 = vunpack.c.l.s4 1934713408
    %v2989 = vunpack.c.0.s8 %v2988
    %v2990 = vlaneseq
    %v2991 = vshrl.u32 %v2990, 7
    %v2992 = vsub.s32 %v2989, %v2991
    %v2993 = vrot.slane %v2985, %v2992
    %v2995 = vunpack.c.l.s4 1934713408
    %v2996 = vunpack.c.0.s8 %v2995
    %v2997 = vlaneseq
    %v2998 = vshrl.u32 %v2997, 7
    %v2999 = vsub.s32 %v2996, %v2998
    %v3000 = vrot.slane %v2986, %v2999
    %v3001 = vcombine.low %v2968, %v2984
    %v3002 = vcombine.high %v2968, %v2984
    %v3004 = vunpack.c.l.s4 1934713408
    %v3005 = vunpack.c.0.s8 %v3004
    %v3006 = vlaneseq
    %v3007 = vshrl.u32 %v3006, 7
    %v3008 = vsub.s32 %v3005, %v3007
    %v3009 = vrot.slane %v3001, %v3008
    %v3011 = vunpack.c.l.s4 1934713408
    %v3012 = vunpack.c.0.s8 %v3011
    %v3013 = vlaneseq
    %v3014 = vshrl.u32 %v3013, 7
    %v3015 = vsub.s32 %v3012, %v3014
    %v3016 = vrot.slane %v3002, %v3015
    %v3017 = vcombine.high %v2993, 0.0
    %v3018 = vcombine.high %v3000, 0.0
    %v3019 = vcombine.high %v3009, 0.0
    %v3020 = vcombine.high %v3016, 0.0
    %v3021 = vcombine.low %v2925, %v2932
    %v3023 = vunpack.c.l.s4 1983009808
    %v3024 = vunpack.c.0.s8 %v3023
    %v3025 = vlaneseq
    %v3026 = vshrl.u32 %v3025, 7
    %v3027 = vsub.s32 %v3024, %v3026
    %v3028 = vrot.slane %v3021, %v3027
    %v3029 = vcombine.low %v2949, %v2950
    %v3031 = vunpack.c.l.s4 1983009808
    %v3032 = vunpack.c.0.s8 %v3031
    %v3033 = vlaneseq
    %v3034 = vshrl.u32 %v3033, 7
    %v3035 = vsub.s32 %v3032, %v3034
    %v3036 = vrot.slane %v3029, %v3035
    %v3037 = vcombine.low %v2941, %v2948
    %v3039 = vunpack.c.l.s4 1983009808
    %v3040 = vunpack.c.0.s8 %v3039
    %v3041 = vlaneseq
    %v3042 = vshrl.u32 %v3041, 7
    %v3043 = vsub.s32 %v3040, %v3042
    %v3044 = vrot.slane %v3037, %v3043
    %v3045 = vcombine.low %v2951, %v2952
    %v3047 = vunpack.c.l.s4 1983009808
    %v3048 = vunpack.c.0.s8 %v3047
    %v3049 = vlaneseq
    %v3050 = vshrl.u32 %v3049, 7
    %v3051 = vsub.s32 %v3048, %v3050
    %v3052 = vrot.slane %v3045, %v3051
    %v3053 = vcombine.low %v3028, %v3036
    %v3054 = vcombine.high %v3028, %v3036
    %v3056 = vunpack.c.l.s4 1934713408
    %v3057 = vunpack.c.0.s8 %v3056
    %v3058 = vlaneseq
    %v3059 = vshrl.u32 %v3058, 7
    %v3060 = vsub.s32 %v3057, %v3059
    %v3061 = vrot.slane %v3053, %v3060
    %v3063 = vunpack.c.l.s4 1934713408
    %v3064 = vunpack.c.0.s8 %v3063
    %v3065 = vlaneseq
    %v3066 = vshrl.u32 %v3065, 7
    %v3067 = vsub.s32 %v3064, %v3066
    %v3068 = vrot.slane %v3054, %v3067
    %v3069 = vcombine.low %v3044, %v3052
    %v3070 = vcombine.high %v3044, %v3052
    %v3072 = vunpack.c.l.s4 1934713408
    %v3073 = vunpack.c.0.s8 %v3072
    %v3074 = vlaneseq
    %v3075 = vshrl.u32 %v3074, 7
    %v3076 = vsub.s32 %v3073, %v3075
    %v3077 = vrot.slane %v3069, %v3076
    %v3079 = vunpack.c.l.s4 1934713408
    %v3080 = vunpack.c.0.s8 %v3079
    %v3081 = vlaneseq
    %v3082 = vshrl.u32 %v3081, 7
    %v3083 = vsub.s32 %v3080, %v3082
    %v3084 = vrot.slane %v3070, %v3083
    %v3085 = vcombine.low %v3061, %v3077
    %v3086 = vcombine.high %v3061, %v3077
    %v3087 = vcombine.low %v3068, %v3084
    %v3088 = vcombine.high %v3068, %v3084
    %v3089 = vcombine.low %v2993, %v3000
    %v3091 = vunpack.c.l.s4 1983009808
    %v3092 = vunpack.c.0.s8 %v3091
    %v3093 = vlaneseq
    %v3094 = vshrl.u32 %v3093, 7
    %v3095 = vsub.s32 %v3092, %v3094
    %v3096 = vrot.slane %v3089, %v3095
    %v3097 = vcombine.low %v3017, %v3018
    %v3099 = vunpack.c.l.s4 1983009808
    %v3100 = vunpack.c.0.s8 %v3099
    %v3101 = vlaneseq
    %v3102 = vshrl.u32 %v3101, 7
    %v3103 = vsub.s32 %v3100, %v3102
    %v3104 = vrot.slane %v3097, %v3103
    %v3105 = vcombine.low %v3009, %v3016
    %v3107 = vunpack.c.l.s4 1983009808
    %v3108 = vunpack.c.0.s8 %v3107
    %v3109 = vlaneseq
    %v3110 = vshrl.u32 %v3109, 7
    %v3111 = vsub.s32 %v3108, %v3110
    %v3112 = vrot.slane %v3105, %v3111
    %v3113 = vcombine.low %v3019, %v3020
    %v3115 = vunpack.c.l.s4 1983009808
    %v3116 = vunpack.c.0.s8 %v3115
    %v3117 = vlaneseq
    %v3118 = vshrl.u32 %v3117, 7
    %v3119 = vsub.s32 %v3116, %v3118
    %v3120 = vrot.slane %v3113, %v3119
    %v3121 = vcombine.low %v3096, %v3104
    %v3122 = vcombine.high %v3096, %v3104
    %v3124 = vunpack.c.l.s4 1934713408
    %v3125 = vunpack.c.0.s8 %v3124
    %v3126 = vlaneseq
    %v3127 = vshrl.u32 %v3126, 7
    %v3128 = vsub.s32 %v3125, %v3127
    %v3129 = vrot.slane %v3121, %v3128
    %v3131 = vunpack.c.l.s4 1934713408
    %v3132 = vunpack.c.0.s8 %v3131
    %v3133 = vlaneseq
    %v3134 = vshrl.u32 %v3133, 7
    %v3135 = vsub.s32 %v3132, %v3134
    %v3136 = vrot.slane %v3122, %v3135
    %v3137 = vcombine.low %v3112, %v3120
    %v3138 = vcombine.high %v3112, %v3120
    %v3140 = vunpack.c.l.s4 1934713408
    %v3141 = vunpack.c.0.s8 %v3140
    %v3142 = vlaneseq
    %v3143 = vshrl.u32 %v3142, 7
    %v3144 = vsub.s32 %v3141, %v3143
    %v3145 = vrot.slane %v3137, %v3144
    %v3147 = vunpack.c.l.s4 1934713408
    %v3148 = vunpack.c.0.s8 %v3147
    %v3149 = vlaneseq
    %v3150 = vshrl.u32 %v3149, 7
    %v3151 = vsub.s32 %v3148, %v3150
    %v3152 = vrot.slane %v3138, %v3151
    %v3153 = vcombine.low %v3129, %v3145
    %v3154 = vcombine.high %v3129, %v3145
    %v3155 = vcombine.low %v3136, %v3152
    %v3156 = vcombine.high %v3136, %v3152
    %v3157 = vpack.c.bf16 %v3085, %v3085
    %v3158 = vpack.c.bf16 %v3086, %v3086
    %v3159 = vpack.c.bf16 %v3087, %v3087
    %v3160 = vpack.c.bf16 %v3088, %v3088
    %v3161 = vpack.c.bf16 %v3153, %v3153
    %v3162 = vpack.c.bf16 %v3154, %v3154
    %v3163 = vpack.c.bf16 %v3155, %v3155
    %v3164 = vpack.c.bf16 %v3156, %v3156
    %3167 = vrot.lane.b32.xlu0 %v2798, 120
    %v3168 = vpop.permute.xlu0 %3167
    %3169 = vrot.lane.b32.xlu0 %v2801, 120
    %v3170 = vpop.permute.xlu0 %3169
    %3173 = vrot.lane.b32.xlu0 %v2798, 112
    %v3174 = vpop.permute.xlu0 %3173
    %3175 = vrot.lane.b32.xlu0 %v2801, 112
    %v3176 = vpop.permute.xlu0 %3175
    %3179 = vrot.lane.b32.xlu0 %v2798, 104
    %v3180 = vpop.permute.xlu0 %3179
    %3181 = vrot.lane.b32.xlu0 %v2801, 104
    %v3182 = vpop.permute.xlu0 %3181
    %v3185 = vcombine.low %v2798, %v3174
    %v3186 = vcombine.high %v2798, %v3174
    %v3188 = vunpack.c.l.s4 1983009808
    %v3189 = vunpack.c.0.s8 %v3188
    %v3190 = vlaneseq
    %v3191 = vshrl.u32 %v3190, 7
    %v3192 = vsub.s32 %v3189, %v3191
    %v3193 = vrot.slane %v3185, %v3192
    %v3195 = vunpack.c.l.s4 1983009808
    %v3196 = vunpack.c.0.s8 %v3195
    %v3197 = vlaneseq
    %v3198 = vshrl.u32 %v3197, 7
    %v3199 = vsub.s32 %v3196, %v3198
    %v3200 = vrot.slane %v3186, %v3199
    %v3201 = vcombine.low %v3168, %v3180
    %v3202 = vcombine.high %v3168, %v3180
    %v3204 = vunpack.c.l.s4 1983009808
    %v3205 = vunpack.c.0.s8 %v3204
    %v3206 = vlaneseq
    %v3207 = vshrl.u32 %v3206, 7
    %v3208 = vsub.s32 %v3205, %v3207
    %v3209 = vrot.slane %v3201, %v3208
    %v3211 = vunpack.c.l.s4 1983009808
    %v3212 = vunpack.c.0.s8 %v3211
    %v3213 = vlaneseq
    %v3214 = vshrl.u32 %v3213, 7
    %v3215 = vsub.s32 %v3212, %v3214
    %v3216 = vrot.slane %v3202, %v3215
    %v3217 = vcombine.low %v3193, %v3209
    %v3218 = vcombine.high %v3193, %v3209
    %v3220 = vunpack.c.l.s4 1934713408
    %v3221 = vunpack.c.0.s8 %v3220
    %v3222 = vlaneseq
    %v3223 = vshrl.u32 %v3222, 7
    %v3224 = vsub.s32 %v3221, %v3223
    %v3225 = vrot.slane %v3217, %v3224
    %v3227 = vunpack.c.l.s4 1934713408
    %v3228 = vunpack.c.0.s8 %v3227
    %v3229 = vlaneseq
    %v3230 = vshrl.u32 %v3229, 7
    %v3231 = vsub.s32 %v3228, %v3230
    %v3232 = vrot.slane %v3218, %v3231
    %v3233 = vcombine.low %v3200, %v3216
    %v3234 = vcombine.high %v3200, %v3216
    %v3236 = vunpack.c.l.s4 1934713408
    %v3237 = vunpack.c.0.s8 %v3236
    %v3238 = vlaneseq
    %v3239 = vshrl.u32 %v3238, 7
    %v3240 = vsub.s32 %v3237, %v3239
    %v3241 = vrot.slane %v3233, %v3240
    %v3243 = vunpack.c.l.s4 1934713408
    %v3244 = vunpack.c.0.s8 %v3243
    %v3245 = vlaneseq
    %v3246 = vshrl.u32 %v3245, 7
    %v3247 = vsub.s32 %v3244, %v3246
    %v3248 = vrot.slane %v3234, %v3247
    %v3249 = vcombine.high %v3225, 0.0
    %v3250 = vcombine.high %v3232, 0.0
    %v3251 = vcombine.high %v3241, 0.0
    %v3252 = vcombine.high %v3248, 0.0
    %v3253 = vcombine.low %v2801, %v3176
    %v3254 = vcombine.high %v2801, %v3176
    %v3256 = vunpack.c.l.s4 1983009808
    %v3257 = vunpack.c.0.s8 %v3256
    %v3258 = vlaneseq
    %v3259 = vshrl.u32 %v3258, 7
    %v3260 = vsub.s32 %v3257, %v3259
    %v3261 = vrot.slane %v3253, %v3260
    %v3263 = vunpack.c.l.s4 1983009808
    %v3264 = vunpack.c.0.s8 %v3263
    %v3265 = vlaneseq
    %v3266 = vshrl.u32 %v3265, 7
    %v3267 = vsub.s32 %v3264, %v3266
    %v3268 = vrot.slane %v3254, %v3267
    %v3269 = vcombine.low %v3170, %v3182
    %v3270 = vcombine.high %v3170, %v3182
    %v3272 = vunpack.c.l.s4 1983009808
    %v3273 = vunpack.c.0.s8 %v3272
    %v3274 = vlaneseq
    %v3275 = vshrl.u32 %v3274, 7
    %v3276 = vsub.s32 %v3273, %v3275
    %v3277 = vrot.slane %v3269, %v3276
    %v3279 = vunpack.c.l.s4 1983009808
    %v3280 = vunpack.c.0.s8 %v3279
    %v3281 = vlaneseq
    %v3282 = vshrl.u32 %v3281, 7
    %v3283 = vsub.s32 %v3280, %v3282
    %v3284 = vrot.slane %v3270, %v3283
    %v3285 = vcombine.low %v3261, %v3277
    %v3286 = vcombine.high %v3261, %v3277
    %v3288 = vunpack.c.l.s4 1934713408
    %v3289 = vunpack.c.0.s8 %v3288
    %v3290 = vlaneseq
    %v3291 = vshrl.u32 %v3290, 7
    %v3292 = vsub.s32 %v3289, %v3291
    %v3293 = vrot.slane %v3285, %v3292
    %v3295 = vunpack.c.l.s4 1934713408
    %v3296 = vunpack.c.0.s8 %v3295
    %v3297 = vlaneseq
    %v3298 = vshrl.u32 %v3297, 7
    %v3299 = vsub.s32 %v3296, %v3298
    %v3300 = vrot.slane %v3286, %v3299
    %v3301 = vcombine.low %v3268, %v3284
    %v3302 = vcombine.high %v3268, %v3284
    %v3304 = vunpack.c.l.s4 1934713408
    %v3305 = vunpack.c.0.s8 %v3304
    %v3306 = vlaneseq
    %v3307 = vshrl.u32 %v3306, 7
    %v3308 = vsub.s32 %v3305, %v3307
    %v3309 = vrot.slane %v3301, %v3308
    %v3311 = vunpack.c.l.s4 1934713408
    %v3312 = vunpack.c.0.s8 %v3311
    %v3313 = vlaneseq
    %v3314 = vshrl.u32 %v3313, 7
    %v3315 = vsub.s32 %v3312, %v3314
    %v3316 = vrot.slane %v3302, %v3315
    %v3317 = vcombine.high %v3293, 0.0
    %v3318 = vcombine.high %v3300, 0.0
    %v3319 = vcombine.high %v3309, 0.0
    %v3320 = vcombine.high %v3316, 0.0
    %v3321 = vcombine.low %v3225, %v3232
    %v3323 = vunpack.c.l.s4 1983009808
    %v3324 = vunpack.c.0.s8 %v3323
    %v3325 = vlaneseq
    %v3326 = vshrl.u32 %v3325, 7
    %v3327 = vsub.s32 %v3324, %v3326
    %v3328 = vrot.slane %v3321, %v3327
    %v3329 = vcombine.low %v3249, %v3250
    %v3331 = vunpack.c.l.s4 1983009808
    %v3332 = vunpack.c.0.s8 %v3331
    %v3333 = vlaneseq
    %v3334 = vshrl.u32 %v3333, 7
    %v3335 = vsub.s32 %v3332, %v3334
    %v3336 = vrot.slane %v3329, %v3335
    %v3337 = vcombine.low %v3241, %v3248
    %v3339 = vunpack.c.l.s4 1983009808
    %v3340 = vunpack.c.0.s8 %v3339
    %v3341 = vlaneseq
    %v3342 = vshrl.u32 %v3341, 7
    %v3343 = vsub.s32 %v3340, %v3342
    %v3344 = vrot.slane %v3337, %v3343
    %v3345 = vcombine.low %v3251, %v3252
    %v3347 = vunpack.c.l.s4 1983009808
    %v3348 = vunpack.c.0.s8 %v3347
    %v3349 = vlaneseq
    %v3350 = vshrl.u32 %v3349, 7
    %v3351 = vsub.s32 %v3348, %v3350
    %v3352 = vrot.slane %v3345, %v3351
    %v3353 = vcombine.low %v3328, %v3336
    %v3354 = vcombine.high %v3328, %v3336
    %v3356 = vunpack.c.l.s4 1934713408
    %v3357 = vunpack.c.0.s8 %v3356
    %v3358 = vlaneseq
    %v3359 = vshrl.u32 %v3358, 7
    %v3360 = vsub.s32 %v3357, %v3359
    %v3361 = vrot.slane %v3353, %v3360
    %v3363 = vunpack.c.l.s4 1934713408
    %v3364 = vunpack.c.0.s8 %v3363
    %v3365 = vlaneseq
    %v3366 = vshrl.u32 %v3365, 7
    %v3367 = vsub.s32 %v3364, %v3366
    %v3368 = vrot.slane %v3354, %v3367
    %v3369 = vcombine.low %v3344, %v3352
    %v3370 = vcombine.high %v3344, %v3352
    %v3372 = vunpack.c.l.s4 1934713408
    %v3373 = vunpack.c.0.s8 %v3372
    %v3374 = vlaneseq
    %v3375 = vshrl.u32 %v3374, 7
    %v3376 = vsub.s32 %v3373, %v3375
    %v3377 = vrot.slane %v3369, %v3376
    %v3379 = vunpack.c.l.s4 1934713408
    %v3380 = vunpack.c.0.s8 %v3379
    %v3381 = vlaneseq
    %v3382 = vshrl.u32 %v3381, 7
    %v3383 = vsub.s32 %v3380, %v3382
    %v3384 = vrot.slane %v3370, %v3383
    %v3385 = vcombine.low %v3361, %v3377
    %v3386 = vcombine.high %v3361, %v3377
    %v3387 = vcombine.low %v3368, %v3384
    %v3388 = vcombine.high %v3368, %v3384
    %v3389 = vcombine.low %v3293, %v3300
    %v3391 = vunpack.c.l.s4 1983009808
    %v3392 = vunpack.c.0.s8 %v3391
    %v3393 = vlaneseq
    %v3394 = vshrl.u32 %v3393, 7
    %v3395 = vsub.s32 %v3392, %v3394
    %v3396 = vrot.slane %v3389, %v3395
    %v3397 = vcombine.low %v3317, %v3318
    %v3399 = vunpack.c.l.s4 1983009808
    %v3400 = vunpack.c.0.s8 %v3399
    %v3401 = vlaneseq
    %v3402 = vshrl.u32 %v3401, 7
    %v3403 = vsub.s32 %v3400, %v3402
    %v3404 = vrot.slane %v3397, %v3403
    %v3405 = vcombine.low %v3309, %v3316
    %v3407 = vunpack.c.l.s4 1983009808
    %v3408 = vunpack.c.0.s8 %v3407
    %v3409 = vlaneseq
    %v3410 = vshrl.u32 %v3409, 7
    %v3411 = vsub.s32 %v3408, %v3410
    %v3412 = vrot.slane %v3405, %v3411
    %v3413 = vcombine.low %v3319, %v3320
    %v3415 = vunpack.c.l.s4 1983009808
    %v3416 = vunpack.c.0.s8 %v3415
    %v3417 = vlaneseq
    %v3418 = vshrl.u32 %v3417, 7
    %v3419 = vsub.s32 %v3416, %v3418
    %v3420 = vrot.slane %v3413, %v3419
    %v3421 = vcombine.low %v3396, %v3404
    %v3422 = vcombine.high %v3396, %v3404
    %v3424 = vunpack.c.l.s4 1934713408
    %v3425 = vunpack.c.0.s8 %v3424
    %v3426 = vlaneseq
    %v3427 = vshrl.u32 %v3426, 7
    %v3428 = vsub.s32 %v3425, %v3427
    %v3429 = vrot.slane %v3421, %v3428
    %v3431 = vunpack.c.l.s4 1934713408
    %v3432 = vunpack.c.0.s8 %v3431
    %v3433 = vlaneseq
    %v3434 = vshrl.u32 %v3433, 7
    %v3435 = vsub.s32 %v3432, %v3434
    %v3436 = vrot.slane %v3422, %v3435
    %v3437 = vcombine.low %v3412, %v3420
    %v3438 = vcombine.high %v3412, %v3420
    %v3440 = vunpack.c.l.s4 1934713408
    %v3441 = vunpack.c.0.s8 %v3440
    %v3442 = vlaneseq
    %v3443 = vshrl.u32 %v3442, 7
    %v3444 = vsub.s32 %v3441, %v3443
    %v3445 = vrot.slane %v3437, %v3444
    %v3447 = vunpack.c.l.s4 1934713408
    %v3448 = vunpack.c.0.s8 %v3447
    %v3449 = vlaneseq
    %v3450 = vshrl.u32 %v3449, 7
    %v3451 = vsub.s32 %v3448, %v3450
    %v3452 = vrot.slane %v3438, %v3451
    %v3453 = vcombine.low %v3429, %v3445
    %v3454 = vcombine.high %v3429, %v3445
    %v3455 = vcombine.low %v3436, %v3452
    %v3456 = vcombine.high %v3436, %v3452
    %v3457 = vpack.c.bf16 %v3385, %v3385
    %v3458 = vpack.c.bf16 %v3386, %v3386
    %v3459 = vpack.c.bf16 %v3387, %v3387
    %v3460 = vpack.c.bf16 %v3388, %v3388
    %v3461 = vpack.c.bf16 %v3453, %v3453
    %v3462 = vpack.c.bf16 %v3454, %v3454
    %v3463 = vpack.c.bf16 %v3455, %v3455
    %v3464 = vpack.c.bf16 %v3456, %v3456
    %3467 = vrot.lane.b32.xlu0 %v2857, 120
    %v3468 = vpop.permute.xlu0 %3467
    %3469 = vrot.lane.b32.xlu0 %v2860, 120
    %v3470 = vpop.permute.xlu0 %3469
    %3473 = vrot.lane.b32.xlu0 %v2857, 112
    %v3474 = vpop.permute.xlu0 %3473
    %3475 = vrot.lane.b32.xlu0 %v2860, 112
    %v3476 = vpop.permute.xlu0 %3475
    %3479 = vrot.lane.b32.xlu0 %v2857, 104
    %v3480 = vpop.permute.xlu0 %3479
    %3481 = vrot.lane.b32.xlu0 %v2860, 104
    %v3482 = vpop.permute.xlu0 %3481
    %v3485 = vcombine.low %v2857, %v3474
    %v3486 = vcombine.high %v2857, %v3474
    %v3488 = vunpack.c.l.s4 1983009808
    %v3489 = vunpack.c.0.s8 %v3488
    %v3490 = vlaneseq
    %v3491 = vshrl.u32 %v3490, 7
    %v3492 = vsub.s32 %v3489, %v3491
    %v3493 = vrot.slane %v3485, %v3492
    %v3495 = vunpack.c.l.s4 1983009808
    %v3496 = vunpack.c.0.s8 %v3495
    %v3497 = vlaneseq
    %v3498 = vshrl.u32 %v3497, 7
    %v3499 = vsub.s32 %v3496, %v3498
    %v3500 = vrot.slane %v3486, %v3499
    %v3501 = vcombine.low %v3468, %v3480
    %v3502 = vcombine.high %v3468, %v3480
    %v3504 = vunpack.c.l.s4 1983009808
    %v3505 = vunpack.c.0.s8 %v3504
    %v3506 = vlaneseq
    %v3507 = vshrl.u32 %v3506, 7
    %v3508 = vsub.s32 %v3505, %v3507
    %v3509 = vrot.slane %v3501, %v3508
    %v3511 = vunpack.c.l.s4 1983009808
    %v3512 = vunpack.c.0.s8 %v3511
    %v3513 = vlaneseq
    %v3514 = vshrl.u32 %v3513, 7
    %v3515 = vsub.s32 %v3512, %v3514
    %v3516 = vrot.slane %v3502, %v3515
    %v3517 = vcombine.low %v3493, %v3509
    %v3518 = vcombine.high %v3493, %v3509
    %v3520 = vunpack.c.l.s4 1934713408
    %v3521 = vunpack.c.0.s8 %v3520
    %v3522 = vlaneseq
    %v3523 = vshrl.u32 %v3522, 7
    %v3524 = vsub.s32 %v3521, %v3523
    %v3525 = vrot.slane %v3517, %v3524
    %v3527 = vunpack.c.l.s4 1934713408
    %v3528 = vunpack.c.0.s8 %v3527
    %v3529 = vlaneseq
    %v3530 = vshrl.u32 %v3529, 7
    %v3531 = vsub.s32 %v3528, %v3530
    %v3532 = vrot.slane %v3518, %v3531
    %v3533 = vcombine.low %v3500, %v3516
    %v3534 = vcombine.high %v3500, %v3516
    %v3536 = vunpack.c.l.s4 1934713408
    %v3537 = vunpack.c.0.s8 %v3536
    %v3538 = vlaneseq
    %v3539 = vshrl.u32 %v3538, 7
    %v3540 = vsub.s32 %v3537, %v3539
    %v3541 = vrot.slane %v3533, %v3540
    %v3543 = vunpack.c.l.s4 1934713408
    %v3544 = vunpack.c.0.s8 %v3543
    %v3545 = vlaneseq
    %v3546 = vshrl.u32 %v3545, 7
    %v3547 = vsub.s32 %v3544, %v3546
    %v3548 = vrot.slane %v3534, %v3547
    %v3549 = vcombine.high %v3525, 0.0
    %v3550 = vcombine.high %v3532, 0.0
    %v3551 = vcombine.high %v3541, 0.0
    %v3552 = vcombine.high %v3548, 0.0
    %v3553 = vcombine.low %v2860, %v3476
    %v3554 = vcombine.high %v2860, %v3476
    %v3556 = vunpack.c.l.s4 1983009808
    %v3557 = vunpack.c.0.s8 %v3556
    %v3558 = vlaneseq
    %v3559 = vshrl.u32 %v3558, 7
    %v3560 = vsub.s32 %v3557, %v3559
    %v3561 = vrot.slane %v3553, %v3560
    %v3563 = vunpack.c.l.s4 1983009808
    %v3564 = vunpack.c.0.s8 %v3563
    %v3565 = vlaneseq
    %v3566 = vshrl.u32 %v3565, 7
    %v3567 = vsub.s32 %v3564, %v3566
    %v3568 = vrot.slane %v3554, %v3567
    %v3569 = vcombine.low %v3470, %v3482
    %v3570 = vcombine.high %v3470, %v3482
    %v3572 = vunpack.c.l.s4 1983009808
    %v3573 = vunpack.c.0.s8 %v3572
    %v3574 = vlaneseq
    %v3575 = vshrl.u32 %v3574, 7
    %v3576 = vsub.s32 %v3573, %v3575
    %v3577 = vrot.slane %v3569, %v3576
    %v3579 = vunpack.c.l.s4 1983009808
    %v3580 = vunpack.c.0.s8 %v3579
    %v3581 = vlaneseq
    %v3582 = vshrl.u32 %v3581, 7
    %v3583 = vsub.s32 %v3580, %v3582
    %v3584 = vrot.slane %v3570, %v3583
    %v3585 = vcombine.low %v3561, %v3577
    %v3586 = vcombine.high %v3561, %v3577
    %v3588 = vunpack.c.l.s4 1934713408
    %v3589 = vunpack.c.0.s8 %v3588
    %v3590 = vlaneseq
    %v3591 = vshrl.u32 %v3590, 7
    %v3592 = vsub.s32 %v3589, %v3591
    %v3593 = vrot.slane %v3585, %v3592
    %v3595 = vunpack.c.l.s4 1934713408
    %v3596 = vunpack.c.0.s8 %v3595
    %v3597 = vlaneseq
    %v3598 = vshrl.u32 %v3597, 7
    %v3599 = vsub.s32 %v3596, %v3598
    %v3600 = vrot.slane %v3586, %v3599
    %v3601 = vcombine.low %v3568, %v3584
    %v3602 = vcombine.high %v3568, %v3584
    %v3604 = vunpack.c.l.s4 1934713408
    %v3605 = vunpack.c.0.s8 %v3604
    %v3606 = vlaneseq
    %v3607 = vshrl.u32 %v3606, 7
    %v3608 = vsub.s32 %v3605, %v3607
    %v3609 = vrot.slane %v3601, %v3608
    %v3611 = vunpack.c.l.s4 1934713408
    %v3612 = vunpack.c.0.s8 %v3611
    %v3613 = vlaneseq
    %v3614 = vshrl.u32 %v3613, 7
    %v3615 = vsub.s32 %v3612, %v3614
    %v3616 = vrot.slane %v3602, %v3615
    %v3617 = vcombine.high %v3593, 0.0
    %v3618 = vcombine.high %v3600, 0.0
    %v3619 = vcombine.high %v3609, 0.0
    %v3620 = vcombine.high %v3616, 0.0
    %v3621 = vcombine.low %v3525, %v3532
    %v3623 = vunpack.c.l.s4 1983009808
    %v3624 = vunpack.c.0.s8 %v3623
    %v3625 = vlaneseq
    %v3626 = vshrl.u32 %v3625, 7
    %v3627 = vsub.s32 %v3624, %v3626
    %v3628 = vrot.slane %v3621, %v3627
    %v3629 = vcombine.low %v3549, %v3550
    %v3631 = vunpack.c.l.s4 1983009808
    %v3632 = vunpack.c.0.s8 %v3631
    %v3633 = vlaneseq
    %v3634 = vshrl.u32 %v3633, 7
    %v3635 = vsub.s32 %v3632, %v3634
    %v3636 = vrot.slane %v3629, %v3635
    %v3637 = vcombine.low %v3541, %v3548
    %v3639 = vunpack.c.l.s4 1983009808
    %v3640 = vunpack.c.0.s8 %v3639
    %v3641 = vlaneseq
    %v3642 = vshrl.u32 %v3641, 7
    %v3643 = vsub.s32 %v3640, %v3642
    %v3644 = vrot.slane %v3637, %v3643
    %v3645 = vcombine.low %v3551, %v3552
    %v3647 = vunpack.c.l.s4 1983009808
    %v3648 = vunpack.c.0.s8 %v3647
    %v3649 = vlaneseq
    %v3650 = vshrl.u32 %v3649, 7
    %v3651 = vsub.s32 %v3648, %v3650
    %v3652 = vrot.slane %v3645, %v3651
    %v3653 = vcombine.low %v3628, %v3636
    %v3654 = vcombine.high %v3628, %v3636
    %v3656 = vunpack.c.l.s4 1934713408
    %v3657 = vunpack.c.0.s8 %v3656
    %v3658 = vlaneseq
    %v3659 = vshrl.u32 %v3658, 7
    %v3660 = vsub.s32 %v3657, %v3659
    %v3661 = vrot.slane %v3653, %v3660
    %v3663 = vunpack.c.l.s4 1934713408
    %v3664 = vunpack.c.0.s8 %v3663
    %v3665 = vlaneseq
    %v3666 = vshrl.u32 %v3665, 7
    %v3667 = vsub.s32 %v3664, %v3666
    %v3668 = vrot.slane %v3654, %v3667
    %v3669 = vcombine.low %v3644, %v3652
    %v3670 = vcombine.high %v3644, %v3652
    %v3672 = vunpack.c.l.s4 1934713408
    %v3673 = vunpack.c.0.s8 %v3672
    %v3674 = vlaneseq
    %v3675 = vshrl.u32 %v3674, 7
    %v3676 = vsub.s32 %v3673, %v3675
    %v3677 = vrot.slane %v3669, %v3676
    %v3679 = vunpack.c.l.s4 1934713408
    %v3680 = vunpack.c.0.s8 %v3679
    %v3681 = vlaneseq
    %v3682 = vshrl.u32 %v3681, 7
    %v3683 = vsub.s32 %v3680, %v3682
    %v3684 = vrot.slane %v3670, %v3683
    %v3685 = vcombine.low %v3661, %v3677
    %v3686 = vcombine.high %v3661, %v3677
    %v3687 = vcombine.low %v3668, %v3684
    %v3688 = vcombine.high %v3668, %v3684
    %v3689 = vcombine.low %v3593, %v3600
    %v3691 = vunpack.c.l.s4 1983009808
    %v3692 = vunpack.c.0.s8 %v3691
    %v3693 = vlaneseq
    %v3694 = vshrl.u32 %v3693, 7
    %v3695 = vsub.s32 %v3692, %v3694
    %v3696 = vrot.slane %v3689, %v3695
    %v3697 = vcombine.low %v3617, %v3618
    %v3699 = vunpack.c.l.s4 1983009808
    %v3700 = vunpack.c.0.s8 %v3699
    %v3701 = vlaneseq
    %v3702 = vshrl.u32 %v3701, 7
    %v3703 = vsub.s32 %v3700, %v3702
    %v3704 = vrot.slane %v3697, %v3703
    %v3705 = vcombine.low %v3609, %v3616
    %v3707 = vunpack.c.l.s4 1983009808
    %v3708 = vunpack.c.0.s8 %v3707
    %v3709 = vlaneseq
    %v3710 = vshrl.u32 %v3709, 7
    %v3711 = vsub.s32 %v3708, %v3710
    %v3712 = vrot.slane %v3705, %v3711
    %v3713 = vcombine.low %v3619, %v3620
    %v3715 = vunpack.c.l.s4 1983009808
    %v3716 = vunpack.c.0.s8 %v3715
    %v3717 = vlaneseq
    %v3718 = vshrl.u32 %v3717, 7
    %v3719 = vsub.s32 %v3716, %v3718
    %v3720 = vrot.slane %v3713, %v3719
    %v3721 = vcombine.low %v3696, %v3704
    %v3722 = vcombine.high %v3696, %v3704
    %v3724 = vunpack.c.l.s4 1934713408
    %v3725 = vunpack.c.0.s8 %v3724
    %v3726 = vlaneseq
    %v3727 = vshrl.u32 %v3726, 7
    %v3728 = vsub.s32 %v3725, %v3727
    %v3729 = vrot.slane %v3721, %v3728
    %v3731 = vunpack.c.l.s4 1934713408
    %v3732 = vunpack.c.0.s8 %v3731
    %v3733 = vlaneseq
    %v3734 = vshrl.u32 %v3733, 7
    %v3735 = vsub.s32 %v3732, %v3734
    %v3736 = vrot.slane %v3722, %v3735
    %v3737 = vcombine.low %v3712, %v3720
    %v3738 = vcombine.high %v3712, %v3720
    %v3740 = vunpack.c.l.s4 1934713408
    %v3741 = vunpack.c.0.s8 %v3740
    %v3742 = vlaneseq
    %v3743 = vshrl.u32 %v3742, 7
    %v3744 = vsub.s32 %v3741, %v3743
    %v3745 = vrot.slane %v3737, %v3744
    %v3747 = vunpack.c.l.s4 1934713408
    %v3748 = vunpack.c.0.s8 %v3747
    %v3749 = vlaneseq
    %v3750 = vshrl.u32 %v3749, 7
    %v3751 = vsub.s32 %v3748, %v3750
    %v3752 = vrot.slane %v3738, %v3751
    %v3753 = vcombine.low %v3729, %v3745
    %v3754 = vcombine.high %v3729, %v3745
    %v3755 = vcombine.low %v3736, %v3752
    %v3756 = vcombine.high %v3736, %v3752
    %v3757 = vpack.c.bf16 %v3685, %v3685
    %v3758 = vpack.c.bf16 %v3686, %v3686
    %v3759 = vpack.c.bf16 %v3687, %v3687
    %v3760 = vpack.c.bf16 %v3688, %v3688
    %v3761 = vpack.c.bf16 %v3753, %v3753
    %v3762 = vpack.c.bf16 %v3754, %v3754
    %v3763 = vpack.c.bf16 %v3755, %v3755
    %v3764 = vpack.c.bf16 %v3756, %v3756
    %v3766 = vsel %vm1410, %v3157, 0
    %v3769 = vsel %vm1410, %v3457, 0
    %3771 = vmatprep.subr.bf16.mxu0 0
    %3772 = vmatpush1.bf16.xpose.msra.mxu0 %v3769
    %3773 = vmatprep.subr.bf16.mxu0 0
    %3774 = vmatpush1.bf16.xpose.msra.mxu0 0
    %3775 = vmatprep.subr.bf16.mxu0 0
    %3776 = vmatpush1.bf16.xpose.msra.mxu0 0
    %3777 = vmatprep.subr.bf16.mxu0 0
    %3778 = vmatpush1.bf16.xpose.msra.mxu0 0
    %3779 = vmatprep.subr.bf16.mxu0 0
    %3780 = vmatpush1.bf16.xpose.msra.mxu0 0
    %3781 = vmatprep.subr.bf16.mxu0 0
    %3782 = vmatpush1.bf16.xpose.msra.mxu0 0
    %3783 = vmatprep.subr.bf16.mxu0 0
    %3784 = vmatpush1.bf16.xpose.msra.mxu0 0
    %3785 = vmatprep.subr.bf16.mxu0 0
    %3786 = vmatpush1.bf16.xpose.msra.mxu0 0
    %3787 = vmatprep.subr.bf16.mxu0 0
    %3788 = vmatpush1.bf16.xpose.msra.mxu0 0
    %3789 = vmatprep.subr.bf16.mxu0 0
    %3790 = vmatpush1.bf16.xpose.msra.mxu0 0
    %3791 = vmatprep.subr.bf16.mxu0 0
    %3792 = vmatpush1.bf16.xpose.msra.mxu0 0
    %3793 = vmatprep.subr.bf16.mxu0 0
    %3794 = vmatpush1.bf16.xpose.msra.mxu0 0
    %3795 = vmatprep.subr.bf16.mxu0 0
    %3796 = vmatpush1.bf16.xpose.msra.mxu0 0
    %3797 = vmatprep.subr.bf16.mxu0 0
    %3798 = vmatpush1.bf16.xpose.msra.mxu0 0
    %3799 = vmatprep.subr.bf16.mxu0 0
    %3800 = vmatpush1.bf16.xpose.msra.mxu0 0
    %3801 = vmatprep.subr.bf16.mxu0 0
    %3802 = vmatpush1.bf16.xpose.msra.mxu0 0
    %3803 = vmatprep.mubr.bf16.mxu0 0
    %3804 = vmatmul.mubr.bf16.gmra.mrb[0].mxu0 %v3766
    %v3805 = vpop.f32.mrb[0].mxu0
    %v3806 = vadd.f32 %v305, %v3805
    %v3807 = vpop.f32.mrb[0].mxu0
    %v3808 = vpop.f32.mrb[0].mxu0
    %v3809 = vpop.f32.mrb[0].mxu0
    %3810 = vdwg.mxu0
    %v3812 = vsel %vm1410, %v3158, 0
    %v3815 = vsel %vm1410, %v3458, 0
    %3817 = vmatprep.subr.bf16.mxu0 0
    %3818 = vmatpush1.bf16.xpose.msra.mxu0 %v3815
    %3819 = vmatprep.subr.bf16.mxu0 0
    %3820 = vmatpush1.bf16.xpose.msra.mxu0 0
    %3821 = vmatprep.subr.bf16.mxu0 0
    %3822 = vmatpush1.bf16.xpose.msra.mxu0 0
    %3823 = vmatprep.subr.bf16.mxu0 0
    %3824 = vmatpush1.bf16.xpose.msra.mxu0 0
    %3825 = vmatprep.subr.bf16.mxu0 0
    %3826 = vmatpush1.bf16.xpose.msra.mxu0 0
    %3827 = vmatprep.subr.bf16.mxu0 0
    %3828 = vmatpush1.bf16.xpose.msra.mxu0 0
    %3829 = vmatprep.subr.bf16.mxu0 0
    %3830 = vmatpush1.bf16.xpose.msra.mxu0 0
    %3831 = vmatprep.subr.bf16.mxu0 0
    %3832 = vmatpush1.bf16.xpose.msra.mxu0 0
    %3833 = vmatprep.subr.bf16.mxu0 0
    %3834 = vmatpush1.bf16.xpose.msra.mxu0 0
    %3835 = vmatprep.subr.bf16.mxu0 0
    %3836 = vmatpush1.bf16.xpose.msra.mxu0 0
    %3837 = vmatprep.subr.bf16.mxu0 0
    %3838 = vmatpush1.bf16.xpose.msra.mxu0 0
    %3839 = vmatprep.subr.bf16.mxu0 0
    %3840 = vmatpush1.bf16.xpose.msra.mxu0 0
    %3841 = vmatprep.subr.bf16.mxu0 0
    %3842 = vmatpush1.bf16.xpose.msra.mxu0 0
    %3843 = vmatprep.subr.bf16.mxu0 0
    %3844 = vmatpush1.bf16.xpose.msra.mxu0 0
    %3845 = vmatprep.subr.bf16.mxu0 0
    %3846 = vmatpush1.bf16.xpose.msra.mxu0 0
    %3847 = vmatprep.subr.bf16.mxu0 0
    %3848 = vmatpush1.bf16.xpose.msra.mxu0 0
    %3849 = vmatprep.mubr.bf16.mxu0 0
    %3850 = vmatmul.mubr.bf16.gmra.mrb[0].mxu0 %v3812
    %v3851 = vpop.f32.mrb[0].mxu0
    %v3852 = vadd.f32 %v305, %v3851
    %v3853 = vpop.f32.mrb[0].mxu0
    %v3854 = vpop.f32.mrb[0].mxu0
    %v3855 = vpop.f32.mrb[0].mxu0
    %3856 = vdwg.mxu0
    %v3858 = vsel %vm1410, %v3159, 0
    %v3861 = vsel %vm1410, %v3459, 0
    %3863 = vmatprep.subr.bf16.mxu0 0
    %3864 = vmatpush1.bf16.xpose.msra.mxu0 %v3861
    %3865 = vmatprep.subr.bf16.mxu0 0
    %3866 = vmatpush1.bf16.xpose.msra.mxu0 0
    %3867 = vmatprep.subr.bf16.mxu0 0
    %3868 = vmatpush1.bf16.xpose.msra.mxu0 0
    %3869 = vmatprep.subr.bf16.mxu0 0
    %3870 = vmatpush1.bf16.xpose.msra.mxu0 0
    %3871 = vmatprep.subr.bf16.mxu0 0
    %3872 = vmatpush1.bf16.xpose.msra.mxu0 0
    %3873 = vmatprep.subr.bf16.mxu0 0
    %3874 = vmatpush1.bf16.xpose.msra.mxu0 0
    %3875 = vmatprep.subr.bf16.mxu0 0
    %3876 = vmatpush1.bf16.xpose.msra.mxu0 0
    %3877 = vmatprep.subr.bf16.mxu0 0
    %3878 = vmatpush1.bf16.xpose.msra.mxu0 0
    %3879 = vmatprep.subr.bf16.mxu0 0
    %3880 = vmatpush1.bf16.xpose.msra.mxu0 0
    %3881 = vmatprep.subr.bf16.mxu0 0
    %3882 = vmatpush1.bf16.xpose.msra.mxu0 0
    %3883 = vmatprep.subr.bf16.mxu0 0
    %3884 = vmatpush1.bf16.xpose.msra.mxu0 0
    %3885 = vmatprep.subr.bf16.mxu0 0
    %3886 = vmatpush1.bf16.xpose.msra.mxu0 0
    %3887 = vmatprep.subr.bf16.mxu0 0
    %3888 = vmatpush1.bf16.xpose.msra.mxu0 0
    %3889 = vmatprep.subr.bf16.mxu0 0
    %3890 = vmatpush1.bf16.xpose.msra.mxu0 0
    %3891 = vmatprep.subr.bf16.mxu0 0
    %3892 = vmatpush1.bf16.xpose.msra.mxu0 0
    %3893 = vmatprep.subr.bf16.mxu0 0
    %3894 = vmatpush1.bf16.xpose.msra.mxu0 0
    %3895 = vmatprep.mubr.bf16.mxu0 0
    %3896 = vmatmul.mubr.bf16.gmra.mrb[0].mxu0 %v3858
    %v3897 = vpop.f32.mrb[0].mxu0
    %v3898 = vadd.f32 %v305, %v3897
    %v3899 = vpop.f32.mrb[0].mxu0
    %v3900 = vpop.f32.mrb[0].mxu0
    %v3901 = vpop.f32.mrb[0].mxu0
    %3902 = vdwg.mxu0
    %v3904 = vsel %vm1410, %v3160, 0
    %v3907 = vsel %vm1410, %v3460, 0
    %3909 = vmatprep.subr.bf16.mxu0 0
    %3910 = vmatpush1.bf16.xpose.msra.mxu0 %v3907
    %3911 = vmatprep.subr.bf16.mxu0 0
    %3912 = vmatpush1.bf16.xpose.msra.mxu0 0
    %3913 = vmatprep.subr.bf16.mxu0 0
    %3914 = vmatpush1.bf16.xpose.msra.mxu0 0
    %3915 = vmatprep.subr.bf16.mxu0 0
    %3916 = vmatpush1.bf16.xpose.msra.mxu0 0
    %3917 = vmatprep.subr.bf16.mxu0 0
    %3918 = vmatpush1.bf16.xpose.msra.mxu0 0
    %3919 = vmatprep.subr.bf16.mxu0 0
    %3920 = vmatpush1.bf16.xpose.msra.mxu0 0
    %3921 = vmatprep.subr.bf16.mxu0 0
    %3922 = vmatpush1.bf16.xpose.msra.mxu0 0
    %3923 = vmatprep.subr.bf16.mxu0 0
    %3924 = vmatpush1.bf16.xpose.msra.mxu0 0
    %3925 = vmatprep.subr.bf16.mxu0 0
    %3926 = vmatpush1.bf16.xpose.msra.mxu0 0
    %3927 = vmatprep.subr.bf16.mxu0 0
    %3928 = vmatpush1.bf16.xpose.msra.mxu0 0
    %3929 = vmatprep.subr.bf16.mxu0 0
    %3930 = vmatpush1.bf16.xpose.msra.mxu0 0
    %3931 = vmatprep.subr.bf16.mxu0 0
    %3932 = vmatpush1.bf16.xpose.msra.mxu0 0
    %3933 = vmatprep.subr.bf16.mxu0 0
    %3934 = vmatpush1.bf16.xpose.msra.mxu0 0
    %3935 = vmatprep.subr.bf16.mxu0 0
    %3936 = vmatpush1.bf16.xpose.msra.mxu0 0
    %3937 = vmatprep.subr.bf16.mxu0 0
    %3938 = vmatpush1.bf16.xpose.msra.mxu0 0
    %3939 = vmatprep.subr.bf16.mxu0 0
    %3940 = vmatpush1.bf16.xpose.msra.mxu0 0
    %3941 = vmatprep.mubr.bf16.mxu0 0
    %3942 = vmatmul.mubr.bf16.gmra.mrb[0].mxu0 %v3904
    %v3943 = vpop.f32.mrb[0].mxu0
    %v3944 = vadd.f32 %v305, %v3943
    %v3945 = vpop.f32.mrb[0].mxu0
    %v3946 = vpop.f32.mrb[0].mxu0
    %v3947 = vpop.f32.mrb[0].mxu0
    %3948 = vdwg.mxu0
    %v3950 = vsel %vm1410, %v3161, 0
    %v3953 = vsel %vm1410, %v3461, 0
    %3955 = vmatprep.subr.bf16.mxu0 0
    %3956 = vmatpush1.bf16.xpose.msra.mxu0 %v3953
    %3957 = vmatprep.subr.bf16.mxu0 0
    %3958 = vmatpush1.bf16.xpose.msra.mxu0 0
    %3959 = vmatprep.subr.bf16.mxu0 0
    %3960 = vmatpush1.bf16.xpose.msra.mxu0 0
    %3961 = vmatprep.subr.bf16.mxu0 0
    %3962 = vmatpush1.bf16.xpose.msra.mxu0 0
    %3963 = vmatprep.subr.bf16.mxu0 0
    %3964 = vmatpush1.bf16.xpose.msra.mxu0 0
    %3965 = vmatprep.subr.bf16.mxu0 0
    %3966 = vmatpush1.bf16.xpose.msra.mxu0 0
    %3967 = vmatprep.subr.bf16.mxu0 0
    %3968 = vmatpush1.bf16.xpose.msra.mxu0 0
    %3969 = vmatprep.subr.bf16.mxu0 0
    %3970 = vmatpush1.bf16.xpose.msra.mxu0 0
    %3971 = vmatprep.subr.bf16.mxu0 0
    %3972 = vmatpush1.bf16.xpose.msra.mxu0 0
    %3973 = vmatprep.subr.bf16.mxu0 0
    %3974 = vmatpush1.bf16.xpose.msra.mxu0 0
    %3975 = vmatprep.subr.bf16.mxu0 0
    %3976 = vmatpush1.bf16.xpose.msra.mxu0 0
    %3977 = vmatprep.subr.bf16.mxu0 0
    %3978 = vmatpush1.bf16.xpose.msra.mxu0 0
    %3979 = vmatprep.subr.bf16.mxu0 0
    %3980 = vmatpush1.bf16.xpose.msra.mxu0 0
    %3981 = vmatprep.subr.bf16.mxu0 0
    %3982 = vmatpush1.bf16.xpose.msra.mxu0 0
    %3983 = vmatprep.subr.bf16.mxu0 0
    %3984 = vmatpush1.bf16.xpose.msra.mxu0 0
    %3985 = vmatprep.subr.bf16.mxu0 0
    %3986 = vmatpush1.bf16.xpose.msra.mxu0 0
    %3987 = vmatprep.mubr.bf16.mxu0 0
    %3988 = vmatmul.mubr.bf16.gmra.mrb[0].mxu0 %v3950
    %v3989 = vpop.f32.mrb[0].mxu0
    %v3990 = vadd.f32 %v305, %v3989
    %v3991 = vpop.f32.mrb[0].mxu0
    %v3992 = vpop.f32.mrb[0].mxu0
    %v3993 = vpop.f32.mrb[0].mxu0
    %3994 = vdwg.mxu0
    %v3996 = vsel %vm1410, %v3162, 0
    %v3999 = vsel %vm1410, %v3462, 0
    %4001 = vmatprep.subr.bf16.mxu0 0
    %4002 = vmatpush1.bf16.xpose.msra.mxu0 %v3999
    %4003 = vmatprep.subr.bf16.mxu0 0
    %4004 = vmatpush1.bf16.xpose.msra.mxu0 0
    %4005 = vmatprep.subr.bf16.mxu0 0
    %4006 = vmatpush1.bf16.xpose.msra.mxu0 0
    %4007 = vmatprep.subr.bf16.mxu0 0
    %4008 = vmatpush1.bf16.xpose.msra.mxu0 0
    %4009 = vmatprep.subr.bf16.mxu0 0
    %4010 = vmatpush1.bf16.xpose.msra.mxu0 0
    %4011 = vmatprep.subr.bf16.mxu0 0
    %4012 = vmatpush1.bf16.xpose.msra.mxu0 0
    %4013 = vmatprep.subr.bf16.mxu0 0
    %4014 = vmatpush1.bf16.xpose.msra.mxu0 0
    %4015 = vmatprep.subr.bf16.mxu0 0
    %4016 = vmatpush1.bf16.xpose.msra.mxu0 0
    %4017 = vmatprep.subr.bf16.mxu0 0
    %4018 = vmatpush1.bf16.xpose.msra.mxu0 0
    %4019 = vmatprep.subr.bf16.mxu0 0
    %4020 = vmatpush1.bf16.xpose.msra.mxu0 0
    %4021 = vmatprep.subr.bf16.mxu0 0
    %4022 = vmatpush1.bf16.xpose.msra.mxu0 0
    %4023 = vmatprep.subr.bf16.mxu0 0
    %4024 = vmatpush1.bf16.xpose.msra.mxu0 0
    %4025 = vmatprep.subr.bf16.mxu0 0
    %4026 = vmatpush1.bf16.xpose.msra.mxu0 0
    %4027 = vmatprep.subr.bf16.mxu0 0
    %4028 = vmatpush1.bf16.xpose.msra.mxu0 0
    %4029 = vmatprep.subr.bf16.mxu0 0
    %4030 = vmatpush1.bf16.xpose.msra.mxu0 0
    %4031 = vmatprep.subr.bf16.mxu0 0
    %4032 = vmatpush1.bf16.xpose.msra.mxu0 0
    %4033 = vmatprep.mubr.bf16.mxu0 0
    %4034 = vmatmul.mubr.bf16.gmra.mrb[0].mxu0 %v3996
    %v4035 = vpop.f32.mrb[0].mxu0
    %v4036 = vadd.f32 %v305, %v4035
    %v4037 = vpop.f32.mrb[0].mxu0
    %v4038 = vpop.f32.mrb[0].mxu0
    %v4039 = vpop.f32.mrb[0].mxu0
    %4040 = vdwg.mxu0
    %v4042 = vsel %vm1410, %v3163, 0
    %v4045 = vsel %vm1410, %v3463, 0
    %4047 = vmatprep.subr.bf16.mxu0 0
    %4048 = vmatpush1.bf16.xpose.msra.mxu0 %v4045
    %4049 = vmatprep.subr.bf16.mxu0 0
    %4050 = vmatpush1.bf16.xpose.msra.mxu0 0
    %4051 = vmatprep.subr.bf16.mxu0 0
    %4052 = vmatpush1.bf16.xpose.msra.mxu0 0
    %4053 = vmatprep.subr.bf16.mxu0 0
    %4054 = vmatpush1.bf16.xpose.msra.mxu0 0
    %4055 = vmatprep.subr.bf16.mxu0 0
    %4056 = vmatpush1.bf16.xpose.msra.mxu0 0
    %4057 = vmatprep.subr.bf16.mxu0 0
    %4058 = vmatpush1.bf16.xpose.msra.mxu0 0
    %4059 = vmatprep.subr.bf16.mxu0 0
    %4060 = vmatpush1.bf16.xpose.msra.mxu0 0
    %4061 = vmatprep.subr.bf16.mxu0 0
    %4062 = vmatpush1.bf16.xpose.msra.mxu0 0
    %4063 = vmatprep.subr.bf16.mxu0 0
    %4064 = vmatpush1.bf16.xpose.msra.mxu0 0
    %4065 = vmatprep.subr.bf16.mxu0 0
    %4066 = vmatpush1.bf16.xpose.msra.mxu0 0
    %4067 = vmatprep.subr.bf16.mxu0 0
    %4068 = vmatpush1.bf16.xpose.msra.mxu0 0
    %4069 = vmatprep.subr.bf16.mxu0 0
    %4070 = vmatpush1.bf16.xpose.msra.mxu0 0
    %4071 = vmatprep.subr.bf16.mxu0 0
    %4072 = vmatpush1.bf16.xpose.msra.mxu0 0
    %4073 = vmatprep.subr.bf16.mxu0 0
    %4074 = vmatpush1.bf16.xpose.msra.mxu0 0
    %4075 = vmatprep.subr.bf16.mxu0 0
    %4076 = vmatpush1.bf16.xpose.msra.mxu0 0
    %4077 = vmatprep.subr.bf16.mxu0 0
    %4078 = vmatpush1.bf16.xpose.msra.mxu0 0
    %4079 = vmatprep.mubr.bf16.mxu0 0
    %4080 = vmatmul.mubr.bf16.gmra.mrb[0].mxu0 %v4042
    %v4081 = vpop.f32.mrb[0].mxu0
    %v4082 = vadd.f32 %v305, %v4081
    %v4083 = vpop.f32.mrb[0].mxu0
    %v4084 = vpop.f32.mrb[0].mxu0
    %v4085 = vpop.f32.mrb[0].mxu0
    %4086 = vdwg.mxu0
    %v4088 = vsel %vm1410, %v3164, 0
    %v4091 = vsel %vm1410, %v3464, 0
    %4093 = vmatprep.subr.bf16.mxu0 0
    %4094 = vmatpush1.bf16.xpose.msra.mxu0 %v4091
    %4095 = vmatprep.subr.bf16.mxu0 0
    %4096 = vmatpush1.bf16.xpose.msra.mxu0 0
    %4097 = vmatprep.subr.bf16.mxu0 0
    %4098 = vmatpush1.bf16.xpose.msra.mxu0 0
    %4099 = vmatprep.subr.bf16.mxu0 0
    %4100 = vmatpush1.bf16.xpose.msra.mxu0 0
    %4101 = vmatprep.subr.bf16.mxu0 0
    %4102 = vmatpush1.bf16.xpose.msra.mxu0 0
    %4103 = vmatprep.subr.bf16.mxu0 0
    %4104 = vmatpush1.bf16.xpose.msra.mxu0 0
    %4105 = vmatprep.subr.bf16.mxu0 0
    %4106 = vmatpush1.bf16.xpose.msra.mxu0 0
    %4107 = vmatprep.subr.bf16.mxu0 0
    %4108 = vmatpush1.bf16.xpose.msra.mxu0 0
    %4109 = vmatprep.subr.bf16.mxu0 0
    %4110 = vmatpush1.bf16.xpose.msra.mxu0 0
    %4111 = vmatprep.subr.bf16.mxu0 0
    %4112 = vmatpush1.bf16.xpose.msra.mxu0 0
    %4113 = vmatprep.subr.bf16.mxu0 0
    %4114 = vmatpush1.bf16.xpose.msra.mxu0 0
    %4115 = vmatprep.subr.bf16.mxu0 0
    %4116 = vmatpush1.bf16.xpose.msra.mxu0 0
    %4117 = vmatprep.subr.bf16.mxu0 0
    %4118 = vmatpush1.bf16.xpose.msra.mxu0 0
    %4119 = vmatprep.subr.bf16.mxu0 0
    %4120 = vmatpush1.bf16.xpose.msra.mxu0 0
    %4121 = vmatprep.subr.bf16.mxu0 0
    %4122 = vmatpush1.bf16.xpose.msra.mxu0 0
    %4123 = vmatprep.subr.bf16.mxu0 0
    %4124 = vmatpush1.bf16.xpose.msra.mxu0 0
    %4125 = vmatprep.mubr.bf16.mxu0 0
    %4126 = vmatmul.mubr.bf16.gmra.mrb[0].mxu0 %v4088
    %v4127 = vpop.f32.mrb[0].mxu0
    %v4128 = vadd.f32 %v305, %v4127
    %v4129 = vpop.f32.mrb[0].mxu0
    %v4130 = vpop.f32.mrb[0].mxu0
    %v4131 = vpop.f32.mrb[0].mxu0
    %4132 = vdwg.mxu0
    %v4133 = vsel %vm1410, %v3806, -inf
    %4134 = vmax.xlane.f32.xlu0 %v4133
    %v4135 = vpop.xlane.xlu0 %4134
    %v4136 = vsel %vm1410, %v3852, -inf
    %4137 = vmax.xlane.f32.xlu0 %v4136
    %v4138 = vpop.xlane.xlu0 %4137
    %v4139 = vsel %vm1410, %v3898, -inf
    %4140 = vmax.xlane.f32.xlu0 %v4139
    %v4141 = vpop.xlane.xlu0 %4140
    %v4142 = vsel %vm1410, %v3944, -inf
    %4143 = vmax.xlane.f32.xlu0 %v4142
    %v4144 = vpop.xlane.xlu0 %4143
    %v4145 = vsel %vm1410, %v3990, -inf
    %4146 = vmax.xlane.f32.xlu0 %v4145
    %v4147 = vpop.xlane.xlu0 %4146
    %v4148 = vsel %vm1410, %v4036, -inf
    %4149 = vmax.xlane.f32.xlu0 %v4148
    %v4150 = vpop.xlane.xlu0 %4149
    %v4151 = vsel %vm1410, %v4082, -inf
    %4152 = vmax.xlane.f32.xlu0 %v4151
    %v4153 = vpop.xlane.xlu0 %4152
    %v4154 = vsel %vm1410, %v4128, -inf
    %4155 = vmax.xlane.f32.xlu0 %v4154
    %v4156 = vpop.xlane.xlu0 %4155
    %v4157 = vsub.f32 %v3806, %v4135
    %v4158 = vsub.f32 %v3852, %v4138
    %v4159 = vsub.f32 %v3898, %v4141
    %v4160 = vsub.f32 %v3944, %v4144
    %v4161 = vsub.f32 %v3990, %v4147
    %v4162 = vsub.f32 %v4036, %v4150
    %v4163 = vsub.f32 %v4082, %v4153
    %v4164 = vsub.f32 %v4128, %v4156
    %v4165 = vmul.f32 %v4157, 1.442695
    %v4166 = vpow.pop %v4165
    %v4167 = vmul.f32 %v4158, 1.442695
    %v4168 = vpow.pop %v4167
    %v4169 = vmul.f32 %v4159, 1.442695
    %v4170 = vpow.pop %v4169
    %v4171 = vmul.f32 %v4160, 1.442695
    %v4172 = vpow.pop %v4171
    %v4173 = vmul.f32 %v4161, 1.442695
    %v4174 = vpow.pop %v4173
    %v4175 = vmul.f32 %v4162, 1.442695
    %v4176 = vpow.pop %v4175
    %v4177 = vmul.f32 %v4163, 1.442695
    %v4178 = vpow.pop %v4177
    %v4179 = vmul.f32 %v4164, 1.442695
    %v4180 = vpow.pop %v4179
    %v4181 = vsel %vm1410, %v4166, 0.0
    %4182 = vadd.xlane.f32.xlu0 %v4181
    %v4183 = vpop.xlane.xlu0 %4182
    %v4184 = vsel %vm1410, %v4168, 0.0
    %4185 = vadd.xlane.f32.xlu0 %v4184
    %v4186 = vpop.xlane.xlu0 %4185
    %v4187 = vsel %vm1410, %v4170, 0.0
    %4188 = vadd.xlane.f32.xlu0 %v4187
    %v4189 = vpop.xlane.xlu0 %4188
    %v4190 = vsel %vm1410, %v4172, 0.0
    %4191 = vadd.xlane.f32.xlu0 %v4190
    %v4192 = vpop.xlane.xlu0 %4191
    %v4193 = vsel %vm1410, %v4174, 0.0
    %4194 = vadd.xlane.f32.xlu0 %v4193
    %v4195 = vpop.xlane.xlu0 %4194
    %v4196 = vsel %vm1410, %v4176, 0.0
    %4197 = vadd.xlane.f32.xlu0 %v4196
    %v4198 = vpop.xlane.xlu0 %4197
    %v4199 = vsel %vm1410, %v4178, 0.0
    %4200 = vadd.xlane.f32.xlu0 %v4199
    %v4201 = vpop.xlane.xlu0 %4200
    %v4202 = vsel %vm1410, %v4180, 0.0
    %4203 = vadd.xlane.f32.xlu0 %v4202
    %v4204 = vpop.xlane.xlu0 %4203
    %v4205 = vrcp.pop %v4183
    %v4206 = vrcp.pop %v4186
    %v4207 = vrcp.pop %v4189
    %v4208 = vrcp.pop %v4192
    %v4209 = vrcp.pop %v4195
    %v4210 = vrcp.pop %v4198
    %v4211 = vrcp.pop %v4201
    %v4212 = vrcp.pop %v4204
    %v4213 = vmul.f32 %v4166, %v4205
    %v4214 = vmul.f32 %v4168, %v4206
    %v4215 = vmul.f32 %v4170, %v4207
    %v4216 = vmul.f32 %v4172, %v4208
    %v4217 = vmul.f32 %v4174, %v4209
    %v4218 = vmul.f32 %v4176, %v4210
    %v4219 = vmul.f32 %v4178, %v4211
    %v4220 = vmul.f32 %v4180, %v4212
    %v4221 = vpack.c.bf16 %v4213, %v4213
    %v4222 = vpack.c.bf16 %v4214, %v4214
    %v4223 = vpack.c.bf16 %v4215, %v4215
    %v4224 = vpack.c.bf16 %v4216, %v4216
    %v4225 = vpack.c.bf16 %v4217, %v4217
    %v4226 = vpack.c.bf16 %v4218, %v4218
    %v4227 = vpack.c.bf16 %v4219, %v4219
    %v4228 = vpack.c.bf16 %v4220, %v4220
    %v4230 = vsel %vm1410, %v4221, 0
    %v4233 = vsel %vm1878, %v3757, 0
    %4235 = vmatprep.subr.bf16.mxu0 0
    %4236 = vmatpush1.bf16.msra.mxu0 %v4233
    %4237 = vmatprep.subr.bf16.mxu0 0
    %4238 = vmatpush1.bf16.msra.mxu0 0
    %4239 = vmatprep.subr.bf16.mxu0 0
    %4240 = vmatpush1.bf16.msra.mxu0 0
    %4241 = vmatprep.subr.bf16.mxu0 0
    %4242 = vmatpush1.bf16.msra.mxu0 0
    %4243 = vmatprep.subr.bf16.mxu0 0
    %4244 = vmatpush1.bf16.msra.mxu0 0
    %4245 = vmatprep.subr.bf16.mxu0 0
    %4246 = vmatpush1.bf16.msra.mxu0 0
    %4247 = vmatprep.subr.bf16.mxu0 0
    %4248 = vmatpush1.bf16.msra.mxu0 0
    %4249 = vmatprep.subr.bf16.mxu0 0
    %4250 = vmatpush1.bf16.msra.mxu0 0
    %4251 = vmatprep.subr.bf16.mxu0 0
    %4252 = vmatpush1.bf16.msra.mxu0 0
    %4253 = vmatprep.subr.bf16.mxu0 0
    %4254 = vmatpush1.bf16.msra.mxu0 0
    %4255 = vmatprep.subr.bf16.mxu0 0
    %4256 = vmatpush1.bf16.msra.mxu0 0
    %4257 = vmatprep.subr.bf16.mxu0 0
    %4258 = vmatpush1.bf16.msra.mxu0 0
    %4259 = vmatprep.subr.bf16.mxu0 0
    %4260 = vmatpush1.bf16.msra.mxu0 0
    %4261 = vmatprep.subr.bf16.mxu0 0
    %4262 = vmatpush1.bf16.msra.mxu0 0
    %4263 = vmatprep.subr.bf16.mxu0 0
    %4264 = vmatpush1.bf16.msra.mxu0 0
    %4265 = vmatprep.subr.bf16.mxu0 0
    %4266 = vmatpush1.bf16.msra.mxu0 0
    %4267 = vmatprep.mubr.bf16.mxu0 0
    %4268 = vmatmul.mubr.bf16.gmra.mrb[0].mxu0 %v4230
    %v4269 = vpop.f32.mrb[0].mxu0
    %v4270 = vadd.f32 0.0, %v4269
    %v4271 = vpop.f32.mrb[0].mxu0
    %v4272 = vpop.f32.mrb[0].mxu0
    %v4273 = vpop.f32.mrb[0].mxu0
    %4274 = vdwg.mxu0
    %v4276 = vsel %vm1410, %v4222, 0
    %v4279 = vsel %vm1878, %v3758, 0
    %4281 = vmatprep.subr.bf16.mxu0 0
    %4282 = vmatpush1.bf16.msra.mxu0 %v4279
    %4283 = vmatprep.subr.bf16.mxu0 0
    %4284 = vmatpush1.bf16.msra.mxu0 0
    %4285 = vmatprep.subr.bf16.mxu0 0
    %4286 = vmatpush1.bf16.msra.mxu0 0
    %4287 = vmatprep.subr.bf16.mxu0 0
    %4288 = vmatpush1.bf16.msra.mxu0 0
    %4289 = vmatprep.subr.bf16.mxu0 0
    %4290 = vmatpush1.bf16.msra.mxu0 0
    %4291 = vmatprep.subr.bf16.mxu0 0
    %4292 = vmatpush1.bf16.msra.mxu0 0
    %4293 = vmatprep.subr.bf16.mxu0 0
    %4294 = vmatpush1.bf16.msra.mxu0 0
    %4295 = vmatprep.subr.bf16.mxu0 0
    %4296 = vmatpush1.bf16.msra.mxu0 0
    %4297 = vmatprep.subr.bf16.mxu0 0
    %4298 = vmatpush1.bf16.msra.mxu0 0
    %4299 = vmatprep.subr.bf16.mxu0 0
    %4300 = vmatpush1.bf16.msra.mxu0 0
    %4301 = vmatprep.subr.bf16.mxu0 0
    %4302 = vmatpush1.bf16.msra.mxu0 0
    %4303 = vmatprep.subr.bf16.mxu0 0
    %4304 = vmatpush1.bf16.msra.mxu0 0
    %4305 = vmatprep.subr.bf16.mxu0 0
    %4306 = vmatpush1.bf16.msra.mxu0 0
    %4307 = vmatprep.subr.bf16.mxu0 0
    %4308 = vmatpush1.bf16.msra.mxu0 0
    %4309 = vmatprep.subr.bf16.mxu0 0
    %4310 = vmatpush1.bf16.msra.mxu0 0
    %4311 = vmatprep.subr.bf16.mxu0 0
    %4312 = vmatpush1.bf16.msra.mxu0 0
    %4313 = vmatprep.mubr.bf16.mxu0 0
    %4314 = vmatmul.mubr.bf16.gmra.mrb[0].mxu0 %v4276
    %v4315 = vpop.f32.mrb[0].mxu0
    %v4316 = vadd.f32 0.0, %v4315
    %v4317 = vpop.f32.mrb[0].mxu0
    %v4318 = vpop.f32.mrb[0].mxu0
    %v4319 = vpop.f32.mrb[0].mxu0
    %4320 = vdwg.mxu0
    %v4322 = vsel %vm1410, %v4223, 0
    %v4325 = vsel %vm1878, %v3759, 0
    %4327 = vmatprep.subr.bf16.mxu0 0
    %4328 = vmatpush1.bf16.msra.mxu0 %v4325
    %4329 = vmatprep.subr.bf16.mxu0 0
    %4330 = vmatpush1.bf16.msra.mxu0 0
    %4331 = vmatprep.subr.bf16.mxu0 0
    %4332 = vmatpush1.bf16.msra.mxu0 0
    %4333 = vmatprep.subr.bf16.mxu0 0
    %4334 = vmatpush1.bf16.msra.mxu0 0
    %4335 = vmatprep.subr.bf16.mxu0 0
    %4336 = vmatpush1.bf16.msra.mxu0 0
    %4337 = vmatprep.subr.bf16.mxu0 0
    %4338 = vmatpush1.bf16.msra.mxu0 0
    %4339 = vmatprep.subr.bf16.mxu0 0
    %4340 = vmatpush1.bf16.msra.mxu0 0
    %4341 = vmatprep.subr.bf16.mxu0 0
    %4342 = vmatpush1.bf16.msra.mxu0 0
    %4343 = vmatprep.subr.bf16.mxu0 0
    %4344 = vmatpush1.bf16.msra.mxu0 0
    %4345 = vmatprep.subr.bf16.mxu0 0
    %4346 = vmatpush1.bf16.msra.mxu0 0
    %4347 = vmatprep.subr.bf16.mxu0 0
    %4348 = vmatpush1.bf16.msra.mxu0 0
    %4349 = vmatprep.subr.bf16.mxu0 0
    %4350 = vmatpush1.bf16.msra.mxu0 0
    %4351 = vmatprep.subr.bf16.mxu0 0
    %4352 = vmatpush1.bf16.msra.mxu0 0
    %4353 = vmatprep.subr.bf16.mxu0 0
    %4354 = vmatpush1.bf16.msra.mxu0 0
    %4355 = vmatprep.subr.bf16.mxu0 0
    %4356 = vmatpush1.bf16.msra.mxu0 0
    %4357 = vmatprep.subr.bf16.mxu0 0
    %4358 = vmatpush1.bf16.msra.mxu0 0
    %4359 = vmatprep.mubr.bf16.mxu0 0
    %4360 = vmatmul.mubr.bf16.gmra.mrb[0].mxu0 %v4322
    %v4361 = vpop.f32.mrb[0].mxu0
    %v4362 = vadd.f32 0.0, %v4361
    %v4363 = vpop.f32.mrb[0].mxu0
    %v4364 = vpop.f32.mrb[0].mxu0
    %v4365 = vpop.f32.mrb[0].mxu0
    %4366 = vdwg.mxu0
    %v4368 = vsel %vm1410, %v4224, 0
    %v4371 = vsel %vm1878, %v3760, 0
    %4373 = vmatprep.subr.bf16.mxu0 0
    %4374 = vmatpush1.bf16.msra.mxu0 %v4371
    %4375 = vmatprep.subr.bf16.mxu0 0
    %4376 = vmatpush1.bf16.msra.mxu0 0
    %4377 = vmatprep.subr.bf16.mxu0 0
    %4378 = vmatpush1.bf16.msra.mxu0 0
    %4379 = vmatprep.subr.bf16.mxu0 0
    %4380 = vmatpush1.bf16.msra.mxu0 0
    %4381 = vmatprep.subr.bf16.mxu0 0
    %4382 = vmatpush1.bf16.msra.mxu0 0
    %4383 = vmatprep.subr.bf16.mxu0 0
    %4384 = vmatpush1.bf16.msra.mxu0 0
    %4385 = vmatprep.subr.bf16.mxu0 0
    %4386 = vmatpush1.bf16.msra.mxu0 0
    %4387 = vmatprep.subr.bf16.mxu0 0
    %4388 = vmatpush1.bf16.msra.mxu0 0
    %4389 = vmatprep.subr.bf16.mxu0 0
    %4390 = vmatpush1.bf16.msra.mxu0 0
    %4391 = vmatprep.subr.bf16.mxu0 0
    %4392 = vmatpush1.bf16.msra.mxu0 0
    %4393 = vmatprep.subr.bf16.mxu0 0
    %4394 = vmatpush1.bf16.msra.mxu0 0
    %4395 = vmatprep.subr.bf16.mxu0 0
    %4396 = vmatpush1.bf16.msra.mxu0 0
    %4397 = vmatprep.subr.bf16.mxu0 0
    %4398 = vmatpush1.bf16.msra.mxu0 0
    %4399 = vmatprep.subr.bf16.mxu0 0
    %4400 = vmatpush1.bf16.msra.mxu0 0
    %4401 = vmatprep.subr.bf16.mxu0 0
    %4402 = vmatpush1.bf16.msra.mxu0 0
    %4403 = vmatprep.subr.bf16.mxu0 0
    %4404 = vmatpush1.bf16.msra.mxu0 0
    %4405 = vmatprep.mubr.bf16.mxu0 0
    %4406 = vmatmul.mubr.bf16.gmra.mrb[0].mxu0 %v4368
    %v4407 = vpop.f32.mrb[0].mxu0
    %v4408 = vadd.f32 0.0, %v4407
    %v4409 = vpop.f32.mrb[0].mxu0
    %v4410 = vpop.f32.mrb[0].mxu0
    %v4411 = vpop.f32.mrb[0].mxu0
    %4412 = vdwg.mxu0
    %v4414 = vsel %vm1410, %v4225, 0
    %v4417 = vsel %vm1878, %v3761, 0
    %4419 = vmatprep.subr.bf16.mxu0 0
    %4420 = vmatpush1.bf16.msra.mxu0 %v4417
    %4421 = vmatprep.subr.bf16.mxu0 0
    %4422 = vmatpush1.bf16.msra.mxu0 0
    %4423 = vmatprep.subr.bf16.mxu0 0
    %4424 = vmatpush1.bf16.msra.mxu0 0
    %4425 = vmatprep.subr.bf16.mxu0 0
    %4426 = vmatpush1.bf16.msra.mxu0 0
    %4427 = vmatprep.subr.bf16.mxu0 0
    %4428 = vmatpush1.bf16.msra.mxu0 0
    %4429 = vmatprep.subr.bf16.mxu0 0
    %4430 = vmatpush1.bf16.msra.mxu0 0
    %4431 = vmatprep.subr.bf16.mxu0 0
    %4432 = vmatpush1.bf16.msra.mxu0 0
    %4433 = vmatprep.subr.bf16.mxu0 0
    %4434 = vmatpush1.bf16.msra.mxu0 0
    %4435 = vmatprep.subr.bf16.mxu0 0
    %4436 = vmatpush1.bf16.msra.mxu0 0
    %4437 = vmatprep.subr.bf16.mxu0 0
    %4438 = vmatpush1.bf16.msra.mxu0 0
    %4439 = vmatprep.subr.bf16.mxu0 0
    %4440 = vmatpush1.bf16.msra.mxu0 0
    %4441 = vmatprep.subr.bf16.mxu0 0
    %4442 = vmatpush1.bf16.msra.mxu0 0
    %4443 = vmatprep.subr.bf16.mxu0 0
    %4444 = vmatpush1.bf16.msra.mxu0 0
    %4445 = vmatprep.subr.bf16.mxu0 0
    %4446 = vmatpush1.bf16.msra.mxu0 0
    %4447 = vmatprep.subr.bf16.mxu0 0
    %4448 = vmatpush1.bf16.msra.mxu0 0
    %4449 = vmatprep.subr.bf16.mxu0 0
    %4450 = vmatpush1.bf16.msra.mxu0 0
    %4451 = vmatprep.mubr.bf16.mxu0 0
    %4452 = vmatmul.mubr.bf16.gmra.mrb[0].mxu0 %v4414
    %v4453 = vpop.f32.mrb[0].mxu0
    %v4454 = vadd.f32 0.0, %v4453
    %v4455 = vpop.f32.mrb[0].mxu0
    %v4456 = vpop.f32.mrb[0].mxu0
    %v4457 = vpop.f32.mrb[0].mxu0
    %4458 = vdwg.mxu0
    %v4460 = vsel %vm1410, %v4226, 0
    %v4463 = vsel %vm1878, %v3762, 0
    %4465 = vmatprep.subr.bf16.mxu0 0
    %4466 = vmatpush1.bf16.msra.mxu0 %v4463
    %4467 = vmatprep.subr.bf16.mxu0 0
    %4468 = vmatpush1.bf16.msra.mxu0 0
    %4469 = vmatprep.subr.bf16.mxu0 0
    %4470 = vmatpush1.bf16.msra.mxu0 0
    %4471 = vmatprep.subr.bf16.mxu0 0
    %4472 = vmatpush1.bf16.msra.mxu0 0
    %4473 = vmatprep.subr.bf16.mxu0 0
    %4474 = vmatpush1.bf16.msra.mxu0 0
    %4475 = vmatprep.subr.bf16.mxu0 0
    %4476 = vmatpush1.bf16.msra.mxu0 0
    %4477 = vmatprep.subr.bf16.mxu0 0
    %4478 = vmatpush1.bf16.msra.mxu0 0
    %4479 = vmatprep.subr.bf16.mxu0 0
    %4480 = vmatpush1.bf16.msra.mxu0 0
    %4481 = vmatprep.subr.bf16.mxu0 0
    %4482 = vmatpush1.bf16.msra.mxu0 0
    %4483 = vmatprep.subr.bf16.mxu0 0
    %4484 = vmatpush1.bf16.msra.mxu0 0
    %4485 = vmatprep.subr.bf16.mxu0 0
    %4486 = vmatpush1.bf16.msra.mxu0 0
    %4487 = vmatprep.subr.bf16.mxu0 0
    %4488 = vmatpush1.bf16.msra.mxu0 0
    %4489 = vmatprep.subr.bf16.mxu0 0
    %4490 = vmatpush1.bf16.msra.mxu0 0
    %4491 = vmatprep.subr.bf16.mxu0 0
    %4492 = vmatpush1.bf16.msra.mxu0 0
    %4493 = vmatprep.subr.bf16.mxu0 0
    %4494 = vmatpush1.bf16.msra.mxu0 0
    %4495 = vmatprep.subr.bf16.mxu0 0
    %4496 = vmatpush1.bf16.msra.mxu0 0
    %4497 = vmatprep.mubr.bf16.mxu0 0
    %4498 = vmatmul.mubr.bf16.gmra.mrb[0].mxu0 %v4460
    %v4499 = vpop.f32.mrb[0].mxu0
    %v4500 = vadd.f32 0.0, %v4499
    %v4501 = vpop.f32.mrb[0].mxu0
    %v4502 = vpop.f32.mrb[0].mxu0
    %v4503 = vpop.f32.mrb[0].mxu0
    %4504 = vdwg.mxu0
    %v4506 = vsel %vm1410, %v4227, 0
    %v4509 = vsel %vm1878, %v3763, 0
    %4511 = vmatprep.subr.bf16.mxu0 0
    %4512 = vmatpush1.bf16.msra.mxu0 %v4509
    %4513 = vmatprep.subr.bf16.mxu0 0
    %4514 = vmatpush1.bf16.msra.mxu0 0
    %4515 = vmatprep.subr.bf16.mxu0 0
    %4516 = vmatpush1.bf16.msra.mxu0 0
    %4517 = vmatprep.subr.bf16.mxu0 0
    %4518 = vmatpush1.bf16.msra.mxu0 0
    %4519 = vmatprep.subr.bf16.mxu0 0
    %4520 = vmatpush1.bf16.msra.mxu0 0
    %4521 = vmatprep.subr.bf16.mxu0 0
    %4522 = vmatpush1.bf16.msra.mxu0 0
    %4523 = vmatprep.subr.bf16.mxu0 0
    %4524 = vmatpush1.bf16.msra.mxu0 0
    %4525 = vmatprep.subr.bf16.mxu0 0
    %4526 = vmatpush1.bf16.msra.mxu0 0
    %4527 = vmatprep.subr.bf16.mxu0 0
    %4528 = vmatpush1.bf16.msra.mxu0 0
    %4529 = vmatprep.subr.bf16.mxu0 0
    %4530 = vmatpush1.bf16.msra.mxu0 0
    %4531 = vmatprep.subr.bf16.mxu0 0
    %4532 = vmatpush1.bf16.msra.mxu0 0
    %4533 = vmatprep.subr.bf16.mxu0 0
    %4534 = vmatpush1.bf16.msra.mxu0 0
    %4535 = vmatprep.subr.bf16.mxu0 0
    %4536 = vmatpush1.bf16.msra.mxu0 0
    %4537 = vmatprep.subr.bf16.mxu0 0
    %4538 = vmatpush1.bf16.msra.mxu0 0
    %4539 = vmatprep.subr.bf16.mxu0 0
    %4540 = vmatpush1.bf16.msra.mxu0 0
    %4541 = vmatprep.subr.bf16.mxu0 0
    %4542 = vmatpush1.bf16.msra.mxu0 0
    %4543 = vmatprep.mubr.bf16.mxu0 0
    %4544 = vmatmul.mubr.bf16.gmra.mrb[0].mxu0 %v4506
    %v4545 = vpop.f32.mrb[0].mxu0
    %v4546 = vadd.f32 0.0, %v4545
    %v4547 = vpop.f32.mrb[0].mxu0
    %v4548 = vpop.f32.mrb[0].mxu0
    %v4549 = vpop.f32.mrb[0].mxu0
    %4550 = vdwg.mxu0
    %v4552 = vsel %vm1410, %v4228, 0
    %v4555 = vsel %vm1878, %v3764, 0
    %4557 = vmatprep.subr.bf16.mxu0 0
    %4558 = vmatpush1.bf16.msra.mxu0 %v4555
    %4559 = vmatprep.subr.bf16.mxu0 0
    %4560 = vmatpush1.bf16.msra.mxu0 0
    %4561 = vmatprep.subr.bf16.mxu0 0
    %4562 = vmatpush1.bf16.msra.mxu0 0
    %4563 = vmatprep.subr.bf16.mxu0 0
    %4564 = vmatpush1.bf16.msra.mxu0 0
    %4565 = vmatprep.subr.bf16.mxu0 0
    %4566 = vmatpush1.bf16.msra.mxu0 0
    %4567 = vmatprep.subr.bf16.mxu0 0
    %4568 = vmatpush1.bf16.msra.mxu0 0
    %4569 = vmatprep.subr.bf16.mxu0 0
    %4570 = vmatpush1.bf16.msra.mxu0 0
    %4571 = vmatprep.subr.bf16.mxu0 0
    %4572 = vmatpush1.bf16.msra.mxu0 0
    %4573 = vmatprep.subr.bf16.mxu0 0
    %4574 = vmatpush1.bf16.msra.mxu0 0
    %4575 = vmatprep.subr.bf16.mxu0 0
    %4576 = vmatpush1.bf16.msra.mxu0 0
    %4577 = vmatprep.subr.bf16.mxu0 0
    %4578 = vmatpush1.bf16.msra.mxu0 0
    %4579 = vmatprep.subr.bf16.mxu0 0
    %4580 = vmatpush1.bf16.msra.mxu0 0
    %4581 = vmatprep.subr.bf16.mxu0 0
    %4582 = vmatpush1.bf16.msra.mxu0 0
    %4583 = vmatprep.subr.bf16.mxu0 0
    %4584 = vmatpush1.bf16.msra.mxu0 0
    %4585 = vmatprep.subr.bf16.mxu0 0
    %4586 = vmatpush1.bf16.msra.mxu0 0
    %4587 = vmatprep.subr.bf16.mxu0 0
    %4588 = vmatpush1.bf16.msra.mxu0 0
    %4589 = vmatprep.mubr.bf16.mxu0 0
    %4590 = vmatmul.mubr.bf16.gmra.mrb[0].mxu0 %v4552
    %v4591 = vpop.f32.mrb[0].mxu0
    %v4592 = vadd.f32 0.0, %v4591
    %v4593 = vpop.f32.mrb[0].mxu0
    %v4594 = vpop.f32.mrb[0].mxu0
    %v4595 = vpop.f32.mrb[0].mxu0
    %4596 = vdwg.mxu0
    %v4597 = vcombine.low %v4270, %v4362
    %v4598 = vcombine.high %v4270, %v4362
    %v4600 = vunpack.c.l.s4 1983009808
    %v4601 = vunpack.c.0.s8 %v4600
    %v4602 = vlaneseq
    %v4603 = vshrl.u32 %v4602, 7
    %v4604 = vsub.s32 %v4601, %v4603
    %v4605 = vrot.slane %v4597, %v4604
    %v4607 = vunpack.c.l.s4 1983009808
    %v4608 = vunpack.c.0.s8 %v4607
    %v4609 = vlaneseq
    %v4610 = vshrl.u32 %v4609, 7
    %v4611 = vsub.s32 %v4608, %v4610
    %v4612 = vrot.slane %v4598, %v4611
    %v4613 = vcombine.low %v4316, %v4408
    %v4614 = vcombine.high %v4316, %v4408
    %v4616 = vunpack.c.l.s4 1983009808
    %v4617 = vunpack.c.0.s8 %v4616
    %v4618 = vlaneseq
    %v4619 = vshrl.u32 %v4618, 7
    %v4620 = vsub.s32 %v4617, %v4619
    %v4621 = vrot.slane %v4613, %v4620
    %v4623 = vunpack.c.l.s4 1983009808
    %v4624 = vunpack.c.0.s8 %v4623
    %v4625 = vlaneseq
    %v4626 = vshrl.u32 %v4625, 7
    %v4627 = vsub.s32 %v4624, %v4626
    %v4628 = vrot.slane %v4614, %v4627
    %v4629 = vcombine.low %v4605, %v4621
    %v4630 = vcombine.high %v4605, %v4621
    %v4632 = vunpack.c.l.s4 1934713408
    %v4633 = vunpack.c.0.s8 %v4632
    %v4634 = vlaneseq
    %v4635 = vshrl.u32 %v4634, 7
    %v4636 = vsub.s32 %v4633, %v4635
    %v4637 = vrot.slane %v4629, %v4636
    %v4639 = vunpack.c.l.s4 1934713408
    %v4640 = vunpack.c.0.s8 %v4639
    %v4641 = vlaneseq
    %v4642 = vshrl.u32 %v4641, 7
    %v4643 = vsub.s32 %v4640, %v4642
    %v4644 = vrot.slane %v4630, %v4643
    %v4645 = vcombine.low %v4612, %v4628
    %v4646 = vcombine.high %v4612, %v4628
    %v4648 = vunpack.c.l.s4 1934713408
    %v4649 = vunpack.c.0.s8 %v4648
    %v4650 = vlaneseq
    %v4651 = vshrl.u32 %v4650, 7
    %v4652 = vsub.s32 %v4649, %v4651
    %v4653 = vrot.slane %v4645, %v4652
    %v4655 = vunpack.c.l.s4 1934713408
    %v4656 = vunpack.c.0.s8 %v4655
    %v4657 = vlaneseq
    %v4658 = vshrl.u32 %v4657, 7
    %v4659 = vsub.s32 %v4656, %v4658
    %v4660 = vrot.slane %v4646, %v4659
    %v4661 = vcombine.high %v4637, 0.0
    %v4662 = vcombine.high %v4644, 0.0
    %v4663 = vcombine.high %v4653, 0.0
    %v4664 = vcombine.high %v4660, 0.0
    %v4665 = vcombine.low %v4454, %v4546
    %v4666 = vcombine.high %v4454, %v4546
    %v4668 = vunpack.c.l.s4 1983009808
    %v4669 = vunpack.c.0.s8 %v4668
    %v4670 = vlaneseq
    %v4671 = vshrl.u32 %v4670, 7
    %v4672 = vsub.s32 %v4669, %v4671
    %v4673 = vrot.slane %v4665, %v4672
    %v4675 = vunpack.c.l.s4 1983009808
    %v4676 = vunpack.c.0.s8 %v4675
    %v4677 = vlaneseq
    %v4678 = vshrl.u32 %v4677, 7
    %v4679 = vsub.s32 %v4676, %v4678
    %v4680 = vrot.slane %v4666, %v4679
    %v4681 = vcombine.low %v4500, %v4592
    %v4682 = vcombine.high %v4500, %v4592
    %v4684 = vunpack.c.l.s4 1983009808
    %v4685 = vunpack.c.0.s8 %v4684
    %v4686 = vlaneseq
    %v4687 = vshrl.u32 %v4686, 7
    %v4688 = vsub.s32 %v4685, %v4687
    %v4689 = vrot.slane %v4681, %v4688
    %v4691 = vunpack.c.l.s4 1983009808
    %v4692 = vunpack.c.0.s8 %v4691
    %v4693 = vlaneseq
    %v4694 = vshrl.u32 %v4693, 7
    %v4695 = vsub.s32 %v4692, %v4694
    %v4696 = vrot.slane %v4682, %v4695
    %v4697 = vcombine.low %v4673, %v4689
    %v4698 = vcombine.high %v4673, %v4689
    %v4700 = vunpack.c.l.s4 1934713408
    %v4701 = vunpack.c.0.s8 %v4700
    %v4702 = vlaneseq
    %v4703 = vshrl.u32 %v4702, 7
    %v4704 = vsub.s32 %v4701, %v4703
    %v4705 = vrot.slane %v4697, %v4704
    %v4707 = vunpack.c.l.s4 1934713408
    %v4708 = vunpack.c.0.s8 %v4707
    %v4709 = vlaneseq
    %v4710 = vshrl.u32 %v4709, 7
    %v4711 = vsub.s32 %v4708, %v4710
    %v4712 = vrot.slane %v4698, %v4711
    %v4713 = vcombine.low %v4680, %v4696
    %v4714 = vcombine.high %v4680, %v4696
    %v4716 = vunpack.c.l.s4 1934713408
    %v4717 = vunpack.c.0.s8 %v4716
    %v4718 = vlaneseq
    %v4719 = vshrl.u32 %v4718, 7
    %v4720 = vsub.s32 %v4717, %v4719
    %v4721 = vrot.slane %v4713, %v4720
    %v4723 = vunpack.c.l.s4 1934713408
    %v4724 = vunpack.c.0.s8 %v4723
    %v4725 = vlaneseq
    %v4726 = vshrl.u32 %v4725, 7
    %v4727 = vsub.s32 %v4724, %v4726
    %v4728 = vrot.slane %v4714, %v4727
    %v4729 = vcombine.high %v4705, 0.0
    %v4730 = vcombine.high %v4712, 0.0
    %v4731 = vcombine.high %v4721, 0.0
    %v4732 = vcombine.high %v4728, 0.0
    %v4733 = vcombine.low %v4637, %v4644
    %v4735 = vunpack.c.l.s4 1983009808
    %v4736 = vunpack.c.0.s8 %v4735
    %v4737 = vlaneseq
    %v4738 = vshrl.u32 %v4737, 7
    %v4739 = vsub.s32 %v4736, %v4738
    %v4740 = vrot.slane %v4733, %v4739
    %v4741 = vcombine.low %v4661, %v4662
    %v4743 = vunpack.c.l.s4 1983009808
    %v4744 = vunpack.c.0.s8 %v4743
    %v4745 = vlaneseq
    %v4746 = vshrl.u32 %v4745, 7
    %v4747 = vsub.s32 %v4744, %v4746
    %v4748 = vrot.slane %v4741, %v4747
    %v4749 = vcombine.low %v4653, %v4660
    %v4751 = vunpack.c.l.s4 1983009808
    %v4752 = vunpack.c.0.s8 %v4751
    %v4753 = vlaneseq
    %v4754 = vshrl.u32 %v4753, 7
    %v4755 = vsub.s32 %v4752, %v4754
    %v4756 = vrot.slane %v4749, %v4755
    %v4757 = vcombine.low %v4663, %v4664
    %v4759 = vunpack.c.l.s4 1983009808
    %v4760 = vunpack.c.0.s8 %v4759
    %v4761 = vlaneseq
    %v4762 = vshrl.u32 %v4761, 7
    %v4763 = vsub.s32 %v4760, %v4762
    %v4764 = vrot.slane %v4757, %v4763
    %v4765 = vcombine.low %v4740, %v4748
    %v4766 = vcombine.high %v4740, %v4748
    %v4768 = vunpack.c.l.s4 1934713408
    %v4769 = vunpack.c.0.s8 %v4768
    %v4770 = vlaneseq
    %v4771 = vshrl.u32 %v4770, 7
    %v4772 = vsub.s32 %v4769, %v4771
    %v4773 = vrot.slane %v4765, %v4772
    %v4775 = vunpack.c.l.s4 1934713408
    %v4776 = vunpack.c.0.s8 %v4775
    %v4777 = vlaneseq
    %v4778 = vshrl.u32 %v4777, 7
    %v4779 = vsub.s32 %v4776, %v4778
    %v4780 = vrot.slane %v4766, %v4779
    %v4781 = vcombine.low %v4756, %v4764
    %v4782 = vcombine.high %v4756, %v4764
    %v4784 = vunpack.c.l.s4 1934713408
    %v4785 = vunpack.c.0.s8 %v4784
    %v4786 = vlaneseq
    %v4787 = vshrl.u32 %v4786, 7
    %v4788 = vsub.s32 %v4785, %v4787
    %v4789 = vrot.slane %v4781, %v4788
    %v4791 = vunpack.c.l.s4 1934713408
    %v4792 = vunpack.c.0.s8 %v4791
    %v4793 = vlaneseq
    %v4794 = vshrl.u32 %v4793, 7
    %v4795 = vsub.s32 %v4792, %v4794
    %v4796 = vrot.slane %v4782, %v4795
    %v4797 = vcombine.low %v4773, %v4789
    %v4798 = vcombine.high %v4773, %v4789
    %v4799 = vcombine.low %v4780, %v4796
    %v4800 = vcombine.high %v4780, %v4796
    %v4801 = vcombine.low %v4705, %v4712
    %v4803 = vunpack.c.l.s4 1983009808
    %v4804 = vunpack.c.0.s8 %v4803
    %v4805 = vlaneseq
    %v4806 = vshrl.u32 %v4805, 7
    %v4807 = vsub.s32 %v4804, %v4806
    %v4808 = vrot.slane %v4801, %v4807
    %v4809 = vcombine.low %v4729, %v4730
    %v4811 = vunpack.c.l.s4 1983009808
    %v4812 = vunpack.c.0.s8 %v4811
    %v4813 = vlaneseq
    %v4814 = vshrl.u32 %v4813, 7
    %v4815 = vsub.s32 %v4812, %v4814
    %v4816 = vrot.slane %v4809, %v4815
    %v4817 = vcombine.low %v4721, %v4728
    %v4819 = vunpack.c.l.s4 1983009808
    %v4820 = vunpack.c.0.s8 %v4819
    %v4821 = vlaneseq
    %v4822 = vshrl.u32 %v4821, 7
    %v4823 = vsub.s32 %v4820, %v4822
    %v4824 = vrot.slane %v4817, %v4823
    %v4825 = vcombine.low %v4731, %v4732
    %v4827 = vunpack.c.l.s4 1983009808
    %v4828 = vunpack.c.0.s8 %v4827
    %v4829 = vlaneseq
    %v4830 = vshrl.u32 %v4829, 7
    %v4831 = vsub.s32 %v4828, %v4830
    %v4832 = vrot.slane %v4825, %v4831
    %v4833 = vcombine.low %v4808, %v4816
    %v4834 = vcombine.high %v4808, %v4816
    %v4836 = vunpack.c.l.s4 1934713408
    %v4837 = vunpack.c.0.s8 %v4836
    %v4838 = vlaneseq
    %v4839 = vshrl.u32 %v4838, 7
    %v4840 = vsub.s32 %v4837, %v4839
    %v4841 = vrot.slane %v4833, %v4840
    %v4843 = vunpack.c.l.s4 1934713408
    %v4844 = vunpack.c.0.s8 %v4843
    %v4845 = vlaneseq
    %v4846 = vshrl.u32 %v4845, 7
    %v4847 = vsub.s32 %v4844, %v4846
    %v4848 = vrot.slane %v4834, %v4847
    %v4849 = vcombine.low %v4824, %v4832
    %v4850 = vcombine.high %v4824, %v4832
    %v4852 = vunpack.c.l.s4 1934713408
    %v4853 = vunpack.c.0.s8 %v4852
    %v4854 = vlaneseq
    %v4855 = vshrl.u32 %v4854, 7
    %v4856 = vsub.s32 %v4853, %v4855
    %v4857 = vrot.slane %v4849, %v4856
    %v4859 = vunpack.c.l.s4 1934713408
    %v4860 = vunpack.c.0.s8 %v4859
    %v4861 = vlaneseq
    %v4862 = vshrl.u32 %v4861, 7
    %v4863 = vsub.s32 %v4860, %v4862
    %v4864 = vrot.slane %v4850, %v4863
    %v4865 = vcombine.low %v4841, %v4857
    %v4866 = vcombine.high %v4841, %v4857
    %v4867 = vcombine.low %v4848, %v4864
    %v4868 = vcombine.high %v4848, %v4864
    %4871 = vrot.lane.b32.xlu0 %v4798, 8
    %v4872 = vpop.permute.xlu0 %4871
    %4873 = vrot.lane.b32.xlu0 %v4866, 8
    %v4874 = vpop.permute.xlu0 %4873
    %4879 = vrot.lane.b32.xlu0 %v4799, 16
    %v4880 = vpop.permute.xlu0 %4879
    %4881 = vrot.lane.b32.xlu0 %v4867, 16
    %v4882 = vpop.permute.xlu0 %4881
    %4887 = vrot.lane.b32.xlu0 %v4800, 24
    %v4888 = vpop.permute.xlu0 %4887
    %4889 = vrot.lane.b32.xlu0 %v4868, 24
    %v4890 = vpop.permute.xlu0 %4889
    %v4893 = vsel %vm1410, %v4797, %v4872
    %v4894 = vsel %vm1410, %v4865, %v4874
    %v4895 = vsel %vm2542, %v4893, %v4880
    %v4896 = vsel %vm2542, %v4894, %v4882
    %v4897 = vsel %vm2545, %v4895, %v4888
    %v4898 = vsel %vm2545, %v4896, %v4890
    %v4899 = vpack.c.bf16 %v4898, %v4897
    %v4901 = vlaneseq
    %v4902 = vshrl.u32 %v4901, 7
    %v4903 = vsub.s32 0, %v4902
    %v4904 = vrot.slane %v2677, %v4903
    %v4910 = vunpack.c.l.b16 %v2673
    %v4911 = vunpack.c.l.b16 %v2674
    %v4912 = vunpack.c.l.b16 %v2675
    %v4913 = vunpack.c.l.b16 %v2676
    %v4914 = vpack.c.b16 %v4911, %v4910
    %v4915 = vpack.c.b16 %v4913, %v4912
    %v4919 = vsel %vm345, %v4899, 0
    %4921 = vmatprep.subr.bf16.mxu0 0
    %4922 = vmatpush1.bf16.msra.mxu0 %v4914
    %4923 = vmatprep.subr.bf16.mxu0 0
    %4924 = vmatpush1.bf16.msra.mxu0 %v4915
    %4925 = vmatprep.subr.bf16.mxu0 0
    %4926 = vmatpush1.bf16.msra.mxu0 0
    %4927 = vmatprep.subr.bf16.mxu0 0
    %4928 = vmatpush1.bf16.msra.mxu0 0
    %4929 = vmatprep.subr.bf16.mxu0 0
    %4930 = vmatpush1.bf16.msra.mxu0 0
    %4931 = vmatprep.subr.bf16.mxu0 0
    %4932 = vmatpush1.bf16.msra.mxu0 0
    %4933 = vmatprep.subr.bf16.mxu0 0
    %4934 = vmatpush1.bf16.msra.mxu0 0
    %4935 = vmatprep.subr.bf16.mxu0 0
    %4936 = vmatpush1.bf16.msra.mxu0 0
    %4937 = vmatprep.subr.bf16.mxu0 0
    %4938 = vmatpush1.bf16.msra.mxu0 0
    %4939 = vmatprep.subr.bf16.mxu0 0
    %4940 = vmatpush1.bf16.msra.mxu0 0
    %4941 = vmatprep.subr.bf16.mxu0 0
    %4942 = vmatpush1.bf16.msra.mxu0 0
    %4943 = vmatprep.subr.bf16.mxu0 0
    %4944 = vmatpush1.bf16.msra.mxu0 0
    %4945 = vmatprep.subr.bf16.mxu0 0
    %4946 = vmatpush1.bf16.msra.mxu0 0
    %4947 = vmatprep.subr.bf16.mxu0 0
    %4948 = vmatpush1.bf16.msra.mxu0 0
    %4949 = vmatprep.subr.bf16.mxu0 0
    %4950 = vmatpush1.bf16.msra.mxu0 0
    %4951 = vmatprep.subr.bf16.mxu0 0
    %4952 = vmatpush1.bf16.msra.mxu0 0
    %4953 = vmatprep.mubr.bf16.mxu0 0
    %4954 = vmatmul.mubr.bf16.gmra.mrb[0].mxu0 %v4919
    %v4955 = vpop.f32.mrb[0].mxu0
    %v4956 = vadd.f32 %v4904, %v4955
    %v4957 = vpop.f32.mrb[0].mxu0
    %v4958 = vpop.f32.mrb[0].mxu0
    %v4959 = vadd.f32 %v4904, %v4958
    %v4960 = vpop.f32.mrb[0].mxu0
    %4961 = vdwg.mxu0
    %v4962 = vadd.f32 %v2656, %v4956
    %v4963 = vadd.f32 %v2657, %v4959
    %v4964 = vld [vmem:[%s53] sm:$0x1]
    %v4965 = vld [vmem:[%s55] sm:$0x1]
    %v4966 = vsel %vm345, %v4962, 0.0
    %4967 = vadd.xlane.f32.xlu0 %v4966
    %v4968 = vpop.xlane.xlu0 %4967
    %v4969 = vsel %vm345, %v4963, 0.0
    %4970 = vadd.xlane.f32.xlu0 %v4969
    %v4971 = vpop.xlane.xlu0 %4970
    %v4972 = vmul.f32 %v4968, %v2621
    %v4973 = vmul.f32 %v4971, %v2621
    %v4974 = vsub.f32 %v4962, %v4972
    %v4975 = vsub.f32 %v4963, %v4973
    %v4976 = vmul.f32 %v4974, %v4974
    %v4977 = vmul.f32 %v4975, %v4975
    %v4978 = vsel %vm345, %v4976, 0.0
    %4979 = vadd.xlane.f32.xlu0 %v4978
    %v4980 = vpop.xlane.xlu0 %4979
    %v4981 = vsel %vm345, %v4977, 0.0
    %4982 = vadd.xlane.f32.xlu0 %v4981
    %v4983 = vpop.xlane.xlu0 %4982
    %v4984 = vmul.f32 %v4980, %v2621
    %v4985 = vmul.f32 %v4983, %v2621
    %v4986 = vadd.f32 %v4984, 1e-05
    %v4987 = vadd.f32 %v4985, 1e-05
    %v4988 = vrsqrt.pop %v4986
    %v4989 = vrsqrt.pop %v4987
    %v4990 = vmul.f32 %v4974, %v4988
    %v4991 = vmul.f32 %v4975, %v4989
    %v4993 = vlaneseq
    %v4994 = vshrl.u32 %v4993, 7
    %v4995 = vsub.s32 0, %v4994
    %v4996 = vrot.slane %v4964, %v4995
    %v4998 = vmul.f32 %v4990, %v4996
    %v4999 = vmul.f32 %v4991, %v4996
    %v5001 = vlaneseq
    %v5002 = vshrl.u32 %v5001, 7
    %v5003 = vsub.s32 0, %v5002
    %v5004 = vrot.slane %v4965, %v5003
    %v5006 = vadd.f32 %v4998, %v5004
    %v5007 = vadd.f32 %v4999, %v5004
    %v5008 = vld [vmem:[#allocation23] sm:$0xf]
    %v5009 = vld [vmem:[#allocation23 + $0x4] sm:$0xf]
    %v5010 = vld [vmem:[#allocation23 + $0x8] sm:$0xf]
    %v5011 = vld [vmem:[#allocation23 + $0xc] sm:$0xf]
    %v5012 = vld [vmem:[%s43] sm:$0x1]
    %v5013 = vld [vmem:[%s45] sm:$0xf]
    %v5014 = vld [vmem:[%s45 + $0x4] sm:$0xf]
    %v5015 = vld [vmem:[%s45 + $0x8] sm:$0xf]
    %v5016 = vld [vmem:[%s45 + $0xc] sm:$0xf]
    %v5017 = vld [vmem:[%s45 + $0x10] sm:$0xf]
    %v5018 = vld [vmem:[%s45 + $0x14] sm:$0xf]
    %v5019 = vld [vmem:[%s45 + $0x18] sm:$0xf]
    %v5020 = vld [vmem:[%s45 + $0x1c] sm:$0xf]
    %v5021 = vld [vmem:[%s47] sm:$0x1]
    %v5022 = vpack.c.bf16 %v5007, %v5006
    %v5024 = vlaneseq
    %v5025 = vshrl.u32 %v5024, 7
    %v5026 = vsub.s32 0, %v5025
    %v5027 = vrot.slane %v5012, %v5026
    %v5033 = vunpack.c.l.b16 %v5008
    %v5034 = vunpack.c.l.b16 %v5009
    %v5035 = vunpack.c.l.b16 %v5010
    %v5036 = vunpack.c.l.b16 %v5011
    %v5037 = vpack.c.b16 %v5034, %v5033
    %v5038 = vpack.c.b16 %v5036, %v5035
    %v5042 = vsel %vm345, %v5022, 0
    %5044 = vmatprep.subr.bf16.mxu0 0
    %5045 = vmatpush1.bf16.msra.mxu0 %v5037
    %5046 = vmatprep.subr.bf16.mxu0 0
    %5047 = vmatpush1.bf16.msra.mxu0 %v5038
    %5048 = vmatprep.subr.bf16.mxu0 0
    %5049 = vmatpush1.bf16.msra.mxu0 0
    %5050 = vmatprep.subr.bf16.mxu0 0
    %5051 = vmatpush1.bf16.msra.mxu0 0
    %5052 = vmatprep.subr.bf16.mxu0 0
    %5053 = vmatpush1.bf16.msra.mxu0 0
    %5054 = vmatprep.subr.bf16.mxu0 0
    %5055 = vmatpush1.bf16.msra.mxu0 0
    %5056 = vmatprep.subr.bf16.mxu0 0
    %5057 = vmatpush1.bf16.msra.mxu0 0
    %5058 = vmatprep.subr.bf16.mxu0 0
    %5059 = vmatpush1.bf16.msra.mxu0 0
    %5060 = vmatprep.subr.bf16.mxu0 0
    %5061 = vmatpush1.bf16.msra.mxu0 0
    %5062 = vmatprep.subr.bf16.mxu0 0
    %5063 = vmatpush1.bf16.msra.mxu0 0
    %5064 = vmatprep.subr.bf16.mxu0 0
    %5065 = vmatpush1.bf16.msra.mxu0 0
    %5066 = vmatprep.subr.bf16.mxu0 0
    %5067 = vmatpush1.bf16.msra.mxu0 0
    %5068 = vmatprep.subr.bf16.mxu0 0
    %5069 = vmatpush1.bf16.msra.mxu0 0
    %5070 = vmatprep.subr.bf16.mxu0 0
    %5071 = vmatpush1.bf16.msra.mxu0 0
    %5072 = vmatprep.subr.bf16.mxu0 0
    %5073 = vmatpush1.bf16.msra.mxu0 0
    %5074 = vmatprep.subr.bf16.mxu0 0
    %5075 = vmatpush1.bf16.msra.mxu0 0
    %5076 = vmatprep.mubr.bf16.mxu0 0
    %5077 = vmatmul.mubr.bf16.gmra.mrb[0].mxu0 %v5042
    %v5078 = vpop.f32.mrb[0].mxu0
    %v5079 = vadd.f32 %v5027, %v5078
    %v5080 = vpop.f32.mrb[0].mxu0
    %v5081 = vpop.f32.mrb[0].mxu0
    %v5082 = vadd.f32 %v5027, %v5081
    %v5083 = vpop.f32.mrb[0].mxu0
    %5084 = vdwg.mxu0
    %v5085 = vmax.f32 %v5079, 0.0
    %v5086 = vmax.f32 %v5082, 0.0
    %v5087 = vpack.c.bf16 %v5086, %v5085
    %v5089 = vlaneseq
    %v5090 = vshrl.u32 %v5089, 7
    %v5091 = vsub.s32 0, %v5090
    %v5092 = vrot.slane %v5021, %v5091
    %v5102 = vunpack.c.l.b16 %v5013
    %v5103 = vunpack.c.l.b16 %v5014
    %v5104 = vunpack.c.l.b16 %v5015
    %v5105 = vunpack.c.l.b16 %v5016
    %v5106 = vunpack.c.l.b16 %v5017
    %v5107 = vunpack.c.l.b16 %v5018
    %v5108 = vunpack.c.l.b16 %v5019
    %v5109 = vunpack.c.l.b16 %v5020
    %v5110 = vpack.c.b16 %v5103, %v5102
    %v5111 = vpack.c.b16 %v5105, %v5104
    %v5112 = vpack.c.b16 %v5107, %v5106
    %v5113 = vpack.c.b16 %v5109, %v5108
    %vm5118 = vcmask 523264
    %v5120 = vsel %vm5118, %v5087, 0
    %5122 = vmatprep.subr.bf16.mxu0 0
    %5123 = vmatpush1.bf16.msra.mxu0 %v5110
    %5124 = vmatprep.subr.bf16.mxu0 0
    %5125 = vmatpush1.bf16.msra.mxu0 %v5111
    %5126 = vmatprep.subr.bf16.mxu0 0
    %5127 = vmatpush1.bf16.msra.mxu0 %v5112
    %5128 = vmatprep.subr.bf16.mxu0 0
    %5129 = vmatpush1.bf16.msra.mxu0 %v5113
    %5130 = vmatprep.subr.bf16.mxu0 0
    %5131 = vmatpush1.bf16.msra.mxu0 0
    %5132 = vmatprep.subr.bf16.mxu0 0
    %5133 = vmatpush1.bf16.msra.mxu0 0
    %5134 = vmatprep.subr.bf16.mxu0 0
    %5135 = vmatpush1.bf16.msra.mxu0 0
    %5136 = vmatprep.subr.bf16.mxu0 0
    %5137 = vmatpush1.bf16.msra.mxu0 0
    %5138 = vmatprep.subr.bf16.mxu0 0
    %5139 = vmatpush1.bf16.msra.mxu0 0
    %5140 = vmatprep.subr.bf16.mxu0 0
    %5141 = vmatpush1.bf16.msra.mxu0 0
    %5142 = vmatprep.subr.bf16.mxu0 0
    %5143 = vmatpush1.bf16.msra.mxu0 0
    %5144 = vmatprep.subr.bf16.mxu0 0
    %5145 = vmatpush1.bf16.msra.mxu0 0
    %5146 = vmatprep.subr.bf16.mxu0 0
    %5147 = vmatpush1.bf16.msra.mxu0 0
    %5148 = vmatprep.subr.bf16.mxu0 0
    %5149 = vmatpush1.bf16.msra.mxu0 0
    %5150 = vmatprep.subr.bf16.mxu0 0
    %5151 = vmatpush1.bf16.msra.mxu0 0
    %5152 = vmatprep.subr.bf16.mxu0 0
    %5153 = vmatpush1.bf16.msra.mxu0 0
    %5154 = vmatprep.mubr.bf16.mxu0 0
    %5155 = vmatmul.mubr.bf16.gmra.mrb[0].mxu0 %v5120
    %v5156 = vpop.f32.mrb[0].mxu0
    %v5157 = vadd.f32 %v5092, %v5156
    %v5158 = vpop.f32.mrb[0].mxu0
    %v5159 = vpop.f32.mrb[0].mxu0
    %v5160 = vadd.f32 %v5092, %v5159
    %v5161 = vpop.f32.mrb[0].mxu0
    %5162 = vdwg.mxu0
    %v5163 = vadd.f32 %v5006, %v5157
    %v5164 = vadd.f32 %v5007, %v5160
    %v5165 = vld [vmem:[%s57] sm:$0x1]
    %v5166 = vld [vmem:[%s59] sm:$0x1]
    %v5167 = vsel %vm345, %v5163, 0.0
    %5168 = vadd.xlane.f32.xlu0 %v5167
    %v5169 = vpop.xlane.xlu0 %5168
    %v5170 = vsel %vm345, %v5164, 0.0
    %5171 = vadd.xlane.f32.xlu0 %v5170
    %v5172 = vpop.xlane.xlu0 %5171
    %v5173 = vmul.f32 %v5169, %v2621
    %v5174 = vmul.f32 %v5172, %v2621
    %v5175 = vsub.f32 %v5163, %v5173
    %v5176 = vsub.f32 %v5164, %v5174
    %v5177 = vmul.f32 %v5175, %v5175
    %v5178 = vmul.f32 %v5176, %v5176
    %v5179 = vsel %vm345, %v5177, 0.0
    %5180 = vadd.xlane.f32.xlu0 %v5179
    %v5181 = vpop.xlane.xlu0 %5180
    %v5182 = vsel %vm345, %v5178, 0.0
    %5183 = vadd.xlane.f32.xlu0 %v5182
    %v5184 = vpop.xlane.xlu0 %5183
    %v5185 = vmul.f32 %v5181, %v2621
    %v5186 = vmul.f32 %v5184, %v2621
    %v5187 = vadd.f32 %v5185, 1e-05
    %v5188 = vadd.f32 %v5186, 1e-05
    %v5189 = vrsqrt.pop %v5187
    %v5190 = vrsqrt.pop %v5188
    %v5191 = vmul.f32 %v5175, %v5189
    %v5192 = vmul.f32 %v5176, %v5190
    %v5194 = vlaneseq
    %v5195 = vshrl.u32 %v5194, 7
    %v5196 = vsub.s32 0, %v5195
    %v5197 = vrot.slane %v5165, %v5196
    %v5199 = vmul.f32 %v5191, %v5197
    %v5200 = vmul.f32 %v5192, %v5197
    %v5202 = vlaneseq
    %v5203 = vshrl.u32 %v5202, 7
    %v5204 = vsub.s32 0, %v5203
    %v5205 = vrot.slane %v5166, %v5204
    %v5207 = vadd.f32 %v5199, %v5205
    %v5208 = vadd.f32 %v5200, %v5205
    %5209 = vst.msk [vmem:[#allocation25] sm:$0xff] %vm345, %v5207
    %5210 = vst.msk [vmem:[#allocation25 + $0x8] sm:$0xff] %vm345, %v5208
    // Predicated region
    $region178: #{tpu_custom_call.1} parent=1 // pred_check
      _
    $region179: #{tpu_custom_call.1} parent=1 // pred_check_branch
      %5212 = sbr.rel (0) target = $region181
    $region180: #{tpu_custom_call.1} parent=1 // pred_region
      %s5214 = ssub.s32 256, 256
      %5215 = vsyncadd [#allocation4], %s5214
      %s5216 = sshll.u32 [#allocation25], 4
      %s5217 = int_to_ptr.vmem [resolvable:$true] %s5216
      %5222 = dma.vmem_to_hbm [thread:$0]  %s5217, 256, %s61, [#allocation4], 128, 128, 8
    $region181: #{tpu_custom_call.1} parent=1 // pred_fallthru
      _
    // Predicated region
    $region182: #{tpu_custom_call.1} parent=1 // pred_check
      _
    $region183: #{tpu_custom_call.1} parent=1 // pred_check_branch
      %5224 = sbr.rel (0) target = $region185
    $region184: #{tpu_custom_call.1} parent=1 // pred_region
      %5225 = dma.done [#allocation4], 256
    $region185: #{tpu_custom_call.1} parent=1 // pred_fallthru
      _
    %5226 = vsyncpa [#allocation3], 1
    %5227 = vsyncpa [#allocation6], 1
    %5228 = vsyncpa [#allocation9], 1
    %5229 = vsyncpa [#allocation12], 1
    %5230 = vsyncpa [#allocation15], 1
    %5231 = vsyncpa [#allocation18], 1
    %5232 = vsyncpa [#allocation21], 1
    %5233 = vsyncpa [#allocation24], 1
    %5234 = vsyncpa [#allocation4], 1

</llo_original>
